<compile_context>
chip_gen: v7x
topology: tpu7x:2x2x1
jax: 0.10.0
libtpu: 0.0.40
codegen_flags: <defaults>
</compile_context>

<pallas_src>
import math

import jax
import jax.numpy as jnp
from jax.experimental import pallas as pl
from jax.experimental.pallas import tpu as pltpu


def _round_up(x, m):
    return (x + m - 1) // m * m


def _sigmoid(v):
    # EUP-friendly sigmoid: one tanh instead of exp + VALU divide.
    return 0.5 * (jnp.tanh(0.5 * v) + 1.0)


def _padded_sizes(N, T):
    """Batch/time padding + tiling shared by the forward pass and the test."""
    TT = T if T <= 32 else 32          # timesteps per grid step
    T_pad = _round_up(T, TT)
    Bp = max(16, _round_up(N, 16))     # bf16 packs 16 sublanes per vreg
    Bt = min(Bp, 64)                   # batch tile; >1 tile when batch is large
    Bp = _round_up(Bp, Bt)             #   (lets v7x shard the parallel axis)
    return T_pad, TT, Bp, Bt


# --------------------------------------------------------------------------
# Fused noise-LSTM kernel.
# grid = (Bp // Bt  [parallel],  T_pad // TT  [arbitrary])
# --------------------------------------------------------------------------
def _fused_noise_lstm_kernel(x_ref, wih_ref, whh_ref, b_ref, o_ref, h_sc, c_sc):
    """
    x_ref  : (TT, Bt, D) bf16   noise block for this (time, batch) tile
    wih_ref: (D, 4D)     bf16   W_ih^T, VMEM-resident (constant index_map)
    whh_ref: (D, 4D)     bf16   W_hh^T, VMEM-resident (constant index_map)
    b_ref  : (1, 4D)     f32    b_ih + b_hh, VMEM-resident
    o_ref  : (Bt, TT, D) f32    batch-first output block (no wrapper transpose)
    h_sc   : (Bt, D)     bf16   hidden carry (bf16 so the recurrent matmul
                                reads it without a per-step cast)
    c_sc   : (Bt, D)     f32    cell carry
    Gate order (PyTorch): i, f, g, o.
    """
    t_blk = pl.program_id(1)

    @pl.when(t_blk == 0)
    def _():
        # Fresh h/c per batch tile (time is the inner grid axis).
        h_sc[...] = jnp.zeros_like(h_sc)
        c_sc[...] = jnp.zeros_like(c_sc)

    TT, Bt, D = x_ref.shape
    # Hoist the bias broadcast out of the unrolled time loop (JAX does not CSE
    # broadcast_in_dim).
    bias = jnp.broadcast_to(b_ref[...], (Bt, b_ref.shape[1]))

    # Static Python loop -> fully unrolled, static indices; TT is small and the
    # tiles are tiny so vreg pressure is not a concern.
    for t in range(TT):
        gates = (
            jnp.dot(x_ref[t], wih_ref[...], preferred_element_type=jnp.float32)
            + jnp.dot(h_sc[...], whh_ref[...], preferred_element_type=jnp.float32)
            + bias
        )
        i = _sigmoid(gates[:, 0 * D:1 * D])
        f = _sigmoid(gates[:, 1 * D:2 * D])
        g = jnp.tanh(gates[:, 2 * D:3 * D])
        o = _sigmoid(gates[:, 3 * D:4 * D])
        c_new = f * c_sc[...] + i * g
        h_new = o * jnp.tanh(c_new)
        c_sc[...] = c_new
        h_sc[...] = h_new.astype(jnp.bfloat16)
        o_ref[:, t, :] = h_new


# --------------------------------------------------------------------------
# NOISEGENERATOR forward
# --------------------------------------------------------------------------
def noisegenerator_forward(params, z_spch, noise_key):
    # z_spch is only used for its (batch, time) sizes, as in the PyTorch module.
    N, T = z_spch.shape[0], z_spch.shape[1]
    D = params["w_ih_t"].shape[0]
    G = 4 * D

    T_pad, TT, Bp, Bt = _padded_sizes(N, T)

    # Noise sampled directly in the kernel-ready (T_pad, Bp, D) bf16 layout:
    # no transpose / pad / cast chain.  Padded rows / steps are extra iid draws
    # that run through the LSTM (bias makes them nonzero) but are sliced off.
    noise = jax.random.normal(noise_key, (T_pad, Bp, D), jnp.bfloat16)

    out = pl.pallas_call(
        _fused_noise_lstm_kernel,
        out_shape=jax.ShapeDtypeStruct((Bp, T_pad, D), jnp.float32),
        grid_spec=pltpu.PrefetchScalarGridSpec(
            num_scalar_prefetch=0,
            grid=(Bp // Bt, T_pad // TT),
            in_specs=[
                pl.BlockSpec((TT, Bt, D), lambda b, t: (t, b, 0)),
                pl.BlockSpec((D, G), lambda b, t: (0, 0)),   # W_ih resident
                pl.BlockSpec((D, G), lambda b, t: (0, 0)),   # W_hh resident
                pl.BlockSpec((1, G), lambda b, t: (0, 0)),   # bias resident
            ],
            out_specs=pl.BlockSpec((Bt, TT, D), lambda b, t: (b, t, 0)),
            scratch_shapes=[
                pltpu.VMEM((Bt, D), jnp.bfloat16),  # h carry
                pltpu.VMEM((Bt, D), jnp.float32),   # c carry
            ],
        ),
        compiler_params=pltpu.CompilerParams(
            dimension_semantics=("parallel", "arbitrary"),
        ),
    )(noise, params["w_ih_t"], params["w_hh_t"], params["bias"])

    return out[:N, :T, :]   # (N, T, D) batch_first, as in the PyTorch module


# --------------------------------------------------------------------------
# Parameters (PyTorch nn.LSTM default init); preprocessing hoisted here so no
# per-forward weight transposes / casts are made.
# --------------------------------------------------------------------------
def init_params(key, noise_dim):
    D = noise_dim
    bound = 1.0 / math.sqrt(D)
    k1, k2, k3, k4 = jax.random.split(key, 4)
    w_ih = jax.random.uniform(k1, (4 * D, D), jnp.float32, -bound, bound)
    w_hh = jax.random.uniform(k2, (4 * D, D), jnp.float32, -bound, bound)
    b_ih = jax.random.uniform(k3, (4 * D,), jnp.float32, -bound, bound)
    b_hh = jax.random.uniform(k4, (4 * D,), jnp.float32, -bound, bound)
    return {
        "w_ih_t": jnp.asarray(w_ih.T, jnp.bfloat16),            # (D, 4D)
        "w_hh_t": jnp.asarray(w_hh.T, jnp.bfloat16),            # (D, 4D)
        "bias": (b_ih + b_hh).reshape(1, 4 * D).astype(jnp.float32),
        # f32 PyTorch-layout originals, only for the host-side reference check.
        "ref": {"w_ih": w_ih, "w_hh": w_hh, "b_ih": b_ih, "b_hh": b_hh},
    }


# --------------------------------------------------------------------------
# Pure-JAX reference (mirrors the kernel's bf16 operand rounding so the check
# isolates semantics, not precision).  Note: vs a true f32 PyTorch LSTM the
# bf16-h rounding drifts with sequence length; for T=8 it is well inside tol.
# --------------------------------------------------------------------------
def reference_forward(ref, noise_tnd_bf16):
    """noise: (T, N, D) bf16 -> (N, T, D) f32."""
    w_ih_t = ref["w_ih"].T.astype(jnp.bfloat16).astype(jnp.float32)
    w_hh_t = ref["w_hh"].T.astype(jnp.bfloat16).astype(jnp.float32)
    bias = (ref["b_ih"] + ref["b_hh"])[None, :]
    T, N, D = noise_tnd_bf16.shape
    x = noise_tnd_bf16.astype(jnp.float32)

    def step(carry, x_t):
        h, c = carry
        h_rt = h.astype(jnp.bfloat16).astype(jnp.float32)
        gates = x_t @ w_ih_t + h_rt @ w_hh_t + bias
        i = _sigmoid(gates[:, 0 * D:1 * D])
        f = _sigmoid(gates[:, 1 * D:2 * D])
        g = jnp.tanh(gates[:, 2 * D:3 * D])
        o = _sigmoid(gates[:, 3 * D:4 * D])
        c = f * c + i * g
        h = o * jnp.tanh(c)
        return (h, c), h

    h0 = jnp.zeros((N, D), jnp.float32)
    c0 = jnp.zeros((N, D), jnp.float32)
    (_, _), hs = jax.lax.scan(step, (h0, c0), x)
    return jnp.transpose(hs, (1, 0, 2))


if __name__ == "__main__":
    key = jax.random.PRNGKey(0)
    pkey, nkey, skey = jax.random.split(key, 3)

    # Small shapes consistent with the module: batch=2, seq=8, noise_dim=128.
    N, T, D, SPCH = 2, 8, 128, 64
    params = init_params(pkey, noise_dim=D)
    z_spch = jax.random.normal(skey, (N, T, SPCH), jnp.float32)  # only shape used

    fwd = jax.jit(noisegenerator_forward)
    out = fwd(params, z_spch, nkey)
    jax.block_until_ready(out)

    assert out.shape == (N, T, D), out.shape
    assert bool(jnp.all(jnp.isfinite(out)))

    # Rebuild the exact same noise the kernel consumed (deterministic key /
    # shape / dtype) and compare against a pure-JAX LSTM reference.
    T_pad, TT, Bp, Bt = _padded_sizes(N, T)
    noise_full = jax.random.normal(nkey, (T_pad, Bp, D), jnp.bfloat16)
    ref_out = reference_forward(params["ref"], noise_full[:T, :N, :])
    max_err = float(jnp.max(jnp.abs(out - ref_out)))
    assert max_err < 2e-2, f"max abs error vs reference: {max_err}"

    print("KERNEL_OK")
</pallas_src>

<mosaic_0001>
module attributes {stable_mosaic.version = 11 : i64} {
  func.func @_fused_noise_lstm_kernel(%arg0: i32, %arg1: i32, %arg2: memref<8x16x128xbf16, #tpu.memory_space<vmem>>, %arg3: memref<128x512xbf16, #tpu.memory_space<vmem>>, %arg4: memref<128x512xbf16, #tpu.memory_space<vmem>>, %arg5: memref<1x512xf32, #tpu.memory_space<vmem>>, %arg6: memref<16x8x128xf32, #tpu.memory_space<vmem>>, %arg7: memref<16x128xbf16, #tpu.memory_space<vmem>>, %arg8: memref<16x128xf32, #tpu.memory_space<vmem>>) attributes {dimension_semantics = [#tpu.dimension_semantics<parallel>, #tpu.dimension_semantics<arbitrary>], iteration_bounds = array<i64: 1, 1>, scalar_prefetch = 0 : i64, scratch_operands = 2 : i64, tpu.core_type = #tpu.core_type<tc>, window_params = [{transform_indices = @transform_0, window_bounds = array<i64: 8, 16, 128>}, {pipeline_mode = #tpu.pipeline_mode<synchronous>, transform_indices = @transform_1, window_bounds = array<i64: 128, 512>}, {pipeline_mode = #tpu.pipeline_mode<synchronous>, transform_indices = @transform_2, window_bounds = array<i64: 128, 512>}, {pipeline_mode = #tpu.pipeline_mode<synchronous>, transform_indices = @transform_3, window_bounds = array<i64: 1, 512>}, {transform_indices = @transform_4, window_bounds = array<i64: 16, 8, 128>}]} {
    %c0_i32 = arith.constant 0 : i32
    %0 = arith.cmpi eq, %arg1, %c0_i32 : i32
    %1 = arith.extui %0 : i1 to i32
    %c0_i32_0 = arith.constant 0 : i32
    %2 = arith.cmpi ne, %1, %c0_i32_0 : i32
    scf.if %2 {
      %cst_226 = arith.constant 0.000000e+00 : bf16
      %382 = vector.broadcast %cst_226 : bf16 to vector<16x128xbf16>
      %c0_227 = arith.constant 0 : index
      %c0_228 = arith.constant 0 : index
      %383 = vector.load %arg7[%c0_227, %c0_228] : memref<16x128xbf16, #tpu.memory_space<vmem>>, vector<16x128xbf16>
      tpu.vector_store %arg7[%c0_227, %c0_228], %382 {strides = array<i32>} : memref<16x128xbf16, #tpu.memory_space<vmem>>, vector<16x128xbf16>,
      %cst_229 = arith.constant 0.000000e+00 : f32
      %384 = vector.broadcast %cst_229 : f32 to vector<16x128xf32>
      %c0_230 = arith.constant 0 : index
      %c0_231 = arith.constant 0 : index
      %385 = vector.load %arg8[%c0_230, %c0_231] : memref<16x128xf32, #tpu.memory_space<vmem>>, vector<16x128xf32>
      tpu.vector_store %arg8[%c0_230, %c0_231], %384 {strides = array<i32>} : memref<16x128xf32, #tpu.memory_space<vmem>>, vector<16x128xf32>,
    } else {
    }
    %c0 = arith.constant 0 : index
    %c0_1 = arith.constant 0 : index
    %3 = vector.load %arg5[%c0, %c0_1] : memref<1x512xf32, #tpu.memory_space<vmem>>, vector<1x512xf32>
    %4 = vector.shape_cast %3 : vector<1x512xf32> to vector<1x512xf32>
    %5 = vector.broadcast %4 : vector<1x512xf32> to vector<16x512xf32>
    %c0_2 = arith.constant 0 : index
    %c0_3 = arith.constant 0 : index
    %c0_4 = arith.constant 0 : index
    %6 = vector.load %arg2[%c0_2, %c0_3, %c0_4] : memref<8x16x128xbf16, #tpu.memory_space<vmem>>, vector<1x16x128xbf16>
    %7 = vector.shape_cast %6 : vector<1x16x128xbf16> to vector<16x128xbf16>
    %c0_5 = arith.constant 0 : index
    %c0_6 = arith.constant 0 : index
    %8 = vector.load %arg3[%c0_5, %c0_6] : memref<128x512xbf16, #tpu.memory_space<vmem>>, vector<128x512xbf16>
    %cst = arith.constant dense<0.000000e+00> : vector<16x512xf32>
    %9 = tpu.matmul %7, %8, %cst {dimension_numbers = #tpu.dot_dimension_numbers<[1], [0], [0], [1], [0, 0, 1, 1], [], []>} : vector<16x128xbf16>, vector<128x512xbf16>, vector<16x512xf32> -> vector<16x512xf32>
    %c0_7 = arith.constant 0 : index
    %c0_8 = arith.constant 0 : index
    %10 = vector.load %arg7[%c0_7, %c0_8] : memref<16x128xbf16, #tpu.memory_space<vmem>>, vector<16x128xbf16>
    %c0_9 = arith.constant 0 : index
    %c0_10 = arith.constant 0 : index
    %11 = vector.load %arg4[%c0_9, %c0_10] : memref<128x512xbf16, #tpu.memory_space<vmem>>, vector<128x512xbf16>
    %cst_11 = arith.constant dense<0.000000e+00> : vector<16x512xf32>
    %12 = tpu.matmul %10, %11, %cst_11 {dimension_numbers = #tpu.dot_dimension_numbers<[1], [0], [0], [1], [0, 0, 1, 1], [], []>} : vector<16x128xbf16>, vector<128x512xbf16>, vector<16x512xf32> -> vector<16x512xf32>
    %13 = arith.addf %9, %12 : vector<16x512xf32>
    %14 = arith.addf %13, %5 : vector<16x512xf32>
    %15 = vector.extract_strided_slice %14 {offsets = [0, 0], sizes = [16, 128], strides = [1, 1]} : vector<16x512xf32> to vector<16x128xf32>
    %cst_12 = arith.constant 5.000000e-01 : f32
    %16 = vector.broadcast %cst_12 : f32 to vector<16x128xf32>
    %17 = arith.mulf %16, %15 : vector<16x128xf32>
    %18 = math.tanh %17 : vector<16x128xf32>
    %cst_13 = arith.constant 1.000000e+00 : f32
    %19 = vector.broadcast %cst_13 : f32 to vector<16x128xf32>
    %20 = arith.addf %18, %19 : vector<16x128xf32>
    %cst_14 = arith.constant 5.000000e-01 : f32
    %21 = vector.broadcast %cst_14 : f32 to vector<16x128xf32>
    %22 = arith.mulf %21, %20 : vector<16x128xf32>
    %23 = vector.extract_strided_slice %14 {offsets = [0, 128], sizes = [16, 128], strides = [1, 1]} : vector<16x512xf32> to vector<16x128xf32>
    %cst_15 = arith.constant 5.000000e-01 : f32
    %24 = vector.broadcast %cst_15 : f32 to vector<16x128xf32>
    %25 = arith.mulf %24, %23 : vector<16x128xf32>
    %26 = math.tanh %25 : vector<16x128xf32>
    %cst_16 = arith.constant 1.000000e+00 : f32
    %27 = vector.broadcast %cst_16 : f32 to vector<16x128xf32>
    %28 = arith.addf %26, %27 : vector<16x128xf32>
    %cst_17 = arith.constant 5.000000e-01 : f32
    %29 = vector.broadcast %cst_17 : f32 to vector<16x128xf32>
    %30 = arith.mulf %29, %28 : vector<16x128xf32>
    %31 = vector.extract_strided_slice %14 {offsets = [0, 256], sizes = [16, 128], strides = [1, 1]} : vector<16x512xf32> to vector<16x128xf32>
    %32 = math.tanh %31 : vector<16x128xf32>
    %33 = vector.extract_strided_slice %14 {offsets = [0, 384], sizes = [16, 128], strides = [1, 1]} : vector<16x512xf32> to vector<16x128xf32>
    %cst_18 = arith.constant 5.000000e-01 : f32
    %34 = vector.broadcast %cst_18 : f32 to vector<16x128xf32>
    %35 = arith.mulf %34, %33 : vector<16x128xf32>
    %36 = math.tanh %35 : vector<16x128xf32>
    %cst_19 = arith.constant 1.000000e+00 : f32
    %37 = vector.broadcast %cst_19 : f32 to vector<16x128xf32>
    %38 = arith.addf %36, %37 : vector<16x128xf32>
    %cst_20 = arith.constant 5.000000e-01 : f32
    %39 = vector.broadcast %cst_20 : f32 to vector<16x128xf32>
    %40 = arith.mulf %39, %38 : vector<16x128xf32>
    %c0_21 = arith.constant 0 : index
    %c0_22 = arith.constant 0 : index
    %41 = vector.load %arg8[%c0_21, %c0_22] : memref<16x128xf32, #tpu.memory_space<vmem>>, vector<16x128xf32>
    %42 = arith.mulf %30, %41 : vector<16x128xf32>
    %43 = arith.mulf %22, %32 : vector<16x128xf32>
    %44 = arith.addf %42, %43 : vector<16x128xf32>
    %45 = math.tanh %44 : vector<16x128xf32>
    %46 = arith.mulf %40, %45 : vector<16x128xf32>
    %c0_23 = arith.constant 0 : index
    %c0_24 = arith.constant 0 : index
    %47 = vector.load %arg8[%c0_23, %c0_24] : memref<16x128xf32, #tpu.memory_space<vmem>>, vector<16x128xf32>
    tpu.vector_store %arg8[%c0_23, %c0_24], %44 {strides = array<i32>} : memref<16x128xf32, #tpu.memory_space<vmem>>, vector<16x128xf32>,
    %48 = arith.truncf %46 : vector<16x128xf32> to vector<16x128xbf16>
    %c0_25 = arith.constant 0 : index
    %c0_26 = arith.constant 0 : index
    %49 = vector.load %arg7[%c0_25, %c0_26] : memref<16x128xbf16, #tpu.memory_space<vmem>>, vector<16x128xbf16>
    tpu.vector_store %arg7[%c0_25, %c0_26], %48 {strides = array<i32>} : memref<16x128xbf16, #tpu.memory_space<vmem>>, vector<16x128xbf16>,
    %c0_27 = arith.constant 0 : index
    %c0_28 = arith.constant 0 : index
    %c0_29 = arith.constant 0 : index
    %50 = vector.load %arg6[%c0_27, %c0_28, %c0_29] : memref<16x8x128xf32, #tpu.memory_space<vmem>>, vector<16x1x128xf32>
    %51 = vector.shape_cast %50 : vector<16x1x128xf32> to vector<16x128xf32>
    %52 = vector.shape_cast %46 : vector<16x128xf32> to vector<16x1x128xf32>
    tpu.vector_store %arg6[%c0_27, %c0_28, %c0_29], %52 {strides = array<i32>} : memref<16x8x128xf32, #tpu.memory_space<vmem>>, vector<16x1x128xf32>,
    %c1 = arith.constant 1 : index
    %c0_30 = arith.constant 0 : index
    %c0_31 = arith.constant 0 : index
    %53 = vector.load %arg2[%c1, %c0_30, %c0_31] : memref<8x16x128xbf16, #tpu.memory_space<vmem>>, vector<1x16x128xbf16>
    %54 = vector.shape_cast %53 : vector<1x16x128xbf16> to vector<16x128xbf16>
    %c0_32 = arith.constant 0 : index
    %c0_33 = arith.constant 0 : index
    %55 = vector.load %arg3[%c0_32, %c0_33] : memref<128x512xbf16, #tpu.memory_space<vmem>>, vector<128x512xbf16>
    %cst_34 = arith.constant dense<0.000000e+00> : vector<16x512xf32>
    %56 = tpu.matmul %54, %55, %cst_34 {dimension_numbers = #tpu.dot_dimension_numbers<[1], [0], [0], [1], [0, 0, 1, 1], [], []>} : vector<16x128xbf16>, vector<128x512xbf16>, vector<16x512xf32> -> vector<16x512xf32>
    %c0_35 = arith.constant 0 : index
    %c0_36 = arith.constant 0 : index
    %57 = vector.load %arg7[%c0_35, %c0_36] : memref<16x128xbf16, #tpu.memory_space<vmem>>, vector<16x128xbf16>
    %c0_37 = arith.constant 0 : index
    %c0_38 = arith.constant 0 : index
    %58 = vector.load %arg4[%c0_37, %c0_38] : memref<128x512xbf16, #tpu.memory_space<vmem>>, vector<128x512xbf16>
    %cst_39 = arith.constant dense<0.000000e+00> : vector<16x512xf32>
    %59 = tpu.matmul %57, %58, %cst_39 {dimension_numbers = #tpu.dot_dimension_numbers<[1], [0], [0], [1], [0, 0, 1, 1], [], []>} : vector<16x128xbf16>, vector<128x512xbf16>, vector<16x512xf32> -> vector<16x512xf32>
    %60 = arith.addf %56, %59 : vector<16x512xf32>
    %61 = arith.addf %60, %5 : vector<16x512xf32>
    %62 = vector.extract_strided_slice %61 {offsets = [0, 0], sizes = [16, 128], strides = [1, 1]} : vector<16x512xf32> to vector<16x128xf32>
    %cst_40 = arith.constant 5.000000e-01 : f32
    %63 = vector.broadcast %cst_40 : f32 to vector<16x128xf32>
    %64 = arith.mulf %63, %62 : vector<16x128xf32>
    %65 = math.tanh %64 : vector<16x128xf32>
    %cst_41 = arith.constant 1.000000e+00 : f32
    %66 = vector.broadcast %cst_41 : f32 to vector<16x128xf32>
    %67 = arith.addf %65, %66 : vector<16x128xf32>
    %cst_42 = arith.constant 5.000000e-01 : f32
    %68 = vector.broadcast %cst_42 : f32 to vector<16x128xf32>
    %69 = arith.mulf %68, %67 : vector<16x128xf32>
    %70 = vector.extract_strided_slice %61 {offsets = [0, 128], sizes = [16, 128], strides = [1, 1]} : vector<16x512xf32> to vector<16x128xf32>
    %cst_43 = arith.constant 5.000000e-01 : f32
    %71 = vector.broadcast %cst_43 : f32 to vector<16x128xf32>
    %72 = arith.mulf %71, %70 : vector<16x128xf32>
    %73 = math.tanh %72 : vector<16x128xf32>
    %cst_44 = arith.constant 1.000000e+00 : f32
    %74 = vector.broadcast %cst_44 : f32 to vector<16x128xf32>
    %75 = arith.addf %73, %74 : vector<16x128xf32>
    %cst_45 = arith.constant 5.000000e-01 : f32
    %76 = vector.broadcast %cst_45 : f32 to vector<16x128xf32>
    %77 = arith.mulf %76, %75 : vector<16x128xf32>
    %78 = vector.extract_strided_slice %61 {offsets = [0, 256], sizes = [16, 128], strides = [1, 1]} : vector<16x512xf32> to vector<16x128xf32>
    %79 = math.tanh %78 : vector<16x128xf32>
    %80 = vector.extract_strided_slice %61 {offsets = [0, 384], sizes = [16, 128], strides = [1, 1]} : vector<16x512xf32> to vector<16x128xf32>
    %cst_46 = arith.constant 5.000000e-01 : f32
    %81 = vector.broadcast %cst_46 : f32 to vector<16x128xf32>
    %82 = arith.mulf %81, %80 : vector<16x128xf32>
    %83 = math.tanh %82 : vector<16x128xf32>
    %cst_47 = arith.constant 1.000000e+00 : f32
    %84 = vector.broadcast %cst_47 : f32 to vector<16x128xf32>
    %85 = arith.addf %83, %84 : vector<16x128xf32>
    %cst_48 = arith.constant 5.000000e-01 : f32
    %86 = vector.broadcast %cst_48 : f32 to vector<16x128xf32>
    %87 = arith.mulf %86, %85 : vector<16x128xf32>
    %c0_49 = arith.constant 0 : index
    %c0_50 = arith.constant 0 : index
    %88 = vector.load %arg8[%c0_49, %c0_50] : memref<16x128xf32, #tpu.memory_space<vmem>>, vector<16x128xf32>
    %89 = arith.mulf %77, %88 : vector<16x128xf32>
    %90 = arith.mulf %69, %79 : vector<16x128xf32>
    %91 = arith.addf %89, %90 : vector<16x128xf32>
    %92 = math.tanh %91 : vector<16x128xf32>
    %93 = arith.mulf %87, %92 : vector<16x128xf32>
    %c0_51 = arith.constant 0 : index
    %c0_52 = arith.constant 0 : index
    %94 = vector.load %arg8[%c0_51, %c0_52] : memref<16x128xf32, #tpu.memory_space<vmem>>, vector<16x128xf32>
    tpu.vector_store %arg8[%c0_51, %c0_52], %91 {strides = array<i32>} : memref<16x128xf32, #tpu.memory_space<vmem>>, vector<16x128xf32>,
    %95 = arith.truncf %93 : vector<16x128xf32> to vector<16x128xbf16>
    %c0_53 = arith.constant 0 : index
    %c0_54 = arith.constant 0 : index
    %96 = vector.load %arg7[%c0_53, %c0_54] : memref<16x128xbf16, #tpu.memory_space<vmem>>, vector<16x128xbf16>
    tpu.vector_store %arg7[%c0_53, %c0_54], %95 {strides = array<i32>} : memref<16x128xbf16, #tpu.memory_space<vmem>>, vector<16x128xbf16>,
    %c0_55 = arith.constant 0 : index
    %c1_56 = arith.constant 1 : index
    %c0_57 = arith.constant 0 : index
    %97 = vector.load %arg6[%c0_55, %c1_56, %c0_57] : memref<16x8x128xf32, #tpu.memory_space<vmem>>, vector<16x1x128xf32>
    %98 = vector.shape_cast %97 : vector<16x1x128xf32> to vector<16x128xf32>
    %99 = vector.shape_cast %93 : vector<16x128xf32> to vector<16x1x128xf32>
    tpu.vector_store %arg6[%c0_55, %c1_56, %c0_57], %99 {strides = array<i32>} : memref<16x8x128xf32, #tpu.memory_space<vmem>>, vector<16x1x128xf32>,
    %c2 = arith.constant 2 : index
    %c0_58 = arith.constant 0 : index
    %c0_59 = arith.constant 0 : index
    %100 = vector.load %arg2[%c2, %c0_58, %c0_59] : memref<8x16x128xbf16, #tpu.memory_space<vmem>>, vector<1x16x128xbf16>
    %101 = vector.shape_cast %100 : vector<1x16x128xbf16> to vector<16x128xbf16>
    %c0_60 = arith.constant 0 : index
    %c0_61 = arith.constant 0 : index
    %102 = vector.load %arg3[%c0_60, %c0_61] : memref<128x512xbf16, #tpu.memory_space<vmem>>, vector<128x512xbf16>
    %cst_62 = arith.constant dense<0.000000e+00> : vector<16x512xf32>
    %103 = tpu.matmul %101, %102, %cst_62 {dimension_numbers = #tpu.dot_dimension_numbers<[1], [0], [0], [1], [0, 0, 1, 1], [], []>} : vector<16x128xbf16>, vector<128x512xbf16>, vector<16x512xf32> -> vector<16x512xf32>
    %c0_63 = arith.constant 0 : index
    %c0_64 = arith.constant 0 : index
    %104 = vector.load %arg7[%c0_63, %c0_64] : memref<16x128xbf16, #tpu.memory_space<vmem>>, vector<16x128xbf16>
    %c0_65 = arith.constant 0 : index
    %c0_66 = arith.constant 0 : index
    %105 = vector.load %arg4[%c0_65, %c0_66] : memref<128x512xbf16, #tpu.memory_space<vmem>>, vector<128x512xbf16>
    %cst_67 = arith.constant dense<0.000000e+00> : vector<16x512xf32>
    %106 = tpu.matmul %104, %105, %cst_67 {dimension_numbers = #tpu.dot_dimension_numbers<[1], [0], [0], [1], [0, 0, 1, 1], [], []>} : vector<16x128xbf16>, vector<128x512xbf16>, vector<16x512xf32> -> vector<16x512xf32>
    %107 = arith.addf %103, %106 : vector<16x512xf32>
    %108 = arith.addf %107, %5 : vector<16x512xf32>
    %109 = vector.extract_strided_slice %108 {offsets = [0, 0], sizes = [16, 128], strides = [1, 1]} : vector<16x512xf32> to vector<16x128xf32>
    %cst_68 = arith.constant 5.000000e-01 : f32
    %110 = vector.broadcast %cst_68 : f32 to vector<16x128xf32>
    %111 = arith.mulf %110, %109 : vector<16x128xf32>
    %112 = math.tanh %111 : vector<16x128xf32>
    %cst_69 = arith.constant 1.000000e+00 : f32
    %113 = vector.broadcast %cst_69 : f32 to vector<16x128xf32>
    %114 = arith.addf %112, %113 : vector<16x128xf32>
    %cst_70 = arith.constant 5.000000e-01 : f32
    %115 = vector.broadcast %cst_70 : f32 to vector<16x128xf32>
    %116 = arith.mulf %115, %114 : vector<16x128xf32>
    %117 = vector.extract_strided_slice %108 {offsets = [0, 128], sizes = [16, 128], strides = [1, 1]} : vector<16x512xf32> to vector<16x128xf32>
    %cst_71 = arith.constant 5.000000e-01 : f32
    %118 = vector.broadcast %cst_71 : f32 to vector<16x128xf32>
    %119 = arith.mulf %118, %117 : vector<16x128xf32>
    %120 = math.tanh %119 : vector<16x128xf32>
    %cst_72 = arith.constant 1.000000e+00 : f32
    %121 = vector.broadcast %cst_72 : f32 to vector<16x128xf32>
    %122 = arith.addf %120, %121 : vector<16x128xf32>
    %cst_73 = arith.constant 5.000000e-01 : f32
    %123 = vector.broadcast %cst_73 : f32 to vector<16x128xf32>
    %124 = arith.mulf %123, %122 : vector<16x128xf32>
    %125 = vector.extract_strided_slice %108 {offsets = [0, 256], sizes = [16, 128], strides = [1, 1]} : vector<16x512xf32> to vector<16x128xf32>
    %126 = math.tanh %125 : vector<16x128xf32>
    %127 = vector.extract_strided_slice %108 {offsets = [0, 384], sizes = [16, 128], strides = [1, 1]} : vector<16x512xf32> to vector<16x128xf32>
    %cst_74 = arith.constant 5.000000e-01 : f32
    %128 = vector.broadcast %cst_74 : f32 to vector<16x128xf32>
    %129 = arith.mulf %128, %127 : vector<16x128xf32>
    %130 = math.tanh %129 : vector<16x128xf32>
    %cst_75 = arith.constant 1.000000e+00 : f32
    %131 = vector.broadcast %cst_75 : f32 to vector<16x128xf32>
    %132 = arith.addf %130, %131 : vector<16x128xf32>
    %cst_76 = arith.constant 5.000000e-01 : f32
    %133 = vector.broadcast %cst_76 : f32 to vector<16x128xf32>
    %134 = arith.mulf %133, %132 : vector<16x128xf32>
    %c0_77 = arith.constant 0 : index
    %c0_78 = arith.constant 0 : index
    %135 = vector.load %arg8[%c0_77, %c0_78] : memref<16x128xf32, #tpu.memory_space<vmem>>, vector<16x128xf32>
    %136 = arith.mulf %124, %135 : vector<16x128xf32>
    %137 = arith.mulf %116, %126 : vector<16x128xf32>
    %138 = arith.addf %136, %137 : vector<16x128xf32>
    %139 = math.tanh %138 : vector<16x128xf32>
    %140 = arith.mulf %134, %139 : vector<16x128xf32>
    %c0_79 = arith.constant 0 : index
    %c0_80 = arith.constant 0 : index
    %141 = vector.load %arg8[%c0_79, %c0_80] : memref<16x128xf32, #tpu.memory_space<vmem>>, vector<16x128xf32>
    tpu.vector_store %arg8[%c0_79, %c0_80], %138 {strides = array<i32>} : memref<16x128xf32, #tpu.memory_space<vmem>>, vector<16x128xf32>,
    %142 = arith.truncf %140 : vector<16x128xf32> to vector<16x128xbf16>
    %c0_81 = arith.constant 0 : index
    %c0_82 = arith.constant 0 : index
    %143 = vector.load %arg7[%c0_81, %c0_82] : memref<16x128xbf16, #tpu.memory_space<vmem>>, vector<16x128xbf16>
    tpu.vector_store %arg7[%c0_81, %c0_82], %142 {strides = array<i32>} : memref<16x128xbf16, #tpu.memory_space<vmem>>, vector<16x128xbf16>,
    %c0_83 = arith.constant 0 : index
    %c2_84 = arith.constant 2 : index
    %c0_85 = arith.constant 0 : index
    %144 = vector.load %arg6[%c0_83, %c2_84, %c0_85] : memref<16x8x128xf32, #tpu.memory_space<vmem>>, vector<16x1x128xf32>
    %145 = vector.shape_cast %144 : vector<16x1x128xf32> to vector<16x128xf32>
    %146 = vector.shape_cast %140 : vector<16x128xf32> to vector<16x1x128xf32>
    tpu.vector_store %arg6[%c0_83, %c2_84, %c0_85], %146 {strides = array<i32>} : memref<16x8x128xf32, #tpu.memory_space<vmem>>, vector<16x1x128xf32>,
    %c3 = arith.constant 3 : index
    %c0_86 = arith.constant 0 : index
    %c0_87 = arith.constant 0 : index
    %147 = vector.load %arg2[%c3, %c0_86, %c0_87] : memref<8x16x128xbf16, #tpu.memory_space<vmem>>, vector<1x16x128xbf16>
    %148 = vector.shape_cast %147 : vector<1x16x128xbf16> to vector<16x128xbf16>
    %c0_88 = arith.constant 0 : index
    %c0_89 = arith.constant 0 : index
    %149 = vector.load %arg3[%c0_88, %c0_89] : memref<128x512xbf16, #tpu.memory_space<vmem>>, vector<128x512xbf16>
    %cst_90 = arith.constant dense<0.000000e+00> : vector<16x512xf32>
    %150 = tpu.matmul %148, %149, %cst_90 {dimension_numbers = #tpu.dot_dimension_numbers<[1], [0], [0], [1], [0, 0, 1, 1], [], []>} : vector<16x128xbf16>, vector<128x512xbf16>, vector<16x512xf32> -> vector<16x512xf32>
    %c0_91 = arith.constant 0 : index
    %c0_92 = arith.constant 0 : index
    %151 = vector.load %arg7[%c0_91, %c0_92] : memref<16x128xbf16, #tpu.memory_space<vmem>>, vector<16x128xbf16>
    %c0_93 = arith.constant 0 : index
    %c0_94 = arith.constant 0 : index
    %152 = vector.load %arg4[%c0_93, %c0_94] : memref<128x512xbf16, #tpu.memory_space<vmem>>, vector<128x512xbf16>
    %cst_95 = arith.constant dense<0.000000e+00> : vector<16x512xf32>
    %153 = tpu.matmul %151, %152, %cst_95 {dimension_numbers = #tpu.dot_dimension_numbers<[1], [0], [0], [1], [0, 0, 1, 1], [], []>} : vector<16x128xbf16>, vector<128x512xbf16>, vector<16x512xf32> -> vector<16x512xf32>
    %154 = arith.addf %150, %153 : vector<16x512xf32>
    %155 = arith.addf %154, %5 : vector<16x512xf32>
    %156 = vector.extract_strided_slice %155 {offsets = [0, 0], sizes = [16, 128], strides = [1, 1]} : vector<16x512xf32> to vector<16x128xf32>
    %cst_96 = arith.constant 5.000000e-01 : f32
    %157 = vector.broadcast %cst_96 : f32 to vector<16x128xf32>
    %158 = arith.mulf %157, %156 : vector<16x128xf32>
    %159 = math.tanh %158 : vector<16x128xf32>
    %cst_97 = arith.constant 1.000000e+00 : f32
    %160 = vector.broadcast %cst_97 : f32 to vector<16x128xf32>
    %161 = arith.addf %159, %160 : vector<16x128xf32>
    %cst_98 = arith.constant 5.000000e-01 : f32
    %162 = vector.broadcast %cst_98 : f32 to vector<16x128xf32>
    %163 = arith.mulf %162, %161 : vector<16x128xf32>
    %164 = vector.extract_strided_slice %155 {offsets = [0, 128], sizes = [16, 128], strides = [1, 1]} : vector<16x512xf32> to vector<16x128xf32>
    %cst_99 = arith.constant 5.000000e-01 : f32
    %165 = vector.broadcast %cst_99 : f32 to vector<16x128xf32>
    %166 = arith.mulf %165, %164 : vector<16x128xf32>
    %167 = math.tanh %166 : vector<16x128xf32>
    %cst_100 = arith.constant 1.000000e+00 : f32
    %168 = vector.broadcast %cst_100 : f32 to vector<16x128xf32>
    %169 = arith.addf %167, %168 : vector<16x128xf32>
    %cst_101 = arith.constant 5.000000e-01 : f32
    %170 = vector.broadcast %cst_101 : f32 to vector<16x128xf32>
    %171 = arith.mulf %170, %169 : vector<16x128xf32>
    %172 = vector.extract_strided_slice %155 {offsets = [0, 256], sizes = [16, 128], strides = [1, 1]} : vector<16x512xf32> to vector<16x128xf32>
    %173 = math.tanh %172 : vector<16x128xf32>
    %174 = vector.extract_strided_slice %155 {offsets = [0, 384], sizes = [16, 128], strides = [1, 1]} : vector<16x512xf32> to vector<16x128xf32>
    %cst_102 = arith.constant 5.000000e-01 : f32
    %175 = vector.broadcast %cst_102 : f32 to vector<16x128xf32>
    %176 = arith.mulf %175, %174 : vector<16x128xf32>
    %177 = math.tanh %176 : vector<16x128xf32>
    %cst_103 = arith.constant 1.000000e+00 : f32
    %178 = vector.broadcast %cst_103 : f32 to vector<16x128xf32>
    %179 = arith.addf %177, %178 : vector<16x128xf32>
    %cst_104 = arith.constant 5.000000e-01 : f32
    %180 = vector.broadcast %cst_104 : f32 to vector<16x128xf32>
    %181 = arith.mulf %180, %179 : vector<16x128xf32>
    %c0_105 = arith.constant 0 : index
    %c0_106 = arith.constant 0 : index
    %182 = vector.load %arg8[%c0_105, %c0_106] : memref<16x128xf32, #tpu.memory_space<vmem>>, vector<16x128xf32>
    %183 = arith.mulf %171, %182 : vector<16x128xf32>
    %184 = arith.mulf %163, %173 : vector<16x128xf32>
    %185 = arith.addf %183, %184 : vector<16x128xf32>
    %186 = math.tanh %185 : vector<16x128xf32>
    %187 = arith.mulf %181, %186 : vector<16x128xf32>
    %c0_107 = arith.constant 0 : index
    %c0_108 = arith.constant 0 : index
    %188 = vector.load %arg8[%c0_107, %c0_108] : memref<16x128xf32, #tpu.memory_space<vmem>>, vector<16x128xf32>
    tpu.vector_store %arg8[%c0_107, %c0_108], %185 {strides = array<i32>} : memref<16x128xf32, #tpu.memory_space<vmem>>, vector<16x128xf32>,
    %189 = arith.truncf %187 : vector<16x128xf32> to vector<16x128xbf16>
    %c0_109 = arith.constant 0 : index
    %c0_110 = arith.constant 0 : index
    %190 = vector.load %arg7[%c0_109, %c0_110] : memref<16x128xbf16, #tpu.memory_space<vmem>>, vector<16x128xbf16>
    tpu.vector_store %arg7[%c0_109, %c0_110], %189 {strides = array<i32>} : memref<16x128xbf16, #tpu.memory_space<vmem>>, vector<16x128xbf16>,
    %c0_111 = arith.constant 0 : index
    %c3_112 = arith.constant 3 : index
    %c0_113 = arith.constant 0 : index
    %191 = vector.load %arg6[%c0_111, %c3_112, %c0_113] : memref<16x8x128xf32, #tpu.memory_space<vmem>>, vector<16x1x128xf32>
    %192 = vector.shape_cast %191 : vector<16x1x128xf32> to vector<16x128xf32>
    %193 = vector.shape_cast %187 : vector<16x128xf32> to vector<16x1x128xf32>
    tpu.vector_store %arg6[%c0_111, %c3_112, %c0_113], %193 {strides = array<i32>} : memref<16x8x128xf32, #tpu.memory_space<vmem>>, vector<16x1x128xf32>,
    %c4 = arith.constant 4 : index
    %c0_114 = arith.constant 0 : index
    %c0_115 = arith.constant 0 : index
    %194 = vector.load %arg2[%c4, %c0_114, %c0_115] : memref<8x16x128xbf16, #tpu.memory_space<vmem>>, vector<1x16x128xbf16>
    %195 = vector.shape_cast %194 : vector<1x16x128xbf16> to vector<16x128xbf16>
    %c0_116 = arith.constant 0 : index
    %c0_117 = arith.constant 0 : index
    %196 = vector.load %arg3[%c0_116, %c0_117] : memref<128x512xbf16, #tpu.memory_space<vmem>>, vector<128x512xbf16>
    %cst_118 = arith.constant dense<0.000000e+00> : vector<16x512xf32>
    %197 = tpu.matmul %195, %196, %cst_118 {dimension_numbers = #tpu.dot_dimension_numbers<[1], [0], [0], [1], [0, 0, 1, 1], [], []>} : vector<16x128xbf16>, vector<128x512xbf16>, vector<16x512xf32> -> vector<16x512xf32>
    %c0_119 = arith.constant 0 : index
    %c0_120 = arith.constant 0 : index
    %198 = vector.load %arg7[%c0_119, %c0_120] : memref<16x128xbf16, #tpu.memory_space<vmem>>, vector<16x128xbf16>
    %c0_121 = arith.constant 0 : index
    %c0_122 = arith.constant 0 : index
    %199 = vector.load %arg4[%c0_121, %c0_122] : memref<128x512xbf16, #tpu.memory_space<vmem>>, vector<128x512xbf16>
    %cst_123 = arith.constant dense<0.000000e+00> : vector<16x512xf32>
    %200 = tpu.matmul %198, %199, %cst_123 {dimension_numbers = #tpu.dot_dimension_numbers<[1], [0], [0], [1], [0, 0, 1, 1], [], []>} : vector<16x128xbf16>, vector<128x512xbf16>, vector<16x512xf32> -> vector<16x512xf32>
    %201 = arith.addf %197, %200 : vector<16x512xf32>
    %202 = arith.addf %201, %5 : vector<16x512xf32>
    %203 = vector.extract_strided_slice %202 {offsets = [0, 0], sizes = [16, 128], strides = [1, 1]} : vector<16x512xf32> to vector<16x128xf32>
    %cst_124 = arith.constant 5.000000e-01 : f32
    %204 = vector.broadcast %cst_124 : f32 to vector<16x128xf32>
    %205 = arith.mulf %204, %203 : vector<16x128xf32>
    %206 = math.tanh %205 : vector<16x128xf32>
    %cst_125 = arith.constant 1.000000e+00 : f32
    %207 = vector.broadcast %cst_125 : f32 to vector<16x128xf32>
    %208 = arith.addf %206, %207 : vector<16x128xf32>
    %cst_126 = arith.constant 5.000000e-01 : f32
    %209 = vector.broadcast %cst_126 : f32 to vector<16x128xf32>
    %210 = arith.mulf %209, %208 : vector<16x128xf32>
    %211 = vector.extract_strided_slice %202 {offsets = [0, 128], sizes = [16, 128], strides = [1, 1]} : vector<16x512xf32> to vector<16x128xf32>
    %cst_127 = arith.constant 5.000000e-01 : f32
    %212 = vector.broadcast %cst_127 : f32 to vector<16x128xf32>
    %213 = arith.mulf %212, %211 : vector<16x128xf32>
    %214 = math.tanh %213 : vector<16x128xf32>
    %cst_128 = arith.constant 1.000000e+00 : f32
    %215 = vector.broadcast %cst_128 : f32 to vector<16x128xf32>
    %216 = arith.addf %214, %215 : vector<16x128xf32>
    %cst_129 = arith.constant 5.000000e-01 : f32
    %217 = vector.broadcast %cst_129 : f32 to vector<16x128xf32>
    %218 = arith.mulf %217, %216 : vector<16x128xf32>
    %219 = vector.extract_strided_slice %202 {offsets = [0, 256], sizes = [16, 128], strides = [1, 1]} : vector<16x512xf32> to vector<16x128xf32>
    %220 = math.tanh %219 : vector<16x128xf32>
    %221 = vector.extract_strided_slice %202 {offsets = [0, 384], sizes = [16, 128], strides = [1, 1]} : vector<16x512xf32> to vector<16x128xf32>
    %cst_130 = arith.constant 5.000000e-01 : f32
    %222 = vector.broadcast %cst_130 : f32 to vector<16x128xf32>
    %223 = arith.mulf %222, %221 : vector<16x128xf32>
    %224 = math.tanh %223 : vector<16x128xf32>
    %cst_131 = arith.constant 1.000000e+00 : f32
    %225 = vector.broadcast %cst_131 : f32 to vector<16x128xf32>
    %226 = arith.addf %224, %225 : vector<16x128xf32>
    %cst_132 = arith.constant 5.000000e-01 : f32
    %227 = vector.broadcast %cst_132 : f32 to vector<16x128xf32>
    %228 = arith.mulf %227, %226 : vector<16x128xf32>
    %c0_133 = arith.constant 0 : index
    %c0_134 = arith.constant 0 : index
    %229 = vector.load %arg8[%c0_133, %c0_134] : memref<16x128xf32, #tpu.memory_space<vmem>>, vector<16x128xf32>
    %230 = arith.mulf %218, %229 : vector<16x128xf32>
    %231 = arith.mulf %210, %220 : vector<16x128xf32>
    %232 = arith.addf %230, %231 : vector<16x128xf32>
    %233 = math.tanh %232 : vector<16x128xf32>
    %234 = arith.mulf %228, %233 : vector<16x128xf32>
    %c0_135 = arith.constant 0 : index
    %c0_136 = arith.constant 0 : index
    %235 = vector.load %arg8[%c0_135, %c0_136] : memref<16x128xf32, #tpu.memory_space<vmem>>, vector<16x128xf32>
    tpu.vector_store %arg8[%c0_135, %c0_136], %232 {strides = array<i32>} : memref<16x128xf32, #tpu.memory_space<vmem>>, vector<16x128xf32>,
    %236 = arith.truncf %234 : vector<16x128xf32> to vector<16x128xbf16>
    %c0_137 = arith.constant 0 : index
    %c0_138 = arith.constant 0 : index
    %237 = vector.load %arg7[%c0_137, %c0_138] : memref<16x128xbf16, #tpu.memory_space<vmem>>, vector<16x128xbf16>
    tpu.vector_store %arg7[%c0_137, %c0_138], %236 {strides = array<i32>} : memref<16x128xbf16, #tpu.memory_space<vmem>>, vector<16x128xbf16>,
    %c0_139 = arith.constant 0 : index
    %c4_140 = arith.constant 4 : index
    %c0_141 = arith.constant 0 : index
    %238 = vector.load %arg6[%c0_139, %c4_140, %c0_141] : memref<16x8x128xf32, #tpu.memory_space<vmem>>, vector<16x1x128xf32>
    %239 = vector.shape_cast %238 : vector<16x1x128xf32> to vector<16x128xf32>
    %240 = vector.shape_cast %234 : vector<16x128xf32> to vector<16x1x128xf32>
    tpu.vector_store %arg6[%c0_139, %c4_140, %c0_141], %240 {strides = array<i32>} : memref<16x8x128xf32, #tpu.memory_space<vmem>>, vector<16x1x128xf32>,
    %c5 = arith.constant 5 : index
    %c0_142 = arith.constant 0 : index
    %c0_143 = arith.constant 0 : index
    %241 = vector.load %arg2[%c5, %c0_142, %c0_143] : memref<8x16x128xbf16, #tpu.memory_space<vmem>>, vector<1x16x128xbf16>
    %242 = vector.shape_cast %241 : vector<1x16x128xbf16> to vector<16x128xbf16>
    %c0_144 = arith.constant 0 : index
    %c0_145 = arith.constant 0 : index
    %243 = vector.load %arg3[%c0_144, %c0_145] : memref<128x512xbf16, #tpu.memory_space<vmem>>, vector<128x512xbf16>
    %cst_146 = arith.constant dense<0.000000e+00> : vector<16x512xf32>
    %244 = tpu.matmul %242, %243, %cst_146 {dimension_numbers = #tpu.dot_dimension_numbers<[1], [0], [0], [1], [0, 0, 1, 1], [], []>} : vector<16x128xbf16>, vector<128x512xbf16>, vector<16x512xf32> -> vector<16x512xf32>
    %c0_147 = arith.constant 0 : index
    %c0_148 = arith.constant 0 : index
    %245 = vector.load %arg7[%c0_147, %c0_148] : memref<16x128xbf16, #tpu.memory_space<vmem>>, vector<16x128xbf16>
    %c0_149 = arith.constant 0 : index
    %c0_150 = arith.constant 0 : index
    %246 = vector.load %arg4[%c0_149, %c0_150] : memref<128x512xbf16, #tpu.memory_space<vmem>>, vector<128x512xbf16>
    %cst_151 = arith.constant dense<0.000000e+00> : vector<16x512xf32>
    %247 = tpu.matmul %245, %246, %cst_151 {dimension_numbers = #tpu.dot_dimension_numbers<[1], [0], [0], [1], [0, 0, 1, 1], [], []>} : vector<16x128xbf16>, vector<128x512xbf16>, vector<16x512xf32> -> vector<16x512xf32>
    %248 = arith.addf %244, %247 : vector<16x512xf32>
    %249 = arith.addf %248, %5 : vector<16x512xf32>
    %250 = vector.extract_strided_slice %249 {offsets = [0, 0], sizes = [16, 128], strides = [1, 1]} : vector<16x512xf32> to vector<16x128xf32>
    %cst_152 = arith.constant 5.000000e-01 : f32
    %251 = vector.broadcast %cst_152 : f32 to vector<16x128xf32>
    %252 = arith.mulf %251, %250 : vector<16x128xf32>
    %253 = math.tanh %252 : vector<16x128xf32>
    %cst_153 = arith.constant 1.000000e+00 : f32
    %254 = vector.broadcast %cst_153 : f32 to vector<16x128xf32>
    %255 = arith.addf %253, %254 : vector<16x128xf32>
    %cst_154 = arith.constant 5.000000e-01 : f32
    %256 = vector.broadcast %cst_154 : f32 to vector<16x128xf32>
    %257 = arith.mulf %256, %255 : vector<16x128xf32>
    %258 = vector.extract_strided_slice %249 {offsets = [0, 128], sizes = [16, 128], strides = [1, 1]} : vector<16x512xf32> to vector<16x128xf32>
    %cst_155 = arith.constant 5.000000e-01 : f32
    %259 = vector.broadcast %cst_155 : f32 to vector<16x128xf32>
    %260 = arith.mulf %259, %258 : vector<16x128xf32>
    %261 = math.tanh %260 : vector<16x128xf32>
    %cst_156 = arith.constant 1.000000e+00 : f32
    %262 = vector.broadcast %cst_156 : f32 to vector<16x128xf32>
    %263 = arith.addf %261, %262 : vector<16x128xf32>
    %cst_157 = arith.constant 5.000000e-01 : f32
    %264 = vector.broadcast %cst_157 : f32 to vector<16x128xf32>
    %265 = arith.mulf %264, %263 : vector<16x128xf32>
    %266 = vector.extract_strided_slice %249 {offsets = [0, 256], sizes = [16, 128], strides = [1, 1]} : vector<16x512xf32> to vector<16x128xf32>
    %267 = math.tanh %266 : vector<16x128xf32>
    %268 = vector.extract_strided_slice %249 {offsets = [0, 384], sizes = [16, 128], strides = [1, 1]} : vector<16x512xf32> to vector<16x128xf32>
    %cst_158 = arith.constant 5.000000e-01 : f32
    %269 = vector.broadcast %cst_158 : f32 to vector<16x128xf32>
    %270 = arith.mulf %269, %268 : vector<16x128xf32>
    %271 = math.tanh %270 : vector<16x128xf32>
    %cst_159 = arith.constant 1.000000e+00 : f32
    %272 = vector.broadcast %cst_159 : f32 to vector<16x128xf32>
    %273 = arith.addf %271, %272 : vector<16x128xf32>
    %cst_160 = arith.constant 5.000000e-01 : f32
    %274 = vector.broadcast %cst_160 : f32 to vector<16x128xf32>
    %275 = arith.mulf %274, %273 : vector<16x128xf32>
    %c0_161 = arith.constant 0 : index
    %c0_162 = arith.constant 0 : index
    %276 = vector.load %arg8[%c0_161, %c0_162] : memref<16x128xf32, #tpu.memory_space<vmem>>, vector<16x128xf32>
    %277 = arith.mulf %265, %276 : vector<16x128xf32>
    %278 = arith.mulf %257, %267 : vector<16x128xf32>
    %279 = arith.addf %277, %278 : vector<16x128xf32>
    %280 = math.tanh %279 : vector<16x128xf32>
    %281 = arith.mulf %275, %280 : vector<16x128xf32>
    %c0_163 = arith.constant 0 : index
    %c0_164 = arith.constant 0 : index
    %282 = vector.load %arg8[%c0_163, %c0_164] : memref<16x128xf32, #tpu.memory_space<vmem>>, vector<16x128xf32>
    tpu.vector_store %arg8[%c0_163, %c0_164], %279 {strides = array<i32>} : memref<16x128xf32, #tpu.memory_space<vmem>>, vector<16x128xf32>,
    %283 = arith.truncf %281 : vector<16x128xf32> to vector<16x128xbf16>
    %c0_165 = arith.constant 0 : index
    %c0_166 = arith.constant 0 : index
    %284 = vector.load %arg7[%c0_165, %c0_166] : memref<16x128xbf16, #tpu.memory_space<vmem>>, vector<16x128xbf16>
    tpu.vector_store %arg7[%c0_165, %c0_166], %283 {strides = array<i32>} : memref<16x128xbf16, #tpu.memory_space<vmem>>, vector<16x128xbf16>,
    %c0_167 = arith.constant 0 : index
    %c5_168 = arith.constant 5 : index
    %c0_169 = arith.constant 0 : index
    %285 = vector.load %arg6[%c0_167, %c5_168, %c0_169] : memref<16x8x128xf32, #tpu.memory_space<vmem>>, vector<16x1x128xf32>
    %286 = vector.shape_cast %285 : vector<16x1x128xf32> to vector<16x128xf32>
    %287 = vector.shape_cast %281 : vector<16x128xf32> to vector<16x1x128xf32>
    tpu.vector_store %arg6[%c0_167, %c5_168, %c0_169], %287 {strides = array<i32>} : memref<16x8x128xf32, #tpu.memory_space<vmem>>, vector<16x1x128xf32>,
    %c6 = arith.constant 6 : index
    %c0_170 = arith.constant 0 : index
    %c0_171 = arith.constant 0 : index
    %288 = vector.load %arg2[%c6, %c0_170, %c0_171] : memref<8x16x128xbf16, #tpu.memory_space<vmem>>, vector<1x16x128xbf16>
    %289 = vector.shape_cast %288 : vector<1x16x128xbf16> to vector<16x128xbf16>
    %c0_172 = arith.constant 0 : index
    %c0_173 = arith.constant 0 : index
    %290 = vector.load %arg3[%c0_172, %c0_173] : memref<128x512xbf16, #tpu.memory_space<vmem>>, vector<128x512xbf16>
    %cst_174 = arith.constant dense<0.000000e+00> : vector<16x512xf32>
    %291 = tpu.matmul %289, %290, %cst_174 {dimension_numbers = #tpu.dot_dimension_numbers<[1], [0], [0], [1], [0, 0, 1, 1], [], []>} : vector<16x128xbf16>, vector<128x512xbf16>, vector<16x512xf32> -> vector<16x512xf32>
    %c0_175 = arith.constant 0 : index
    %c0_176 = arith.constant 0 : index
    %292 = vector.load %arg7[%c0_175, %c0_176] : memref<16x128xbf16, #tpu.memory_space<vmem>>, vector<16x128xbf16>
    %c0_177 = arith.constant 0 : index
    %c0_178 = arith.constant 0 : index
    %293 = vector.load %arg4[%c0_177, %c0_178] : memref<128x512xbf16, #tpu.memory_space<vmem>>, vector<128x512xbf16>
    %cst_179 = arith.constant dense<0.000000e+00> : vector<16x512xf32>
    %294 = tpu.matmul %292, %293, %cst_179 {dimension_numbers = #tpu.dot_dimension_numbers<[1], [0], [0], [1], [0, 0, 1, 1], [], []>} : vector<16x128xbf16>, vector<128x512xbf16>, vector<16x512xf32> -> vector<16x512xf32>
    %295 = arith.addf %291, %294 : vector<16x512xf32>
    %296 = arith.addf %295, %5 : vector<16x512xf32>
    %297 = vector.extract_strided_slice %296 {offsets = [0, 0], sizes = [16, 128], strides = [1, 1]} : vector<16x512xf32> to vector<16x128xf32>
    %cst_180 = arith.constant 5.000000e-01 : f32
    %298 = vector.broadcast %cst_180 : f32 to vector<16x128xf32>
    %299 = arith.mulf %298, %297 : vector<16x128xf32>
    %300 = math.tanh %299 : vector<16x128xf32>
    %cst_181 = arith.constant 1.000000e+00 : f32
    %301 = vector.broadcast %cst_181 : f32 to vector<16x128xf32>
    %302 = arith.addf %300, %301 : vector<16x128xf32>
    %cst_182 = arith.constant 5.000000e-01 : f32
    %303 = vector.broadcast %cst_182 : f32 to vector<16x128xf32>
    %304 = arith.mulf %303, %302 : vector<16x128xf32>
    %305 = vector.extract_strided_slice %296 {offsets = [0, 128], sizes = [16, 128], strides = [1, 1]} : vector<16x512xf32> to vector<16x128xf32>
    %cst_183 = arith.constant 5.000000e-01 : f32
    %306 = vector.broadcast %cst_183 : f32 to vector<16x128xf32>
    %307 = arith.mulf %306, %305 : vector<16x128xf32>
    %308 = math.tanh %307 : vector<16x128xf32>
    %cst_184 = arith.constant 1.000000e+00 : f32
    %309 = vector.broadcast %cst_184 : f32 to vector<16x128xf32>
    %310 = arith.addf %308, %309 : vector<16x128xf32>
    %cst_185 = arith.constant 5.000000e-01 : f32
    %311 = vector.broadcast %cst_185 : f32 to vector<16x128xf32>
    %312 = arith.mulf %311, %310 : vector<16x128xf32>
    %313 = vector.extract_strided_slice %296 {offsets = [0, 256], sizes = [16, 128], strides = [1, 1]} : vector<16x512xf32> to vector<16x128xf32>
    %314 = math.tanh %313 : vector<16x128xf32>
    %315 = vector.extract_strided_slice %296 {offsets = [0, 384], sizes = [16, 128], strides = [1, 1]} : vector<16x512xf32> to vector<16x128xf32>
    %cst_186 = arith.constant 5.000000e-01 : f32
    %316 = vector.broadcast %cst_186 : f32 to vector<16x128xf32>
    %317 = arith.mulf %316, %315 : vector<16x128xf32>
    %318 = math.tanh %317 : vector<16x128xf32>
    %cst_187 = arith.constant 1.000000e+00 : f32
    %319 = vector.broadcast %cst_187 : f32 to vector<16x128xf32>
    %320 = arith.addf %318, %319 : vector<16x128xf32>
    %cst_188 = arith.constant 5.000000e-01 : f32
    %321 = vector.broadcast %cst_188 : f32 to vector<16x128xf32>
    %322 = arith.mulf %321, %320 : vector<16x128xf32>
    %c0_189 = arith.constant 0 : index
    %c0_190 = arith.constant 0 : index
    %323 = vector.load %arg8[%c0_189, %c0_190] : memref<16x128xf32, #tpu.memory_space<vmem>>, vector<16x128xf32>
    %324 = arith.mulf %312, %323 : vector<16x128xf32>
    %325 = arith.mulf %304, %314 : vector<16x128xf32>
    %326 = arith.addf %324, %325 : vector<16x128xf32>
    %327 = math.tanh %326 : vector<16x128xf32>
    %328 = arith.mulf %322, %327 : vector<16x128xf32>
    %c0_191 = arith.constant 0 : index
    %c0_192 = arith.constant 0 : index
    %329 = vector.load %arg8[%c0_191, %c0_192] : memref<16x128xf32, #tpu.memory_space<vmem>>, vector<16x128xf32>
    tpu.vector_store %arg8[%c0_191, %c0_192], %326 {strides = array<i32>} : memref<16x128xf32, #tpu.memory_space<vmem>>, vector<16x128xf32>,
    %330 = arith.truncf %328 : vector<16x128xf32> to vector<16x128xbf16>
    %c0_193 = arith.constant 0 : index
    %c0_194 = arith.constant 0 : index
    %331 = vector.load %arg7[%c0_193, %c0_194] : memref<16x128xbf16, #tpu.memory_space<vmem>>, vector<16x128xbf16>
    tpu.vector_store %arg7[%c0_193, %c0_194], %330 {strides = array<i32>} : memref<16x128xbf16, #tpu.memory_space<vmem>>, vector<16x128xbf16>,
    %c0_195 = arith.constant 0 : index
    %c6_196 = arith.constant 6 : index
    %c0_197 = arith.constant 0 : index
    %332 = vector.load %arg6[%c0_195, %c6_196, %c0_197] : memref<16x8x128xf32, #tpu.memory_space<vmem>>, vector<16x1x128xf32>
    %333 = vector.shape_cast %332 : vector<16x1x128xf32> to vector<16x128xf32>
    %334 = vector.shape_cast %328 : vector<16x128xf32> to vector<16x1x128xf32>
    tpu.vector_store %arg6[%c0_195, %c6_196, %c0_197], %334 {strides = array<i32>} : memref<16x8x128xf32, #tpu.memory_space<vmem>>, vector<16x1x128xf32>,
    %c7 = arith.constant 7 : index
    %c0_198 = arith.constant 0 : index
    %c0_199 = arith.constant 0 : index
    %335 = vector.load %arg2[%c7, %c0_198, %c0_199] : memref<8x16x128xbf16, #tpu.memory_space<vmem>>, vector<1x16x128xbf16>
    %336 = vector.shape_cast %335 : vector<1x16x128xbf16> to vector<16x128xbf16>
    %c0_200 = arith.constant 0 : index
    %c0_201 = arith.constant 0 : index
    %337 = vector.load %arg3[%c0_200, %c0_201] : memref<128x512xbf16, #tpu.memory_space<vmem>>, vector<128x512xbf16>
    %cst_202 = arith.constant dense<0.000000e+00> : vector<16x512xf32>
    %338 = tpu.matmul %336, %337, %cst_202 {dimension_numbers = #tpu.dot_dimension_numbers<[1], [0], [0], [1], [0, 0, 1, 1], [], []>} : vector<16x128xbf16>, vector<128x512xbf16>, vector<16x512xf32> -> vector<16x512xf32>
    %c0_203 = arith.constant 0 : index
    %c0_204 = arith.constant 0 : index
    %339 = vector.load %arg7[%c0_203, %c0_204] : memref<16x128xbf16, #tpu.memory_space<vmem>>, vector<16x128xbf16>
    %c0_205 = arith.constant 0 : index
    %c0_206 = arith.constant 0 : index
    %340 = vector.load %arg4[%c0_205, %c0_206] : memref<128x512xbf16, #tpu.memory_space<vmem>>, vector<128x512xbf16>
    %cst_207 = arith.constant dense<0.000000e+00> : vector<16x512xf32>
    %341 = tpu.matmul %339, %340, %cst_207 {dimension_numbers = #tpu.dot_dimension_numbers<[1], [0], [0], [1], [0, 0, 1, 1], [], []>} : vector<16x128xbf16>, vector<128x512xbf16>, vector<16x512xf32> -> vector<16x512xf32>
    %342 = arith.addf %338, %341 : vector<16x512xf32>
    %343 = arith.addf %342, %5 : vector<16x512xf32>
    %344 = vector.extract_strided_slice %343 {offsets = [0, 0], sizes = [16, 128], strides = [1, 1]} : vector<16x512xf32> to vector<16x128xf32>
    %cst_208 = arith.constant 5.000000e-01 : f32
    %345 = vector.broadcast %cst_208 : f32 to vector<16x128xf32>
    %346 = arith.mulf %345, %344 : vector<16x128xf32>
    %347 = math.tanh %346 : vector<16x128xf32>
    %cst_209 = arith.constant 1.000000e+00 : f32
    %348 = vector.broadcast %cst_209 : f32 to vector<16x128xf32>
    %349 = arith.addf %347, %348 : vector<16x128xf32>
    %cst_210 = arith.constant 5.000000e-01 : f32
    %350 = vector.broadcast %cst_210 : f32 to vector<16x128xf32>
    %351 = arith.mulf %350, %349 : vector<16x128xf32>
    %352 = vector.extract_strided_slice %343 {offsets = [0, 128], sizes = [16, 128], strides = [1, 1]} : vector<16x512xf32> to vector<16x128xf32>
    %cst_211 = arith.constant 5.000000e-01 : f32
    %353 = vector.broadcast %cst_211 : f32 to vector<16x128xf32>
    %354 = arith.mulf %353, %352 : vector<16x128xf32>
    %355 = math.tanh %354 : vector<16x128xf32>
    %cst_212 = arith.constant 1.000000e+00 : f32
    %356 = vector.broadcast %cst_212 : f32 to vector<16x128xf32>
    %357 = arith.addf %355, %356 : vector<16x128xf32>
    %cst_213 = arith.constant 5.000000e-01 : f32
    %358 = vector.broadcast %cst_213 : f32 to vector<16x128xf32>
    %359 = arith.mulf %358, %357 : vector<16x128xf32>
    %360 = vector.extract_strided_slice %343 {offsets = [0, 256], sizes = [16, 128], strides = [1, 1]} : vector<16x512xf32> to vector<16x128xf32>
    %361 = math.tanh %360 : vector<16x128xf32>
    %362 = vector.extract_strided_slice %343 {offsets = [0, 384], sizes = [16, 128], strides = [1, 1]} : vector<16x512xf32> to vector<16x128xf32>
    %cst_214 = arith.constant 5.000000e-01 : f32
    %363 = vector.broadcast %cst_214 : f32 to vector<16x128xf32>
    %364 = arith.mulf %363, %362 : vector<16x128xf32>
    %365 = math.tanh %364 : vector<16x128xf32>
    %cst_215 = arith.constant 1.000000e+00 : f32
    %366 = vector.broadcast %cst_215 : f32 to vector<16x128xf32>
    %367 = arith.addf %365, %366 : vector<16x128xf32>
    %cst_216 = arith.constant 5.000000e-01 : f32
    %368 = vector.broadcast %cst_216 : f32 to vector<16x128xf32>
    %369 = arith.mulf %368, %367 : vector<16x128xf32>
    %c0_217 = arith.constant 0 : index
    %c0_218 = arith.constant 0 : index
    %370 = vector.load %arg8[%c0_217, %c0_218] : memref<16x128xf32, #tpu.memory_space<vmem>>, vector<16x128xf32>
    %371 = arith.mulf %359, %370 : vector<16x128xf32>
    %372 = arith.mulf %351, %361 : vector<16x128xf32>
    %373 = arith.addf %371, %372 : vector<16x128xf32>
    %374 = math.tanh %373 : vector<16x128xf32>
    %375 = arith.mulf %369, %374 : vector<16x128xf32>
    %c0_219 = arith.constant 0 : index
    %c0_220 = arith.constant 0 : index
    %376 = vector.load %arg8[%c0_219, %c0_220] : memref<16x128xf32, #tpu.memory_space<vmem>>, vector<16x128xf32>
    tpu.vector_store %arg8[%c0_219, %c0_220], %373 {strides = array<i32>} : memref<16x128xf32, #tpu.memory_space<vmem>>, vector<16x128xf32>,
    %377 = arith.truncf %375 : vector<16x128xf32> to vector<16x128xbf16>
    %c0_221 = arith.constant 0 : index
    %c0_222 = arith.constant 0 : index
    %378 = vector.load %arg7[%c0_221, %c0_222] : memref<16x128xbf16, #tpu.memory_space<vmem>>, vector<16x128xbf16>
    tpu.vector_store %arg7[%c0_221, %c0_222], %377 {strides = array<i32>} : memref<16x128xbf16, #tpu.memory_space<vmem>>, vector<16x128xbf16>,
    %c0_223 = arith.constant 0 : index
    %c7_224 = arith.constant 7 : index
    %c0_225 = arith.constant 0 : index
    %379 = vector.load %arg6[%c0_223, %c7_224, %c0_225] : memref<16x8x128xf32, #tpu.memory_space<vmem>>, vector<16x1x128xf32>
    %380 = vector.shape_cast %379 : vector<16x1x128xf32> to vector<16x128xf32>
    %381 = vector.shape_cast %375 : vector<16x128xf32> to vector<16x1x128xf32>
    tpu.vector_store %arg6[%c0_223, %c7_224, %c0_225], %381 {strides = array<i32>} : memref<16x8x128xf32, #tpu.memory_space<vmem>>, vector<16x1x128xf32>,
    return
  }
  func.func @transform_0(%arg0: i32, %arg1: i32) -> (i32, i32, i32) {
    %c0_i32 = arith.constant 0 : i32
    %c0_i32_0 = arith.constant 0 : i32
    return %arg1, %arg0, %c0_i32 : i32, i32, i32
  }
  func.func @transform_1(%arg0: i32, %arg1: i32) -> (i32, i32) {
    %c0_i32 = arith.constant 0 : i32
    %c0_i32_0 = arith.constant 0 : i32
    %c0_i32_1 = arith.constant 0 : i32
    return %c0_i32, %c0_i32_0 : i32, i32
  }
  func.func @transform_2(%arg0: i32, %arg1: i32) -> (i32, i32) {
    %c0_i32 = arith.constant 0 : i32
    %c0_i32_0 = arith.constant 0 : i32
    %c0_i32_1 = arith.constant 0 : i32
    return %c0_i32, %c0_i32_0 : i32, i32
  }
  func.func @transform_3(%arg0: i32, %arg1: i32) -> (i32, i32) {
    %c0_i32 = arith.constant 0 : i32
    %c0_i32_0 = arith.constant 0 : i32
    %c0_i32_1 = arith.constant 0 : i32
    return %c0_i32, %c0_i32_0 : i32, i32
  }
  func.func @transform_4(%arg0: i32, %arg1: i32) -> (i32, i32, i32) {
    %c0_i32 = arith.constant 0 : i32
    %c0_i32_0 = arith.constant 0 : i32
    return %arg0, %arg1, %c0_i32 : i32, i32, i32
  }
}

</mosaic_0001>

<llo_original>
// kernel: noisegenerator_forward.1
$region0: #{noisegenerator_forward.1}
  #allocation0 [shape = 'u32[]', space=smem, size = 0x4, offset = 0x4, fixed_abs, tag = 'smem constant byte address 0x4 - core index']
  #allocation1 [shape = 'u32[144,128]{1,0:T(1,128)}', space=vmem, size = 0x12000, scoped, tag = 'internal scratch']
  #allocation2 [shape = 'bf16[16,128]{1,0:T(16,128)(2,1)}', space=vmem, size = 0x1000, scoped, tag = 'scratch operand']
  #allocation3 [shape = 'f32[16,128]{1,0:T(8,128)}', space=vmem, size = 0x2000, scoped, tag = 'scratch operand']
  %s0 = inlined_call_operand.vmem [shape: bf16[8,16,128], index: 0, kind: input, shape index: {}]
  %s1 = inlined_call_operand.hbm [shape: bf16[128,512], index: 1, kind: input, shape index: {}]
  %s2 = inlined_call_operand.hbm [shape: bf16[128,512], index: 2, kind: input, shape index: {}]
  %s3 = inlined_call_operand.vmem [shape: f32[1,512], index: 3, kind: input, shape index: {}]
  %s4 = inlined_call_operand.vmem [shape: f32[16,8,128], index: 4, kind: output, shape index: {}]
  %s5 = sld [smem:[#allocation0]]
  $region38: #{noisegenerator_forward.1} parent=0
    _
  %s7 = ssub.s32 1, %s5
  %s8 = scalar_select 0, %s7, %s5
  $region1: #{noisegenerator_forward.1} parent=0
    #allocation4 [shape = 'u8[131072]{0}', space=vmem, size = 0x20000, scoped, tag = 'input window, operand 1, single buffered']
    #allocation5 [shape = 's32[1]{0}', space=sflag, size = 0x4, scoped, tag = 'scoped memory for noisegenerator_forward.1']
    #allocation6 [shape = 'u8[131072]{0}', space=vmem, size = 0x20000, scoped, tag = 'input window, operand 2, single buffered']
    #allocation7 [shape = 's32[1]{0}', space=sflag, size = 0x4, scoped, tag = 'scoped memory for noisegenerator_forward.1']
    %9 = vsyncpa [#allocation5], 0
    %10 = vsyncpa [#allocation7], 0
    // Predicated region
    $region2: #{noisegenerator_forward.1} parent=1 // pred_check
      _
    $region3: #{noisegenerator_forward.1} parent=1 // pred_check_branch
      %12 = sbr.rel (0) target = $region5
    $region4: #{noisegenerator_forward.1} parent=1 // pred_region
      _
    $region5: #{noisegenerator_forward.1} parent=1 // pred_fallthru
      _
    // Predicated region
    $region6: #{noisegenerator_forward.1} parent=1 // pred_check
      _
    $region7: #{noisegenerator_forward.1} parent=1 // pred_check_branch
      %14 = sbr.rel (0) target = $region9
    $region8: #{noisegenerator_forward.1} parent=1 // pred_region
      %s16 = ssub.s32 4096, 4096
      %17 = vsyncadd [#allocation5], %s16
      %s18 = sshll.u32 [#allocation4], 4
      %s19 = int_to_ptr.vmem [resolvable:$true] %s18
      %24 = dma.hbm_to_vmem [thread:$0]  %s1, 4096, %s19, [#allocation5], 256, 256, 16
    $region9: #{noisegenerator_forward.1} parent=1 // pred_fallthru
      _
    // Predicated region
    $region10: #{noisegenerator_forward.1} parent=1 // pred_check
      _
    $region11: #{noisegenerator_forward.1} parent=1 // pred_check_branch
      %26 = sbr.rel (0) target = $region13
    $region12: #{noisegenerator_forward.1} parent=1 // pred_region
      %s28 = ssub.s32 4096, 4096
      %29 = vsyncadd [#allocation7], %s28
      %s30 = sshll.u32 [#allocation6], 4
      %s31 = int_to_ptr.vmem [resolvable:$true] %s30
      %36 = dma.hbm_to_vmem [thread:$0]  %s2, 4096, %s31, [#allocation7], 256, 256, 16
    $region13: #{noisegenerator_forward.1} parent=1 // pred_fallthru
      _
    // Predicated region
    $region14: #{noisegenerator_forward.1} parent=1 // pred_check
      _
    $region15: #{noisegenerator_forward.1} parent=1 // pred_check_branch
      %38 = sbr.rel (0) target = $region17
    $region16: #{noisegenerator_forward.1} parent=1 // pred_region
      _
    $region17: #{noisegenerator_forward.1} parent=1 // pred_fallthru
      _
    // Predicated region
    $region18: #{noisegenerator_forward.1} parent=1 // pred_check
      _
    $region19: #{noisegenerator_forward.1} parent=1 // pred_check_branch
      %40 = sbr.rel (0) target = $region21
    $region20: #{noisegenerator_forward.1} parent=1 // pred_region
      %41 = dma.done [#allocation5], 4096
    $region21: #{noisegenerator_forward.1} parent=1 // pred_fallthru
      _
    // Predicated region
    $region22: #{noisegenerator_forward.1} parent=1 // pred_check
      _
    $region23: #{noisegenerator_forward.1} parent=1 // pred_check_branch
      %43 = sbr.rel (0) target = $region25
    $region24: #{noisegenerator_forward.1} parent=1 // pred_region
      %44 = dma.done [#allocation7], 4096
    $region25: #{noisegenerator_forward.1} parent=1 // pred_fallthru
      _
    %p46 = scmp.eq.s32.totalorder 0, 0
    // Predicated region
    $region26: #{noisegenerator_forward.1} parent=1 // pred_check
      %p47 = pneg %p46
    $region27: #{noisegenerator_forward.1} parent=1 // pred_check_branch
      %49 = sbr.rel (%p47) target = $region29
    $region28: #{noisegenerator_forward.1} parent=1 // pred_region
      %50 = vst [vmem:[#allocation2] sm:$0xff] 0
      %51 = vst [vmem:[#allocation3] sm:$0xff] 0.0
      %52 = vst [vmem:[#allocation3 + $0x8] sm:$0xff] 0.0
    $region29: #{noisegenerator_forward.1} parent=1 // pred_fallthru
      _
    %v53 = vld [vmem:[%s3] sm:$0xf]
    %v55 = vlaneseq
    %v56 = vshrl.u32 %v55, 7
    %v57 = vsub.s32 0, %v56
    %v58 = vrot.slane %v53, %v57
    %v59 = vlaneseq
    %v60 = vshrl.u32 %v59, 7
    %v61 = vsub.s32 1, %v60
    %v62 = vrot.slane %v53, %v61
    %v63 = vlaneseq
    %v64 = vshrl.u32 %v63, 7
    %v65 = vsub.s32 2, %v64
    %v66 = vrot.slane %v53, %v65
    %v67 = vlaneseq
    %v68 = vshrl.u32 %v67, 7
    %v69 = vsub.s32 3, %v68
    %v70 = vrot.slane %v53, %v69
    %v75 = vld [vmem:[%s0] sm:$0xf]
    %v76 = vld [vmem:[%s0 + $0x4] sm:$0xf]
    %v77 = vld [vmem:[#allocation4] sm:$0xff]
    %v78 = vld [vmem:[#allocation4 + $0x8] sm:$0xff]
    %v79 = vld [vmem:[#allocation4 + $0x10] sm:$0xff]
    %v80 = vld [vmem:[#allocation4 + $0x18] sm:$0xff]
    %v81 = vld [vmem:[#allocation4 + $0x20] sm:$0xff]
    %v82 = vld [vmem:[#allocation4 + $0x28] sm:$0xff]
    %v83 = vld [vmem:[#allocation4 + $0x30] sm:$0xff]
    %v84 = vld [vmem:[#allocation4 + $0x38] sm:$0xff]
    %v85 = vld [vmem:[#allocation4 + $0x40] sm:$0xff]
    %v86 = vld [vmem:[#allocation4 + $0x48] sm:$0xff]
    %v87 = vld [vmem:[#allocation4 + $0x50] sm:$0xff]
    %v88 = vld [vmem:[#allocation4 + $0x58] sm:$0xff]
    %v89 = vld [vmem:[#allocation4 + $0x60] sm:$0xff]
    %v90 = vld [vmem:[#allocation4 + $0x68] sm:$0xff]
    %v91 = vld [vmem:[#allocation4 + $0x70] sm:$0xff]
    %v92 = vld [vmem:[#allocation4 + $0x78] sm:$0xff]
    %v93 = vld [vmem:[#allocation4 + $0x80] sm:$0xff]
    %v94 = vld [vmem:[#allocation4 + $0x88] sm:$0xff]
    %v95 = vld [vmem:[#allocation4 + $0x90] sm:$0xff]
    %v96 = vld [vmem:[#allocation4 + $0x98] sm:$0xff]
    %v97 = vld [vmem:[#allocation4 + $0xa0] sm:$0xff]
    %v98 = vld [vmem:[#allocation4 + $0xa8] sm:$0xff]
    %v99 = vld [vmem:[#allocation4 + $0xb0] sm:$0xff]
    %v100 = vld [vmem:[#allocation4 + $0xb8] sm:$0xff]
    %v101 = vld [vmem:[#allocation4 + $0xc0] sm:$0xff]
    %v102 = vld [vmem:[#allocation4 + $0xc8] sm:$0xff]
    %v103 = vld [vmem:[#allocation4 + $0xd0] sm:$0xff]
    %v104 = vld [vmem:[#allocation4 + $0xd8] sm:$0xff]
    %v105 = vld [vmem:[#allocation4 + $0xe0] sm:$0xff]
    %v106 = vld [vmem:[#allocation4 + $0xe8] sm:$0xff]
    %v107 = vld [vmem:[#allocation4 + $0xf0] sm:$0xff]
    %v108 = vld [vmem:[#allocation4 + $0xf8] sm:$0xff]
    %v109 = vld [vmem:[#allocation2] sm:$0xff]
    %v110 = vld [vmem:[#allocation6] sm:$0xff]
    %v111 = vld [vmem:[#allocation6 + $0x8] sm:$0xff]
    %v112 = vld [vmem:[#allocation6 + $0x10] sm:$0xff]
    %v113 = vld [vmem:[#allocation6 + $0x18] sm:$0xff]
    %v114 = vld [vmem:[#allocation6 + $0x20] sm:$0xff]
    %v115 = vld [vmem:[#allocation6 + $0x28] sm:$0xff]
    %v116 = vld [vmem:[#allocation6 + $0x30] sm:$0xff]
    %v117 = vld [vmem:[#allocation6 + $0x38] sm:$0xff]
    %v118 = vld [vmem:[#allocation6 + $0x40] sm:$0xff]
    %v119 = vld [vmem:[#allocation6 + $0x48] sm:$0xff]
    %v120 = vld [vmem:[#allocation6 + $0x50] sm:$0xff]
    %v121 = vld [vmem:[#allocation6 + $0x58] sm:$0xff]
    %v122 = vld [vmem:[#allocation6 + $0x60] sm:$0xff]
    %v123 = vld [vmem:[#allocation6 + $0x68] sm:$0xff]
    %v124 = vld [vmem:[#allocation6 + $0x70] sm:$0xff]
    %v125 = vld [vmem:[#allocation6 + $0x78] sm:$0xff]
    %v126 = vld [vmem:[#allocation6 + $0x80] sm:$0xff]
    %v127 = vld [vmem:[#allocation6 + $0x88] sm:$0xff]
    %v128 = vld [vmem:[#allocation6 + $0x90] sm:$0xff]
    %v129 = vld [vmem:[#allocation6 + $0x98] sm:$0xff]
    %v130 = vld [vmem:[#allocation6 + $0xa0] sm:$0xff]
    %v131 = vld [vmem:[#allocation6 + $0xa8] sm:$0xff]
    %v132 = vld [vmem:[#allocation6 + $0xb0] sm:$0xff]
    %v133 = vld [vmem:[#allocation6 + $0xb8] sm:$0xff]
    %v134 = vld [vmem:[#allocation6 + $0xc0] sm:$0xff]
    %v135 = vld [vmem:[#allocation6 + $0xc8] sm:$0xff]
    %v136 = vld [vmem:[#allocation6 + $0xd0] sm:$0xff]
    %v137 = vld [vmem:[#allocation6 + $0xd8] sm:$0xff]
    %v138 = vld [vmem:[#allocation6 + $0xe0] sm:$0xff]
    %v139 = vld [vmem:[#allocation6 + $0xe8] sm:$0xff]
    %v140 = vld [vmem:[#allocation6 + $0xf0] sm:$0xff]
    %v141 = vld [vmem:[#allocation6 + $0xf8] sm:$0xff]
    %v174 = vunpack.c.l.b16 %v110
    %v175 = vunpack.c.h.b16 %v110
    %v176 = vunpack.c.l.b16 %v111
    %v177 = vunpack.c.h.b16 %v111
    %v178 = vunpack.c.l.b16 %v112
    %v179 = vunpack.c.h.b16 %v112
    %v180 = vunpack.c.l.b16 %v113
    %v181 = vunpack.c.h.b16 %v113
    %v182 = vunpack.c.l.b16 %v114
    %v183 = vunpack.c.h.b16 %v114
    %v184 = vunpack.c.l.b16 %v115
    %v185 = vunpack.c.h.b16 %v115
    %v186 = vunpack.c.l.b16 %v116
    %v187 = vunpack.c.h.b16 %v116
    %v188 = vunpack.c.l.b16 %v117
    %v189 = vunpack.c.h.b16 %v117
    %v190 = vunpack.c.l.b16 %v118
    %v191 = vunpack.c.h.b16 %v118
    %v192 = vunpack.c.l.b16 %v119
    %v193 = vunpack.c.h.b16 %v119
    %v194 = vunpack.c.l.b16 %v120
    %v195 = vunpack.c.h.b16 %v120
    %v196 = vunpack.c.l.b16 %v121
    %v197 = vunpack.c.h.b16 %v121
    %v198 = vunpack.c.l.b16 %v122
    %v199 = vunpack.c.h.b16 %v122
    %v200 = vunpack.c.l.b16 %v123
    %v201 = vunpack.c.h.b16 %v123
    %v202 = vunpack.c.l.b16 %v124
    %v203 = vunpack.c.h.b16 %v124
    %v204 = vunpack.c.l.b16 %v125
    %v205 = vunpack.c.h.b16 %v125
    %v206 = vunpack.c.l.b16 %v126
    %v207 = vunpack.c.h.b16 %v126
    %v208 = vunpack.c.l.b16 %v127
    %v209 = vunpack.c.h.b16 %v127
    %v210 = vunpack.c.l.b16 %v128
    %v211 = vunpack.c.h.b16 %v128
    %v212 = vunpack.c.l.b16 %v129
    %v213 = vunpack.c.h.b16 %v129
    %v214 = vunpack.c.l.b16 %v130
    %v215 = vunpack.c.h.b16 %v130
    %v216 = vunpack.c.l.b16 %v131
    %v217 = vunpack.c.h.b16 %v131
    %v218 = vunpack.c.l.b16 %v132
    %v219 = vunpack.c.h.b16 %v132
    %v220 = vunpack.c.l.b16 %v133
    %v221 = vunpack.c.h.b16 %v133
    %v222 = vunpack.c.l.b16 %v134
    %v223 = vunpack.c.h.b16 %v134
    %v224 = vunpack.c.l.b16 %v135
    %v225 = vunpack.c.h.b16 %v135
    %v226 = vunpack.c.l.b16 %v136
    %v227 = vunpack.c.h.b16 %v136
    %v228 = vunpack.c.l.b16 %v137
    %v229 = vunpack.c.h.b16 %v137
    %v230 = vunpack.c.l.b16 %v138
    %v231 = vunpack.c.h.b16 %v138
    %v232 = vunpack.c.l.b16 %v139
    %v233 = vunpack.c.h.b16 %v139
    %v234 = vunpack.c.l.b16 %v140
    %v235 = vunpack.c.h.b16 %v140
    %v236 = vunpack.c.l.b16 %v141
    %v237 = vunpack.c.h.b16 %v141
    %v238 = vpack.c.b16 %v178, %v174
    %v239 = vpack.c.b16 %v179, %v175
    %v240 = vpack.c.b16 %v180, %v176
    %v241 = vpack.c.b16 %v181, %v177
    %v242 = vpack.c.b16 %v186, %v182
    %v243 = vpack.c.b16 %v187, %v183
    %v244 = vpack.c.b16 %v188, %v184
    %v245 = vpack.c.b16 %v189, %v185
    %v246 = vpack.c.b16 %v194, %v190
    %v247 = vpack.c.b16 %v195, %v191
    %v248 = vpack.c.b16 %v196, %v192
    %v249 = vpack.c.b16 %v197, %v193
    %v250 = vpack.c.b16 %v202, %v198
    %v251 = vpack.c.b16 %v203, %v199
    %v252 = vpack.c.b16 %v204, %v200
    %v253 = vpack.c.b16 %v205, %v201
    %v254 = vpack.c.b16 %v210, %v206
    %v255 = vpack.c.b16 %v211, %v207
    %v256 = vpack.c.b16 %v212, %v208
    %v257 = vpack.c.b16 %v213, %v209
    %v258 = vpack.c.b16 %v218, %v214
    %v259 = vpack.c.b16 %v219, %v215
    %v260 = vpack.c.b16 %v220, %v216
    %v261 = vpack.c.b16 %v221, %v217
    %v262 = vpack.c.b16 %v226, %v222
    %v263 = vpack.c.b16 %v227, %v223
    %v264 = vpack.c.b16 %v228, %v224
    %v265 = vpack.c.b16 %v229, %v225
    %v266 = vpack.c.b16 %v234, %v230
    %v267 = vpack.c.b16 %v235, %v231
    %v268 = vpack.c.b16 %v236, %v232
    %v269 = vpack.c.b16 %v237, %v233
    %302 = vmatprep.subr.bf16.mxu0 %v239
    %303 = vmatpush1.bf16.msra.mxu0 %v238
    %304 = vmatprep.subr.bf16.mxu0 %v243
    %305 = vmatpush1.bf16.msra.mxu0 %v242
    %306 = vmatprep.subr.bf16.mxu0 %v247
    %307 = vmatpush1.bf16.msra.mxu0 %v246
    %308 = vmatprep.subr.bf16.mxu0 %v251
    %309 = vmatpush1.bf16.msra.mxu0 %v250
    %310 = vmatprep.subr.bf16.mxu0 %v255
    %311 = vmatpush1.bf16.msra.mxu0 %v254
    %312 = vmatprep.subr.bf16.mxu0 %v259
    %313 = vmatpush1.bf16.msra.mxu0 %v258
    %314 = vmatprep.subr.bf16.mxu0 %v263
    %315 = vmatpush1.bf16.msra.mxu0 %v262
    %316 = vmatprep.subr.bf16.mxu0 %v267
    %317 = vmatpush1.bf16.msra.mxu0 %v266
    %318 = vmatprep.subr.bf16.mxu0 0
    %319 = vmatpush1.bf16.msra.mxu0 0
    %320 = vmatprep.subr.bf16.mxu0 0
    %321 = vmatpush1.bf16.msra.mxu0 0
    %322 = vmatprep.subr.bf16.mxu0 0
    %323 = vmatpush1.bf16.msra.mxu0 0
    %324 = vmatprep.subr.bf16.mxu0 0
    %325 = vmatpush1.bf16.msra.mxu0 0
    %326 = vmatprep.subr.bf16.mxu0 0
    %327 = vmatpush1.bf16.msra.mxu0 0
    %328 = vmatprep.subr.bf16.mxu0 0
    %329 = vmatpush1.bf16.msra.mxu0 0
    %330 = vmatprep.subr.bf16.mxu0 0
    %331 = vmatpush1.bf16.msra.mxu0 0
    %332 = vmatprep.subr.bf16.mxu0 0
    %333 = vmatpush1.bf16.msra.mxu0 0
    %334 = vmatprep.mubr.bf16.mxu0 0
    %335 = vmatmul.mubr.bf16.gmra.mrb[0].mxu0 %v109
    %v336 = vpop.f32.mrb[0].mxu0
    %v337 = vadd.f32 0.0, %v336
    %v338 = vpop.f32.mrb[0].mxu0
    %v339 = vadd.f32 0.0, %v338
    %v340 = vpop.f32.mrb[0].mxu0
    %v341 = vadd.f32 0.0, %v340
    %v342 = vpop.f32.mrb[0].mxu0
    %v343 = vadd.f32 0.0, %v342
    %344 = vdwg.mxu0
    %345 = vmatprep.subr.bf16.mxu0 %v241
    %346 = vmatpush1.bf16.msra.mxu0 %v240
    %347 = vmatprep.subr.bf16.mxu0 %v245
    %348 = vmatpush1.bf16.msra.mxu0 %v244
    %349 = vmatprep.subr.bf16.mxu0 %v249
    %350 = vmatpush1.bf16.msra.mxu0 %v248
    %351 = vmatprep.subr.bf16.mxu0 %v253
    %352 = vmatpush1.bf16.msra.mxu0 %v252
    %353 = vmatprep.subr.bf16.mxu0 %v257
    %354 = vmatpush1.bf16.msra.mxu0 %v256
    %355 = vmatprep.subr.bf16.mxu0 %v261
    %356 = vmatpush1.bf16.msra.mxu0 %v260
    %357 = vmatprep.subr.bf16.mxu0 %v265
    %358 = vmatpush1.bf16.msra.mxu0 %v264
    %359 = vmatprep.subr.bf16.mxu0 %v269
    %360 = vmatpush1.bf16.msra.mxu0 %v268
    %361 = vmatprep.subr.bf16.mxu0 0
    %362 = vmatpush1.bf16.msra.mxu0 0
    %363 = vmatprep.subr.bf16.mxu0 0
    %364 = vmatpush1.bf16.msra.mxu0 0
    %365 = vmatprep.subr.bf16.mxu0 0
    %366 = vmatpush1.bf16.msra.mxu0 0
    %367 = vmatprep.subr.bf16.mxu0 0
    %368 = vmatpush1.bf16.msra.mxu0 0
    %369 = vmatprep.subr.bf16.mxu0 0
    %370 = vmatpush1.bf16.msra.mxu0 0
    %371 = vmatprep.subr.bf16.mxu0 0
    %372 = vmatpush1.bf16.msra.mxu0 0
    %373 = vmatprep.subr.bf16.mxu0 0
    %374 = vmatpush1.bf16.msra.mxu0 0
    %375 = vmatprep.subr.bf16.mxu0 0
    %376 = vmatpush1.bf16.msra.mxu0 0
    %377 = vmatprep.mubr.bf16.mxu0 0
    %378 = vmatmul.mubr.bf16.gmra.mrb[0].mxu0 %v109
    %v379 = vpop.f32.mrb[0].mxu0
    %v380 = vadd.f32 0.0, %v379
    %v381 = vpop.f32.mrb[0].mxu0
    %v382 = vadd.f32 0.0, %v381
    %v383 = vpop.f32.mrb[0].mxu0
    %v384 = vadd.f32 0.0, %v383
    %v385 = vpop.f32.mrb[0].mxu0
    %v386 = vadd.f32 0.0, %v385
    %387 = vdwg.mxu0
    %v390 = vunpack.c.l.b16 %v75
    %v391 = vunpack.c.l.b16 %v76
    %v392 = vpack.c.b16 %v391, %v390
    %v426 = vunpack.c.l.b16 %v77
    %v427 = vunpack.c.h.b16 %v77
    %v428 = vunpack.c.l.b16 %v78
    %v429 = vunpack.c.h.b16 %v78
    %v430 = vunpack.c.l.b16 %v79
    %v431 = vunpack.c.h.b16 %v79
    %v432 = vunpack.c.l.b16 %v80
    %v433 = vunpack.c.h.b16 %v80
    %v434 = vunpack.c.l.b16 %v81
    %v435 = vunpack.c.h.b16 %v81
    %v436 = vunpack.c.l.b16 %v82
    %v437 = vunpack.c.h.b16 %v82
    %v438 = vunpack.c.l.b16 %v83
    %v439 = vunpack.c.h.b16 %v83
    %v440 = vunpack.c.l.b16 %v84
    %v441 = vunpack.c.h.b16 %v84
    %v442 = vunpack.c.l.b16 %v85
    %v443 = vunpack.c.h.b16 %v85
    %v444 = vunpack.c.l.b16 %v86
    %v445 = vunpack.c.h.b16 %v86
    %v446 = vunpack.c.l.b16 %v87
    %v447 = vunpack.c.h.b16 %v87
    %v448 = vunpack.c.l.b16 %v88
    %v449 = vunpack.c.h.b16 %v88
    %v450 = vunpack.c.l.b16 %v89
    %v451 = vunpack.c.h.b16 %v89
    %v452 = vunpack.c.l.b16 %v90
    %v453 = vunpack.c.h.b16 %v90
    %v454 = vunpack.c.l.b16 %v91
    %v455 = vunpack.c.h.b16 %v91
    %v456 = vunpack.c.l.b16 %v92
    %v457 = vunpack.c.h.b16 %v92
    %v458 = vunpack.c.l.b16 %v93
    %v459 = vunpack.c.h.b16 %v93
    %v460 = vunpack.c.l.b16 %v94
    %v461 = vunpack.c.h.b16 %v94
    %v462 = vunpack.c.l.b16 %v95
    %v463 = vunpack.c.h.b16 %v95
    %v464 = vunpack.c.l.b16 %v96
    %v465 = vunpack.c.h.b16 %v96
    %v466 = vunpack.c.l.b16 %v97
    %v467 = vunpack.c.h.b16 %v97
    %v468 = vunpack.c.l.b16 %v98
    %v469 = vunpack.c.h.b16 %v98
    %v470 = vunpack.c.l.b16 %v99
    %v471 = vunpack.c.h.b16 %v99
    %v472 = vunpack.c.l.b16 %v100
    %v473 = vunpack.c.h.b16 %v100
    %v474 = vunpack.c.l.b16 %v101
    %v475 = vunpack.c.h.b16 %v101
    %v476 = vunpack.c.l.b16 %v102
    %v477 = vunpack.c.h.b16 %v102
    %v478 = vunpack.c.l.b16 %v103
    %v479 = vunpack.c.h.b16 %v103
    %v480 = vunpack.c.l.b16 %v104
    %v481 = vunpack.c.h.b16 %v104
    %v482 = vunpack.c.l.b16 %v105
    %v483 = vunpack.c.h.b16 %v105
    %v484 = vunpack.c.l.b16 %v106
    %v485 = vunpack.c.h.b16 %v106
    %v486 = vunpack.c.l.b16 %v107
    %v487 = vunpack.c.h.b16 %v107
    %v488 = vunpack.c.l.b16 %v108
    %v489 = vunpack.c.h.b16 %v108
    %v490 = vpack.c.b16 %v430, %v426
    %v491 = vpack.c.b16 %v431, %v427
    %v492 = vpack.c.b16 %v432, %v428
    %v493 = vpack.c.b16 %v433, %v429
    %v494 = vpack.c.b16 %v438, %v434
    %v495 = vpack.c.b16 %v439, %v435
    %v496 = vpack.c.b16 %v440, %v436
    %v497 = vpack.c.b16 %v441, %v437
    %v498 = vpack.c.b16 %v446, %v442
    %v499 = vpack.c.b16 %v447, %v443
    %v500 = vpack.c.b16 %v448, %v444
    %v501 = vpack.c.b16 %v449, %v445
    %v502 = vpack.c.b16 %v454, %v450
    %v503 = vpack.c.b16 %v455, %v451
    %v504 = vpack.c.b16 %v456, %v452
    %v505 = vpack.c.b16 %v457, %v453
    %v506 = vpack.c.b16 %v462, %v458
    %v507 = vpack.c.b16 %v463, %v459
    %v508 = vpack.c.b16 %v464, %v460
    %v509 = vpack.c.b16 %v465, %v461
    %v510 = vpack.c.b16 %v470, %v466
    %v511 = vpack.c.b16 %v471, %v467
    %v512 = vpack.c.b16 %v472, %v468
    %v513 = vpack.c.b16 %v473, %v469
    %v514 = vpack.c.b16 %v478, %v474
    %v515 = vpack.c.b16 %v479, %v475
    %v516 = vpack.c.b16 %v480, %v476
    %v517 = vpack.c.b16 %v481, %v477
    %v518 = vpack.c.b16 %v486, %v482
    %v519 = vpack.c.b16 %v487, %v483
    %v520 = vpack.c.b16 %v488, %v484
    %v521 = vpack.c.b16 %v489, %v485
    %554 = vmatprep.subr.bf16.mxu0 %v491
    %555 = vmatpush1.bf16.msra.mxu0 %v490
    %556 = vmatprep.subr.bf16.mxu0 %v495
    %557 = vmatpush1.bf16.msra.mxu0 %v494
    %558 = vmatprep.subr.bf16.mxu0 %v499
    %559 = vmatpush1.bf16.msra.mxu0 %v498
    %560 = vmatprep.subr.bf16.mxu0 %v503
    %561 = vmatpush1.bf16.msra.mxu0 %v502
    %562 = vmatprep.subr.bf16.mxu0 %v507
    %563 = vmatpush1.bf16.msra.mxu0 %v506
    %564 = vmatprep.subr.bf16.mxu0 %v511
    %565 = vmatpush1.bf16.msra.mxu0 %v510
    %566 = vmatprep.subr.bf16.mxu0 %v515
    %567 = vmatpush1.bf16.msra.mxu0 %v514
    %568 = vmatprep.subr.bf16.mxu0 %v519
    %569 = vmatpush1.bf16.msra.mxu0 %v518
    %570 = vmatprep.subr.bf16.mxu0 0
    %571 = vmatpush1.bf16.msra.mxu0 0
    %572 = vmatprep.subr.bf16.mxu0 0
    %573 = vmatpush1.bf16.msra.mxu0 0
    %574 = vmatprep.subr.bf16.mxu0 0
    %575 = vmatpush1.bf16.msra.mxu0 0
    %576 = vmatprep.subr.bf16.mxu0 0
    %577 = vmatpush1.bf16.msra.mxu0 0
    %578 = vmatprep.subr.bf16.mxu0 0
    %579 = vmatpush1.bf16.msra.mxu0 0
    %580 = vmatprep.subr.bf16.mxu0 0
    %581 = vmatpush1.bf16.msra.mxu0 0
    %582 = vmatprep.subr.bf16.mxu0 0
    %583 = vmatpush1.bf16.msra.mxu0 0
    %584 = vmatprep.subr.bf16.mxu0 0
    %585 = vmatpush1.bf16.msra.mxu0 0
    %586 = vmatprep.mubr.bf16.mxu0 0
    %587 = vmatmul.mubr.bf16.gmra.mrb[0].mxu0 %v392
    %v588 = vpop.f32.mrb[0].mxu0
    %v589 = vadd.f32 %v337, %v588
    %v590 = vpop.f32.mrb[0].mxu0
    %v591 = vadd.f32 %v339, %v590
    %v592 = vpop.f32.mrb[0].mxu0
    %v593 = vadd.f32 %v341, %v592
    %v594 = vpop.f32.mrb[0].mxu0
    %v595 = vadd.f32 %v343, %v594
    %596 = vdwg.mxu0
    %597 = vmatprep.subr.bf16.mxu0 %v493
    %598 = vmatpush1.bf16.msra.mxu0 %v492
    %599 = vmatprep.subr.bf16.mxu0 %v497
    %600 = vmatpush1.bf16.msra.mxu0 %v496
    %601 = vmatprep.subr.bf16.mxu0 %v501
    %602 = vmatpush1.bf16.msra.mxu0 %v500
    %603 = vmatprep.subr.bf16.mxu0 %v505
    %604 = vmatpush1.bf16.msra.mxu0 %v504
    %605 = vmatprep.subr.bf16.mxu0 %v509
    %606 = vmatpush1.bf16.msra.mxu0 %v508
    %607 = vmatprep.subr.bf16.mxu0 %v513
    %608 = vmatpush1.bf16.msra.mxu0 %v512
    %609 = vmatprep.subr.bf16.mxu0 %v517
    %610 = vmatpush1.bf16.msra.mxu0 %v516
    %611 = vmatprep.subr.bf16.mxu0 %v521
    %612 = vmatpush1.bf16.msra.mxu0 %v520
    %613 = vmatprep.subr.bf16.mxu0 0
    %614 = vmatpush1.bf16.msra.mxu0 0
    %615 = vmatprep.subr.bf16.mxu0 0
    %616 = vmatpush1.bf16.msra.mxu0 0
    %617 = vmatprep.subr.bf16.mxu0 0
    %618 = vmatpush1.bf16.msra.mxu0 0
    %619 = vmatprep.subr.bf16.mxu0 0
    %620 = vmatpush1.bf16.msra.mxu0 0
    %621 = vmatprep.subr.bf16.mxu0 0
    %622 = vmatpush1.bf16.msra.mxu0 0
    %623 = vmatprep.subr.bf16.mxu0 0
    %624 = vmatpush1.bf16.msra.mxu0 0
    %625 = vmatprep.subr.bf16.mxu0 0
    %626 = vmatpush1.bf16.msra.mxu0 0
    %627 = vmatprep.subr.bf16.mxu0 0
    %628 = vmatpush1.bf16.msra.mxu0 0
    %629 = vmatprep.mubr.bf16.mxu0 0
    %630 = vmatmul.mubr.bf16.gmra.mrb[0].mxu0 %v392
    %v631 = vpop.f32.mrb[0].mxu0
    %v632 = vadd.f32 %v380, %v631
    %v633 = vpop.f32.mrb[0].mxu0
    %v634 = vadd.f32 %v382, %v633
    %v635 = vpop.f32.mrb[0].mxu0
    %v636 = vadd.f32 %v384, %v635
    %v637 = vpop.f32.mrb[0].mxu0
    %v638 = vadd.f32 %v386, %v637
    %639 = vdwg.mxu0
    %v640 = vadd.f32 %v589, %v58
    %v641 = vadd.f32 %v591, %v62
    %v642 = vadd.f32 %v632, %v66
    %v643 = vadd.f32 %v634, %v70
    %v644 = vadd.f32 %v593, %v58
    %v645 = vadd.f32 %v595, %v62
    %v646 = vadd.f32 %v636, %v66
    %v647 = vadd.f32 %v638, %v70
    %v648 = vmul.f32 %v640, 0.5
    %v649 = vmul.f32 %v644, 0.5
    %v650 = vtanh.pop %v648
    %v651 = vtanh.pop %v649
    %v652 = vadd.f32 %v650, 1.0
    %v653 = vadd.f32 %v651, 1.0
    %v654 = vmul.f32 %v652, 0.5
    %v655 = vmul.f32 %v653, 0.5
    %v656 = vmul.f32 %v641, 0.5
    %v657 = vmul.f32 %v645, 0.5
    %v658 = vtanh.pop %v656
    %v659 = vtanh.pop %v657
    %v660 = vadd.f32 %v658, 1.0
    %v661 = vadd.f32 %v659, 1.0
    %v662 = vmul.f32 %v660, 0.5
    %v663 = vmul.f32 %v661, 0.5
    %v664 = vtanh.pop %v642
    %v665 = vtanh.pop %v646
    %v666 = vmul.f32 %v643, 0.5
    %v667 = vmul.f32 %v647, 0.5
    %v668 = vtanh.pop %v666
    %v669 = vtanh.pop %v667
    %v670 = vadd.f32 %v668, 1.0
    %v671 = vadd.f32 %v669, 1.0
    %v672 = vmul.f32 %v670, 0.5
    %v673 = vmul.f32 %v671, 0.5
    %v674 = vld [vmem:[#allocation3] sm:$0xff]
    %v675 = vld [vmem:[#allocation3 + $0x8] sm:$0xff]
    %v676 = vmul.f32 %v662, %v674
    %v677 = vmul.f32 %v663, %v675
    %v678 = vmul.f32 %v654, %v664
    %v679 = vmul.f32 %v655, %v665
    %v680 = vadd.f32 %v676, %v678
    %v681 = vadd.f32 %v677, %v679
    %v682 = vtanh.pop %v680
    %v683 = vtanh.pop %v681
    %v684 = vmul.f32 %v672, %v682
    %v685 = vmul.f32 %v673, %v683
    %686 = vst [vmem:[#allocation3] sm:$0xff] %v680
    %687 = vst [vmem:[#allocation3 + $0x8] sm:$0xff] %v681
    %v688 = vpack.c.bf16 %v685, %v684
    %689 = vst [vmem:[#allocation2] sm:$0xff] %v688
    %v692 = vcombine.high %v684, %v684
    %v694 = vunpack.c.l.s4 1966171168
    %v695 = vunpack.c.0.s8 %v694
    %v696 = vlaneseq
    %v697 = vshrl.u32 %v696, 7
    %v698 = vsub.s32 %v695, %v697
    %v699 = vrot.slane %v684, %v698
    %v701 = vunpack.c.l.s4 1966171168
    %v702 = vunpack.c.0.s8 %v701
    %v703 = vlaneseq
    %v704 = vshrl.u32 %v703, 7
    %v705 = vsub.s32 %v702, %v704
    %v706 = vrot.slane %v692, %v705
    %v707 = vcombine.high %v699, %v699
    %v708 = vcombine.high %v706, %v706
    %v710 = vunpack.c.l.s4 1966171168
    %v711 = vunpack.c.0.s8 %v710
    %v712 = vlaneseq
    %v713 = vshrl.u32 %v712, 7
    %v714 = vsub.s32 %v711, %v713
    %v715 = vrot.slane %v699, %v714
    %v717 = vunpack.c.l.s4 1966171168
    %v718 = vunpack.c.0.s8 %v717
    %v719 = vlaneseq
    %v720 = vshrl.u32 %v719, 7
    %v721 = vsub.s32 %v718, %v720
    %v722 = vrot.slane %v706, %v721
    %v724 = vunpack.c.l.s4 1966171168
    %v725 = vunpack.c.0.s8 %v724
    %v726 = vlaneseq
    %v727 = vshrl.u32 %v726, 7
    %v728 = vsub.s32 %v725, %v727
    %v729 = vrot.slane %v707, %v728
    %v731 = vunpack.c.l.s4 1966171168
    %v732 = vunpack.c.0.s8 %v731
    %v733 = vlaneseq
    %v734 = vshrl.u32 %v733, 7
    %v735 = vsub.s32 %v732, %v734
    %v736 = vrot.slane %v708, %v735
    %v737 = vcombine.high %v715, %v715
    %v738 = vcombine.high %v722, %v722
    %v739 = vcombine.high %v729, %v729
    %v740 = vcombine.high %v736, %v736
    %v741 = vcombine.high %v685, %v685
    %v743 = vunpack.c.l.s4 1966171168
    %v744 = vunpack.c.0.s8 %v743
    %v745 = vlaneseq
    %v746 = vshrl.u32 %v745, 7
    %v747 = vsub.s32 %v744, %v746
    %v748 = vrot.slane %v685, %v747
    %v750 = vunpack.c.l.s4 1966171168
    %v751 = vunpack.c.0.s8 %v750
    %v752 = vlaneseq
    %v753 = vshrl.u32 %v752, 7
    %v754 = vsub.s32 %v751, %v753
    %v755 = vrot.slane %v741, %v754
    %v756 = vcombine.high %v748, %v748
    %v757 = vcombine.high %v755, %v755
    %v759 = vunpack.c.l.s4 1966171168
    %v760 = vunpack.c.0.s8 %v759
    %v761 = vlaneseq
    %v762 = vshrl.u32 %v761, 7
    %v763 = vsub.s32 %v760, %v762
    %v764 = vrot.slane %v748, %v763
    %v766 = vunpack.c.l.s4 1966171168
    %v767 = vunpack.c.0.s8 %v766
    %v768 = vlaneseq
    %v769 = vshrl.u32 %v768, 7
    %v770 = vsub.s32 %v767, %v769
    %v771 = vrot.slane %v755, %v770
    %v773 = vunpack.c.l.s4 1966171168
    %v774 = vunpack.c.0.s8 %v773
    %v775 = vlaneseq
    %v776 = vshrl.u32 %v775, 7
    %v777 = vsub.s32 %v774, %v776
    %v778 = vrot.slane %v756, %v777
    %v780 = vunpack.c.l.s4 1966171168
    %v781 = vunpack.c.0.s8 %v780
    %v782 = vlaneseq
    %v783 = vshrl.u32 %v782, 7
    %v784 = vsub.s32 %v781, %v783
    %v785 = vrot.slane %v757, %v784
    %v786 = vcombine.high %v764, %v764
    %v787 = vcombine.high %v771, %v771
    %v788 = vcombine.high %v778, %v778
    %v789 = vcombine.high %v785, %v785
    %806 = vst [vmem:[%s4] sm:$0x1] %v715
    %807 = vst [vmem:[%s4 + $0x8] sm:$0x1] %v729
    %808 = vst [vmem:[%s4 + $0x10] sm:$0x1] %v737
    %809 = vst [vmem:[%s4 + $0x18] sm:$0x1] %v739
    %810 = vst [vmem:[%s4 + $0x20] sm:$0x1] %v722
    %811 = vst [vmem:[%s4 + $0x28] sm:$0x1] %v736
    %812 = vst [vmem:[%s4 + $0x30] sm:$0x1] %v738
    %813 = vst [vmem:[%s4 + $0x38] sm:$0x1] %v740
    %814 = vst [vmem:[%s4 + $0x40] sm:$0x1] %v764
    %815 = vst [vmem:[%s4 + $0x48] sm:$0x1] %v778
    %816 = vst [vmem:[%s4 + $0x50] sm:$0x1] %v786
    %817 = vst [vmem:[%s4 + $0x58] sm:$0x1] %v788
    %818 = vst [vmem:[%s4 + $0x60] sm:$0x1] %v771
    %819 = vst [vmem:[%s4 + $0x68] sm:$0x1] %v785
    %820 = vst [vmem:[%s4 + $0x70] sm:$0x1] %v787
    %821 = vst [vmem:[%s4 + $0x78] sm:$0x1] %v789
    %s822 = scalar_lea.vmem %s0, 8
    %v823 = vld [vmem:[%s822] sm:$0xf]
    %v824 = vld [vmem:[%s822 + $0x4] sm:$0xf]
    %v825 = vld [vmem:[#allocation4] sm:$0xff]
    %v826 = vld [vmem:[#allocation4 + $0x8] sm:$0xff]
    %v827 = vld [vmem:[#allocation4 + $0x10] sm:$0xff]
    %v828 = vld [vmem:[#allocation4 + $0x18] sm:$0xff]
    %v829 = vld [vmem:[#allocation4 + $0x20] sm:$0xff]
    %v830 = vld [vmem:[#allocation4 + $0x28] sm:$0xff]
    %v831 = vld [vmem:[#allocation4 + $0x30] sm:$0xff]
    %v832 = vld [vmem:[#allocation4 + $0x38] sm:$0xff]
    %v833 = vld [vmem:[#allocation4 + $0x40] sm:$0xff]
    %v834 = vld [vmem:[#allocation4 + $0x48] sm:$0xff]
    %v835 = vld [vmem:[#allocation4 + $0x50] sm:$0xff]
    %v836 = vld [vmem:[#allocation4 + $0x58] sm:$0xff]
    %v837 = vld [vmem:[#allocation4 + $0x60] sm:$0xff]
    %v838 = vld [vmem:[#allocation4 + $0x68] sm:$0xff]
    %v839 = vld [vmem:[#allocation4 + $0x70] sm:$0xff]
    %v840 = vld [vmem:[#allocation4 + $0x78] sm:$0xff]
    %v841 = vld [vmem:[#allocation4 + $0x80] sm:$0xff]
    %v842 = vld [vmem:[#allocation4 + $0x88] sm:$0xff]
    %v843 = vld [vmem:[#allocation4 + $0x90] sm:$0xff]
    %v844 = vld [vmem:[#allocation4 + $0x98] sm:$0xff]
    %v845 = vld [vmem:[#allocation4 + $0xa0] sm:$0xff]
    %v846 = vld [vmem:[#allocation4 + $0xa8] sm:$0xff]
    %v847 = vld [vmem:[#allocation4 + $0xb0] sm:$0xff]
    %v848 = vld [vmem:[#allocation4 + $0xb8] sm:$0xff]
    %v849 = vld [vmem:[#allocation4 + $0xc0] sm:$0xff]
    %v850 = vld [vmem:[#allocation4 + $0xc8] sm:$0xff]
    %v851 = vld [vmem:[#allocation4 + $0xd0] sm:$0xff]
    %v852 = vld [vmem:[#allocation4 + $0xd8] sm:$0xff]
    %v853 = vld [vmem:[#allocation4 + $0xe0] sm:$0xff]
    %v854 = vld [vmem:[#allocation4 + $0xe8] sm:$0xff]
    %v855 = vld [vmem:[#allocation4 + $0xf0] sm:$0xff]
    %v856 = vld [vmem:[#allocation4 + $0xf8] sm:$0xff]
    %v857 = vld [vmem:[#allocation2] sm:$0xff]
    %v858 = vld [vmem:[#allocation6] sm:$0xff]
    %v859 = vld [vmem:[#allocation6 + $0x8] sm:$0xff]
    %v860 = vld [vmem:[#allocation6 + $0x10] sm:$0xff]
    %v861 = vld [vmem:[#allocation6 + $0x18] sm:$0xff]
    %v862 = vld [vmem:[#allocation6 + $0x20] sm:$0xff]
    %v863 = vld [vmem:[#allocation6 + $0x28] sm:$0xff]
    %v864 = vld [vmem:[#allocation6 + $0x30] sm:$0xff]
    %v865 = vld [vmem:[#allocation6 + $0x38] sm:$0xff]
    %v866 = vld [vmem:[#allocation6 + $0x40] sm:$0xff]
    %v867 = vld [vmem:[#allocation6 + $0x48] sm:$0xff]
    %v868 = vld [vmem:[#allocation6 + $0x50] sm:$0xff]
    %v869 = vld [vmem:[#allocation6 + $0x58] sm:$0xff]
    %v870 = vld [vmem:[#allocation6 + $0x60] sm:$0xff]
    %v871 = vld [vmem:[#allocation6 + $0x68] sm:$0xff]
    %v872 = vld [vmem:[#allocation6 + $0x70] sm:$0xff]
    %v873 = vld [vmem:[#allocation6 + $0x78] sm:$0xff]
    %v874 = vld [vmem:[#allocation6 + $0x80] sm:$0xff]
    %v875 = vld [vmem:[#allocation6 + $0x88] sm:$0xff]
    %v876 = vld [vmem:[#allocation6 + $0x90] sm:$0xff]
    %v877 = vld [vmem:[#allocation6 + $0x98] sm:$0xff]
    %v878 = vld [vmem:[#allocation6 + $0xa0] sm:$0xff]
    %v879 = vld [vmem:[#allocation6 + $0xa8] sm:$0xff]
    %v880 = vld [vmem:[#allocation6 + $0xb0] sm:$0xff]
    %v881 = vld [vmem:[#allocation6 + $0xb8] sm:$0xff]
    %v882 = vld [vmem:[#allocation6 + $0xc0] sm:$0xff]
    %v883 = vld [vmem:[#allocation6 + $0xc8] sm:$0xff]
    %v884 = vld [vmem:[#allocation6 + $0xd0] sm:$0xff]
    %v885 = vld [vmem:[#allocation6 + $0xd8] sm:$0xff]
    %v886 = vld [vmem:[#allocation6 + $0xe0] sm:$0xff]
    %v887 = vld [vmem:[#allocation6 + $0xe8] sm:$0xff]
    %v888 = vld [vmem:[#allocation6 + $0xf0] sm:$0xff]
    %v889 = vld [vmem:[#allocation6 + $0xf8] sm:$0xff]
    %v922 = vunpack.c.l.b16 %v858
    %v923 = vunpack.c.h.b16 %v858
    %v924 = vunpack.c.l.b16 %v859
    %v925 = vunpack.c.h.b16 %v859
    %v926 = vunpack.c.l.b16 %v860
    %v927 = vunpack.c.h.b16 %v860
    %v928 = vunpack.c.l.b16 %v861
    %v929 = vunpack.c.h.b16 %v861
    %v930 = vunpack.c.l.b16 %v862
    %v931 = vunpack.c.h.b16 %v862
    %v932 = vunpack.c.l.b16 %v863
    %v933 = vunpack.c.h.b16 %v863
    %v934 = vunpack.c.l.b16 %v864
    %v935 = vunpack.c.h.b16 %v864
    %v936 = vunpack.c.l.b16 %v865
    %v937 = vunpack.c.h.b16 %v865
    %v938 = vunpack.c.l.b16 %v866
    %v939 = vunpack.c.h.b16 %v866
    %v940 = vunpack.c.l.b16 %v867
    %v941 = vunpack.c.h.b16 %v867
    %v942 = vunpack.c.l.b16 %v868
    %v943 = vunpack.c.h.b16 %v868
    %v944 = vunpack.c.l.b16 %v869
    %v945 = vunpack.c.h.b16 %v869
    %v946 = vunpack.c.l.b16 %v870
    %v947 = vunpack.c.h.b16 %v870
    %v948 = vunpack.c.l.b16 %v871
    %v949 = vunpack.c.h.b16 %v871
    %v950 = vunpack.c.l.b16 %v872
    %v951 = vunpack.c.h.b16 %v872
    %v952 = vunpack.c.l.b16 %v873
    %v953 = vunpack.c.h.b16 %v873
    %v954 = vunpack.c.l.b16 %v874
    %v955 = vunpack.c.h.b16 %v874
    %v956 = vunpack.c.l.b16 %v875
    %v957 = vunpack.c.h.b16 %v875
    %v958 = vunpack.c.l.b16 %v876
    %v959 = vunpack.c.h.b16 %v876
    %v960 = vunpack.c.l.b16 %v877
    %v961 = vunpack.c.h.b16 %v877
    %v962 = vunpack.c.l.b16 %v878
    %v963 = vunpack.c.h.b16 %v878
    %v964 = vunpack.c.l.b16 %v879
    %v965 = vunpack.c.h.b16 %v879
    %v966 = vunpack.c.l.b16 %v880
    %v967 = vunpack.c.h.b16 %v880
    %v968 = vunpack.c.l.b16 %v881
    %v969 = vunpack.c.h.b16 %v881
    %v970 = vunpack.c.l.b16 %v882
    %v971 = vunpack.c.h.b16 %v882
    %v972 = vunpack.c.l.b16 %v883
    %v973 = vunpack.c.h.b16 %v883
    %v974 = vunpack.c.l.b16 %v884
    %v975 = vunpack.c.h.b16 %v884
    %v976 = vunpack.c.l.b16 %v885
    %v977 = vunpack.c.h.b16 %v885
    %v978 = vunpack.c.l.b16 %v886
    %v979 = vunpack.c.h.b16 %v886
    %v980 = vunpack.c.l.b16 %v887
    %v981 = vunpack.c.h.b16 %v887
    %v982 = vunpack.c.l.b16 %v888
    %v983 = vunpack.c.h.b16 %v888
    %v984 = vunpack.c.l.b16 %v889
    %v985 = vunpack.c.h.b16 %v889
    %v986 = vpack.c.b16 %v926, %v922
    %v987 = vpack.c.b16 %v927, %v923
    %v988 = vpack.c.b16 %v928, %v924
    %v989 = vpack.c.b16 %v929, %v925
    %v990 = vpack.c.b16 %v934, %v930
    %v991 = vpack.c.b16 %v935, %v931
    %v992 = vpack.c.b16 %v936, %v932
    %v993 = vpack.c.b16 %v937, %v933
    %v994 = vpack.c.b16 %v942, %v938
    %v995 = vpack.c.b16 %v943, %v939
    %v996 = vpack.c.b16 %v944, %v940
    %v997 = vpack.c.b16 %v945, %v941
    %v998 = vpack.c.b16 %v950, %v946
    %v999 = vpack.c.b16 %v951, %v947
    %v1000 = vpack.c.b16 %v952, %v948
    %v1001 = vpack.c.b16 %v953, %v949
    %v1002 = vpack.c.b16 %v958, %v954
    %v1003 = vpack.c.b16 %v959, %v955
    %v1004 = vpack.c.b16 %v960, %v956
    %v1005 = vpack.c.b16 %v961, %v957
    %v1006 = vpack.c.b16 %v966, %v962
    %v1007 = vpack.c.b16 %v967, %v963
    %v1008 = vpack.c.b16 %v968, %v964
    %v1009 = vpack.c.b16 %v969, %v965
    %v1010 = vpack.c.b16 %v974, %v970
    %v1011 = vpack.c.b16 %v975, %v971
    %v1012 = vpack.c.b16 %v976, %v972
    %v1013 = vpack.c.b16 %v977, %v973
    %v1014 = vpack.c.b16 %v982, %v978
    %v1015 = vpack.c.b16 %v983, %v979
    %v1016 = vpack.c.b16 %v984, %v980
    %v1017 = vpack.c.b16 %v985, %v981
    %1050 = vmatprep.subr.bf16.mxu0 %v987
    %1051 = vmatpush1.bf16.msra.mxu0 %v986
    %1052 = vmatprep.subr.bf16.mxu0 %v991
    %1053 = vmatpush1.bf16.msra.mxu0 %v990
    %1054 = vmatprep.subr.bf16.mxu0 %v995
    %1055 = vmatpush1.bf16.msra.mxu0 %v994
    %1056 = vmatprep.subr.bf16.mxu0 %v999
    %1057 = vmatpush1.bf16.msra.mxu0 %v998
    %1058 = vmatprep.subr.bf16.mxu0 %v1003
    %1059 = vmatpush1.bf16.msra.mxu0 %v1002
    %1060 = vmatprep.subr.bf16.mxu0 %v1007
    %1061 = vmatpush1.bf16.msra.mxu0 %v1006
    %1062 = vmatprep.subr.bf16.mxu0 %v1011
    %1063 = vmatpush1.bf16.msra.mxu0 %v1010
    %1064 = vmatprep.subr.bf16.mxu0 %v1015
    %1065 = vmatpush1.bf16.msra.mxu0 %v1014
    %1066 = vmatprep.subr.bf16.mxu0 0
    %1067 = vmatpush1.bf16.msra.mxu0 0
    %1068 = vmatprep.subr.bf16.mxu0 0
    %1069 = vmatpush1.bf16.msra.mxu0 0
    %1070 = vmatprep.subr.bf16.mxu0 0
    %1071 = vmatpush1.bf16.msra.mxu0 0
    %1072 = vmatprep.subr.bf16.mxu0 0
    %1073 = vmatpush1.bf16.msra.mxu0 0
    %1074 = vmatprep.subr.bf16.mxu0 0
    %1075 = vmatpush1.bf16.msra.mxu0 0
    %1076 = vmatprep.subr.bf16.mxu0 0
    %1077 = vmatpush1.bf16.msra.mxu0 0
    %1078 = vmatprep.subr.bf16.mxu0 0
    %1079 = vmatpush1.bf16.msra.mxu0 0
    %1080 = vmatprep.subr.bf16.mxu0 0
    %1081 = vmatpush1.bf16.msra.mxu0 0
    %1082 = vmatprep.mubr.bf16.mxu0 0
    %1083 = vmatmul.mubr.bf16.gmra.mrb[0].mxu0 %v857
    %v1084 = vpop.f32.mrb[0].mxu0
    %v1085 = vadd.f32 0.0, %v1084
    %v1086 = vpop.f32.mrb[0].mxu0
    %v1087 = vadd.f32 0.0, %v1086
    %v1088 = vpop.f32.mrb[0].mxu0
    %v1089 = vadd.f32 0.0, %v1088
    %v1090 = vpop.f32.mrb[0].mxu0
    %v1091 = vadd.f32 0.0, %v1090
    %1092 = vdwg.mxu0
    %1093 = vmatprep.subr.bf16.mxu0 %v989
    %1094 = vmatpush1.bf16.msra.mxu0 %v988
    %1095 = vmatprep.subr.bf16.mxu0 %v993
    %1096 = vmatpush1.bf16.msra.mxu0 %v992
    %1097 = vmatprep.subr.bf16.mxu0 %v997
    %1098 = vmatpush1.bf16.msra.mxu0 %v996
    %1099 = vmatprep.subr.bf16.mxu0 %v1001
    %1100 = vmatpush1.bf16.msra.mxu0 %v1000
    %1101 = vmatprep.subr.bf16.mxu0 %v1005
    %1102 = vmatpush1.bf16.msra.mxu0 %v1004
    %1103 = vmatprep.subr.bf16.mxu0 %v1009
    %1104 = vmatpush1.bf16.msra.mxu0 %v1008
    %1105 = vmatprep.subr.bf16.mxu0 %v1013
    %1106 = vmatpush1.bf16.msra.mxu0 %v1012
    %1107 = vmatprep.subr.bf16.mxu0 %v1017
    %1108 = vmatpush1.bf16.msra.mxu0 %v1016
    %1109 = vmatprep.subr.bf16.mxu0 0
    %1110 = vmatpush1.bf16.msra.mxu0 0
    %1111 = vmatprep.subr.bf16.mxu0 0
    %1112 = vmatpush1.bf16.msra.mxu0 0
    %1113 = vmatprep.subr.bf16.mxu0 0
    %1114 = vmatpush1.bf16.msra.mxu0 0
    %1115 = vmatprep.subr.bf16.mxu0 0
    %1116 = vmatpush1.bf16.msra.mxu0 0
    %1117 = vmatprep.subr.bf16.mxu0 0
    %1118 = vmatpush1.bf16.msra.mxu0 0
    %1119 = vmatprep.subr.bf16.mxu0 0
    %1120 = vmatpush1.bf16.msra.mxu0 0
    %1121 = vmatprep.subr.bf16.mxu0 0
    %1122 = vmatpush1.bf16.msra.mxu0 0
    %1123 = vmatprep.subr.bf16.mxu0 0
    %1124 = vmatpush1.bf16.msra.mxu0 0
    %1125 = vmatprep.mubr.bf16.mxu0 0
    %1126 = vmatmul.mubr.bf16.gmra.mrb[0].mxu0 %v857
    %v1127 = vpop.f32.mrb[0].mxu0
    %v1128 = vadd.f32 0.0, %v1127
    %v1129 = vpop.f32.mrb[0].mxu0
    %v1130 = vadd.f32 0.0, %v1129
    %v1131 = vpop.f32.mrb[0].mxu0
    %v1132 = vadd.f32 0.0, %v1131
    %v1133 = vpop.f32.mrb[0].mxu0
    %v1134 = vadd.f32 0.0, %v1133
    %1135 = vdwg.mxu0
    %v1138 = vunpack.c.l.b16 %v823
    %v1139 = vunpack.c.l.b16 %v824
    %v1140 = vpack.c.b16 %v1139, %v1138
    %v1174 = vunpack.c.l.b16 %v825
    %v1175 = vunpack.c.h.b16 %v825
    %v1176 = vunpack.c.l.b16 %v826
    %v1177 = vunpack.c.h.b16 %v826
    %v1178 = vunpack.c.l.b16 %v827
    %v1179 = vunpack.c.h.b16 %v827
    %v1180 = vunpack.c.l.b16 %v828
    %v1181 = vunpack.c.h.b16 %v828
    %v1182 = vunpack.c.l.b16 %v829
    %v1183 = vunpack.c.h.b16 %v829
    %v1184 = vunpack.c.l.b16 %v830
    %v1185 = vunpack.c.h.b16 %v830
    %v1186 = vunpack.c.l.b16 %v831
    %v1187 = vunpack.c.h.b16 %v831
    %v1188 = vunpack.c.l.b16 %v832
    %v1189 = vunpack.c.h.b16 %v832
    %v1190 = vunpack.c.l.b16 %v833
    %v1191 = vunpack.c.h.b16 %v833
    %v1192 = vunpack.c.l.b16 %v834
    %v1193 = vunpack.c.h.b16 %v834
    %v1194 = vunpack.c.l.b16 %v835
    %v1195 = vunpack.c.h.b16 %v835
    %v1196 = vunpack.c.l.b16 %v836
    %v1197 = vunpack.c.h.b16 %v836
    %v1198 = vunpack.c.l.b16 %v837
    %v1199 = vunpack.c.h.b16 %v837
    %v1200 = vunpack.c.l.b16 %v838
    %v1201 = vunpack.c.h.b16 %v838
    %v1202 = vunpack.c.l.b16 %v839
    %v1203 = vunpack.c.h.b16 %v839
    %v1204 = vunpack.c.l.b16 %v840
    %v1205 = vunpack.c.h.b16 %v840
    %v1206 = vunpack.c.l.b16 %v841
    %v1207 = vunpack.c.h.b16 %v841
    %v1208 = vunpack.c.l.b16 %v842
    %v1209 = vunpack.c.h.b16 %v842
    %v1210 = vunpack.c.l.b16 %v843
    %v1211 = vunpack.c.h.b16 %v843
    %v1212 = vunpack.c.l.b16 %v844
    %v1213 = vunpack.c.h.b16 %v844
    %v1214 = vunpack.c.l.b16 %v845
    %v1215 = vunpack.c.h.b16 %v845
    %v1216 = vunpack.c.l.b16 %v846
    %v1217 = vunpack.c.h.b16 %v846
    %v1218 = vunpack.c.l.b16 %v847
    %v1219 = vunpack.c.h.b16 %v847
    %v1220 = vunpack.c.l.b16 %v848
    %v1221 = vunpack.c.h.b16 %v848
    %v1222 = vunpack.c.l.b16 %v849
    %v1223 = vunpack.c.h.b16 %v849
    %v1224 = vunpack.c.l.b16 %v850
    %v1225 = vunpack.c.h.b16 %v850
    %v1226 = vunpack.c.l.b16 %v851
    %v1227 = vunpack.c.h.b16 %v851
    %v1228 = vunpack.c.l.b16 %v852
    %v1229 = vunpack.c.h.b16 %v852
    %v1230 = vunpack.c.l.b16 %v853
    %v1231 = vunpack.c.h.b16 %v853
    %v1232 = vunpack.c.l.b16 %v854
    %v1233 = vunpack.c.h.b16 %v854
    %v1234 = vunpack.c.l.b16 %v855
    %v1235 = vunpack.c.h.b16 %v855
    %v1236 = vunpack.c.l.b16 %v856
    %v1237 = vunpack.c.h.b16 %v856
    %v1238 = vpack.c.b16 %v1178, %v1174
    %v1239 = vpack.c.b16 %v1179, %v1175
    %v1240 = vpack.c.b16 %v1180, %v1176
    %v1241 = vpack.c.b16 %v1181, %v1177
    %v1242 = vpack.c.b16 %v1186, %v1182
    %v1243 = vpack.c.b16 %v1187, %v1183
    %v1244 = vpack.c.b16 %v1188, %v1184
    %v1245 = vpack.c.b16 %v1189, %v1185
    %v1246 = vpack.c.b16 %v1194, %v1190
    %v1247 = vpack.c.b16 %v1195, %v1191
    %v1248 = vpack.c.b16 %v1196, %v1192
    %v1249 = vpack.c.b16 %v1197, %v1193
    %v1250 = vpack.c.b16 %v1202, %v1198
    %v1251 = vpack.c.b16 %v1203, %v1199
    %v1252 = vpack.c.b16 %v1204, %v1200
    %v1253 = vpack.c.b16 %v1205, %v1201
    %v1254 = vpack.c.b16 %v1210, %v1206
    %v1255 = vpack.c.b16 %v1211, %v1207
    %v1256 = vpack.c.b16 %v1212, %v1208
    %v1257 = vpack.c.b16 %v1213, %v1209
    %v1258 = vpack.c.b16 %v1218, %v1214
    %v1259 = vpack.c.b16 %v1219, %v1215
    %v1260 = vpack.c.b16 %v1220, %v1216
    %v1261 = vpack.c.b16 %v1221, %v1217
    %v1262 = vpack.c.b16 %v1226, %v1222
    %v1263 = vpack.c.b16 %v1227, %v1223
    %v1264 = vpack.c.b16 %v1228, %v1224
    %v1265 = vpack.c.b16 %v1229, %v1225
    %v1266 = vpack.c.b16 %v1234, %v1230
    %v1267 = vpack.c.b16 %v1235, %v1231
    %v1268 = vpack.c.b16 %v1236, %v1232
    %v1269 = vpack.c.b16 %v1237, %v1233
    %1302 = vmatprep.subr.bf16.mxu0 %v1239
    %1303 = vmatpush1.bf16.msra.mxu0 %v1238
    %1304 = vmatprep.subr.bf16.mxu0 %v1243
    %1305 = vmatpush1.bf16.msra.mxu0 %v1242
    %1306 = vmatprep.subr.bf16.mxu0 %v1247
    %1307 = vmatpush1.bf16.msra.mxu0 %v1246
    %1308 = vmatprep.subr.bf16.mxu0 %v1251
    %1309 = vmatpush1.bf16.msra.mxu0 %v1250
    %1310 = vmatprep.subr.bf16.mxu0 %v1255
    %1311 = vmatpush1.bf16.msra.mxu0 %v1254
    %1312 = vmatprep.subr.bf16.mxu0 %v1259
    %1313 = vmatpush1.bf16.msra.mxu0 %v1258
    %1314 = vmatprep.subr.bf16.mxu0 %v1263
    %1315 = vmatpush1.bf16.msra.mxu0 %v1262
    %1316 = vmatprep.subr.bf16.mxu0 %v1267
    %1317 = vmatpush1.bf16.msra.mxu0 %v1266
    %1318 = vmatprep.subr.bf16.mxu0 0
    %1319 = vmatpush1.bf16.msra.mxu0 0
    %1320 = vmatprep.subr.bf16.mxu0 0
    %1321 = vmatpush1.bf16.msra.mxu0 0
    %1322 = vmatprep.subr.bf16.mxu0 0
    %1323 = vmatpush1.bf16.msra.mxu0 0
    %1324 = vmatprep.subr.bf16.mxu0 0
    %1325 = vmatpush1.bf16.msra.mxu0 0
    %1326 = vmatprep.subr.bf16.mxu0 0
    %1327 = vmatpush1.bf16.msra.mxu0 0
    %1328 = vmatprep.subr.bf16.mxu0 0
    %1329 = vmatpush1.bf16.msra.mxu0 0
    %1330 = vmatprep.subr.bf16.mxu0 0
    %1331 = vmatpush1.bf16.msra.mxu0 0
    %1332 = vmatprep.subr.bf16.mxu0 0
    %1333 = vmatpush1.bf16.msra.mxu0 0
    %1334 = vmatprep.mubr.bf16.mxu0 0
    %1335 = vmatmul.mubr.bf16.gmra.mrb[0].mxu0 %v1140
    %v1336 = vpop.f32.mrb[0].mxu0
    %v1337 = vadd.f32 %v1085, %v1336
    %v1338 = vpop.f32.mrb[0].mxu0
    %v1339 = vadd.f32 %v1087, %v1338
    %v1340 = vpop.f32.mrb[0].mxu0
    %v1341 = vadd.f32 %v1089, %v1340
    %v1342 = vpop.f32.mrb[0].mxu0
    %v1343 = vadd.f32 %v1091, %v1342
    %1344 = vdwg.mxu0
    %1345 = vmatprep.subr.bf16.mxu0 %v1241
    %1346 = vmatpush1.bf16.msra.mxu0 %v1240
    %1347 = vmatprep.subr.bf16.mxu0 %v1245
    %1348 = vmatpush1.bf16.msra.mxu0 %v1244
    %1349 = vmatprep.subr.bf16.mxu0 %v1249
    %1350 = vmatpush1.bf16.msra.mxu0 %v1248
    %1351 = vmatprep.subr.bf16.mxu0 %v1253
    %1352 = vmatpush1.bf16.msra.mxu0 %v1252
    %1353 = vmatprep.subr.bf16.mxu0 %v1257
    %1354 = vmatpush1.bf16.msra.mxu0 %v1256
    %1355 = vmatprep.subr.bf16.mxu0 %v1261
    %1356 = vmatpush1.bf16.msra.mxu0 %v1260
    %1357 = vmatprep.subr.bf16.mxu0 %v1265
    %1358 = vmatpush1.bf16.msra.mxu0 %v1264
    %1359 = vmatprep.subr.bf16.mxu0 %v1269
    %1360 = vmatpush1.bf16.msra.mxu0 %v1268
    %1361 = vmatprep.subr.bf16.mxu0 0
    %1362 = vmatpush1.bf16.msra.mxu0 0
    %1363 = vmatprep.subr.bf16.mxu0 0
    %1364 = vmatpush1.bf16.msra.mxu0 0
    %1365 = vmatprep.subr.bf16.mxu0 0
    %1366 = vmatpush1.bf16.msra.mxu0 0
    %1367 = vmatprep.subr.bf16.mxu0 0
    %1368 = vmatpush1.bf16.msra.mxu0 0
    %1369 = vmatprep.subr.bf16.mxu0 0
    %1370 = vmatpush1.bf16.msra.mxu0 0
    %1371 = vmatprep.subr.bf16.mxu0 0
    %1372 = vmatpush1.bf16.msra.mxu0 0
    %1373 = vmatprep.subr.bf16.mxu0 0
    %1374 = vmatpush1.bf16.msra.mxu0 0
    %1375 = vmatprep.subr.bf16.mxu0 0
    %1376 = vmatpush1.bf16.msra.mxu0 0
    %1377 = vmatprep.mubr.bf16.mxu0 0
    %1378 = vmatmul.mubr.bf16.gmra.mrb[0].mxu0 %v1140
    %v1379 = vpop.f32.mrb[0].mxu0
    %v1380 = vadd.f32 %v1128, %v1379
    %v1381 = vpop.f32.mrb[0].mxu0
    %v1382 = vadd.f32 %v1130, %v1381
    %v1383 = vpop.f32.mrb[0].mxu0
    %v1384 = vadd.f32 %v1132, %v1383
    %v1385 = vpop.f32.mrb[0].mxu0
    %v1386 = vadd.f32 %v1134, %v1385
    %1387 = vdwg.mxu0
    %v1388 = vadd.f32 %v1337, %v58
    %v1389 = vadd.f32 %v1339, %v62
    %v1390 = vadd.f32 %v1380, %v66
    %v1391 = vadd.f32 %v1382, %v70
    %v1392 = vadd.f32 %v1341, %v58
    %v1393 = vadd.f32 %v1343, %v62
    %v1394 = vadd.f32 %v1384, %v66
    %v1395 = vadd.f32 %v1386, %v70
    %v1396 = vmul.f32 %v1388, 0.5
    %v1397 = vmul.f32 %v1392, 0.5
    %v1398 = vtanh.pop %v1396
    %v1399 = vtanh.pop %v1397
    %v1400 = vadd.f32 %v1398, 1.0
    %v1401 = vadd.f32 %v1399, 1.0
    %v1402 = vmul.f32 %v1400, 0.5
    %v1403 = vmul.f32 %v1401, 0.5
    %v1404 = vmul.f32 %v1389, 0.5
    %v1405 = vmul.f32 %v1393, 0.5
    %v1406 = vtanh.pop %v1404
    %v1407 = vtanh.pop %v1405
    %v1408 = vadd.f32 %v1406, 1.0
    %v1409 = vadd.f32 %v1407, 1.0
    %v1410 = vmul.f32 %v1408, 0.5
    %v1411 = vmul.f32 %v1409, 0.5
    %v1412 = vtanh.pop %v1390
    %v1413 = vtanh.pop %v1394
    %v1414 = vmul.f32 %v1391, 0.5
    %v1415 = vmul.f32 %v1395, 0.5
    %v1416 = vtanh.pop %v1414
    %v1417 = vtanh.pop %v1415
    %v1418 = vadd.f32 %v1416, 1.0
    %v1419 = vadd.f32 %v1417, 1.0
    %v1420 = vmul.f32 %v1418, 0.5
    %v1421 = vmul.f32 %v1419, 0.5
    %v1422 = vld [vmem:[#allocation3] sm:$0xff]
    %v1423 = vld [vmem:[#allocation3 + $0x8] sm:$0xff]
    %v1424 = vmul.f32 %v1410, %v1422
    %v1425 = vmul.f32 %v1411, %v1423
    %v1426 = vmul.f32 %v1402, %v1412
    %v1427 = vmul.f32 %v1403, %v1413
    %v1428 = vadd.f32 %v1424, %v1426
    %v1429 = vadd.f32 %v1425, %v1427
    %v1430 = vtanh.pop %v1428
    %v1431 = vtanh.pop %v1429
    %v1432 = vmul.f32 %v1420, %v1430
    %v1433 = vmul.f32 %v1421, %v1431
    %1434 = vst [vmem:[#allocation3] sm:$0xff] %v1428
    %1435 = vst [vmem:[#allocation3 + $0x8] sm:$0xff] %v1429
    %v1436 = vpack.c.bf16 %v1433, %v1432
    %1437 = vst [vmem:[#allocation2] sm:$0xff] %v1436
    %v1440 = vcombine.high %v1432, %v1432
    %v1442 = vunpack.c.l.s4 1966171168
    %v1443 = vunpack.c.0.s8 %v1442
    %v1444 = vlaneseq
    %v1445 = vshrl.u32 %v1444, 7
    %v1446 = vsub.s32 %v1443, %v1445
    %v1447 = vrot.slane %v1432, %v1446
    %v1449 = vunpack.c.l.s4 1966171168
    %v1450 = vunpack.c.0.s8 %v1449
    %v1451 = vlaneseq
    %v1452 = vshrl.u32 %v1451, 7
    %v1453 = vsub.s32 %v1450, %v1452
    %v1454 = vrot.slane %v1440, %v1453
    %v1455 = vcombine.high %v1447, %v1447
    %v1456 = vcombine.high %v1454, %v1454
    %v1458 = vunpack.c.l.s4 1966171168
    %v1459 = vunpack.c.0.s8 %v1458
    %v1460 = vlaneseq
    %v1461 = vshrl.u32 %v1460, 7
    %v1462 = vsub.s32 %v1459, %v1461
    %v1463 = vrot.slane %v1447, %v1462
    %v1465 = vunpack.c.l.s4 1966171168
    %v1466 = vunpack.c.0.s8 %v1465
    %v1467 = vlaneseq
    %v1468 = vshrl.u32 %v1467, 7
    %v1469 = vsub.s32 %v1466, %v1468
    %v1470 = vrot.slane %v1454, %v1469
    %v1472 = vunpack.c.l.s4 1966171168
    %v1473 = vunpack.c.0.s8 %v1472
    %v1474 = vlaneseq
    %v1475 = vshrl.u32 %v1474, 7
    %v1476 = vsub.s32 %v1473, %v1475
    %v1477 = vrot.slane %v1455, %v1476
    %v1479 = vunpack.c.l.s4 1966171168
    %v1480 = vunpack.c.0.s8 %v1479
    %v1481 = vlaneseq
    %v1482 = vshrl.u32 %v1481, 7
    %v1483 = vsub.s32 %v1480, %v1482
    %v1484 = vrot.slane %v1456, %v1483
    %v1485 = vcombine.high %v1463, %v1463
    %v1486 = vcombine.high %v1470, %v1470
    %v1487 = vcombine.high %v1477, %v1477
    %v1488 = vcombine.high %v1484, %v1484
    %v1489 = vcombine.high %v1433, %v1433
    %v1491 = vunpack.c.l.s4 1966171168
    %v1492 = vunpack.c.0.s8 %v1491
    %v1493 = vlaneseq
    %v1494 = vshrl.u32 %v1493, 7
    %v1495 = vsub.s32 %v1492, %v1494
    %v1496 = vrot.slane %v1433, %v1495
    %v1498 = vunpack.c.l.s4 1966171168
    %v1499 = vunpack.c.0.s8 %v1498
    %v1500 = vlaneseq
    %v1501 = vshrl.u32 %v1500, 7
    %v1502 = vsub.s32 %v1499, %v1501
    %v1503 = vrot.slane %v1489, %v1502
    %v1504 = vcombine.high %v1496, %v1496
    %v1505 = vcombine.high %v1503, %v1503
    %v1507 = vunpack.c.l.s4 1966171168
    %v1508 = vunpack.c.0.s8 %v1507
    %v1509 = vlaneseq
    %v1510 = vshrl.u32 %v1509, 7
    %v1511 = vsub.s32 %v1508, %v1510
    %v1512 = vrot.slane %v1496, %v1511
    %v1514 = vunpack.c.l.s4 1966171168
    %v1515 = vunpack.c.0.s8 %v1514
    %v1516 = vlaneseq
    %v1517 = vshrl.u32 %v1516, 7
    %v1518 = vsub.s32 %v1515, %v1517
    %v1519 = vrot.slane %v1503, %v1518
    %v1521 = vunpack.c.l.s4 1966171168
    %v1522 = vunpack.c.0.s8 %v1521
    %v1523 = vlaneseq
    %v1524 = vshrl.u32 %v1523, 7
    %v1525 = vsub.s32 %v1522, %v1524
    %v1526 = vrot.slane %v1504, %v1525
    %v1528 = vunpack.c.l.s4 1966171168
    %v1529 = vunpack.c.0.s8 %v1528
    %v1530 = vlaneseq
    %v1531 = vshrl.u32 %v1530, 7
    %v1532 = vsub.s32 %v1529, %v1531
    %v1533 = vrot.slane %v1505, %v1532
    %v1534 = vcombine.high %v1512, %v1512
    %v1535 = vcombine.high %v1519, %v1519
    %v1536 = vcombine.high %v1526, %v1526
    %v1537 = vcombine.high %v1533, %v1533
    %1554 = vst [vmem:[%s4 + $0x1] sm:$0x1] %v1463
    %1555 = vst [vmem:[%s4 + $0x9] sm:$0x1] %v1477
    %1556 = vst [vmem:[%s4 + $0x11] sm:$0x1] %v1485
    %1557 = vst [vmem:[%s4 + $0x19] sm:$0x1] %v1487
    %1558 = vst [vmem:[%s4 + $0x21] sm:$0x1] %v1470
    %1559 = vst [vmem:[%s4 + $0x29] sm:$0x1] %v1484
    %1560 = vst [vmem:[%s4 + $0x31] sm:$0x1] %v1486
    %1561 = vst [vmem:[%s4 + $0x39] sm:$0x1] %v1488
    %1562 = vst [vmem:[%s4 + $0x41] sm:$0x1] %v1512
    %1563 = vst [vmem:[%s4 + $0x49] sm:$0x1] %v1526
    %1564 = vst [vmem:[%s4 + $0x51] sm:$0x1] %v1534
    %1565 = vst [vmem:[%s4 + $0x59] sm:$0x1] %v1536
    %1566 = vst [vmem:[%s4 + $0x61] sm:$0x1] %v1519
    %1567 = vst [vmem:[%s4 + $0x69] sm:$0x1] %v1533
    %1568 = vst [vmem:[%s4 + $0x71] sm:$0x1] %v1535
    %1569 = vst [vmem:[%s4 + $0x79] sm:$0x1] %v1537
    %s1570 = scalar_lea.vmem %s0, 16
    %v1571 = vld [vmem:[%s1570] sm:$0xf]
    %v1572 = vld [vmem:[%s1570 + $0x4] sm:$0xf]
    %v1573 = vld [vmem:[#allocation4] sm:$0xff]
    %v1574 = vld [vmem:[#allocation4 + $0x8] sm:$0xff]
    %v1575 = vld [vmem:[#allocation4 + $0x10] sm:$0xff]
    %v1576 = vld [vmem:[#allocation4 + $0x18] sm:$0xff]
    %v1577 = vld [vmem:[#allocation4 + $0x20] sm:$0xff]
    %v1578 = vld [vmem:[#allocation4 + $0x28] sm:$0xff]
    %v1579 = vld [vmem:[#allocation4 + $0x30] sm:$0xff]
    %v1580 = vld [vmem:[#allocation4 + $0x38] sm:$0xff]
    %v1581 = vld [vmem:[#allocation4 + $0x40] sm:$0xff]
    %v1582 = vld [vmem:[#allocation4 + $0x48] sm:$0xff]
    %v1583 = vld [vmem:[#allocation4 + $0x50] sm:$0xff]
    %v1584 = vld [vmem:[#allocation4 + $0x58] sm:$0xff]
    %v1585 = vld [vmem:[#allocation4 + $0x60] sm:$0xff]
    %v1586 = vld [vmem:[#allocation4 + $0x68] sm:$0xff]
    %v1587 = vld [vmem:[#allocation4 + $0x70] sm:$0xff]
    %v1588 = vld [vmem:[#allocation4 + $0x78] sm:$0xff]
    %v1589 = vld [vmem:[#allocation4 + $0x80] sm:$0xff]
    %v1590 = vld [vmem:[#allocation4 + $0x88] sm:$0xff]
    %v1591 = vld [vmem:[#allocation4 + $0x90] sm:$0xff]
    %v1592 = vld [vmem:[#allocation4 + $0x98] sm:$0xff]
    %v1593 = vld [vmem:[#allocation4 + $0xa0] sm:$0xff]
    %v1594 = vld [vmem:[#allocation4 + $0xa8] sm:$0xff]
    %v1595 = vld [vmem:[#allocation4 + $0xb0] sm:$0xff]
    %v1596 = vld [vmem:[#allocation4 + $0xb8] sm:$0xff]
    %v1597 = vld [vmem:[#allocation4 + $0xc0] sm:$0xff]
    %v1598 = vld [vmem:[#allocation4 + $0xc8] sm:$0xff]
    %v1599 = vld [vmem:[#allocation4 + $0xd0] sm:$0xff]
    %v1600 = vld [vmem:[#allocation4 + $0xd8] sm:$0xff]
    %v1601 = vld [vmem:[#allocation4 + $0xe0] sm:$0xff]
    %v1602 = vld [vmem:[#allocation4 + $0xe8] sm:$0xff]
    %v1603 = vld [vmem:[#allocation4 + $0xf0] sm:$0xff]
    %v1604 = vld [vmem:[#allocation4 + $0xf8] sm:$0xff]
    %v1605 = vld [vmem:[#allocation2] sm:$0xff]
    %v1606 = vld [vmem:[#allocation6] sm:$0xff]
    %v1607 = vld [vmem:[#allocation6 + $0x8] sm:$0xff]
    %v1608 = vld [vmem:[#allocation6 + $0x10] sm:$0xff]
    %v1609 = vld [vmem:[#allocation6 + $0x18] sm:$0xff]
    %v1610 = vld [vmem:[#allocation6 + $0x20] sm:$0xff]
    %v1611 = vld [vmem:[#allocation6 + $0x28] sm:$0xff]
    %v1612 = vld [vmem:[#allocation6 + $0x30] sm:$0xff]
    %v1613 = vld [vmem:[#allocation6 + $0x38] sm:$0xff]
    %v1614 = vld [vmem:[#allocation6 + $0x40] sm:$0xff]
    %v1615 = vld [vmem:[#allocation6 + $0x48] sm:$0xff]
    %v1616 = vld [vmem:[#allocation6 + $0x50] sm:$0xff]
    %v1617 = vld [vmem:[#allocation6 + $0x58] sm:$0xff]
    %v1618 = vld [vmem:[#allocation6 + $0x60] sm:$0xff]
    %v1619 = vld [vmem:[#allocation6 + $0x68] sm:$0xff]
    %v1620 = vld [vmem:[#allocation6 + $0x70] sm:$0xff]
    %v1621 = vld [vmem:[#allocation6 + $0x78] sm:$0xff]
    %v1622 = vld [vmem:[#allocation6 + $0x80] sm:$0xff]
    %v1623 = vld [vmem:[#allocation6 + $0x88] sm:$0xff]
    %v1624 = vld [vmem:[#allocation6 + $0x90] sm:$0xff]
    %v1625 = vld [vmem:[#allocation6 + $0x98] sm:$0xff]
    %v1626 = vld [vmem:[#allocation6 + $0xa0] sm:$0xff]
    %v1627 = vld [vmem:[#allocation6 + $0xa8] sm:$0xff]
    %v1628 = vld [vmem:[#allocation6 + $0xb0] sm:$0xff]
    %v1629 = vld [vmem:[#allocation6 + $0xb8] sm:$0xff]
    %v1630 = vld [vmem:[#allocation6 + $0xc0] sm:$0xff]
    %v1631 = vld [vmem:[#allocation6 + $0xc8] sm:$0xff]
    %v1632 = vld [vmem:[#allocation6 + $0xd0] sm:$0xff]
    %v1633 = vld [vmem:[#allocation6 + $0xd8] sm:$0xff]
    %v1634 = vld [vmem:[#allocation6 + $0xe0] sm:$0xff]
    %v1635 = vld [vmem:[#allocation6 + $0xe8] sm:$0xff]
    %v1636 = vld [vmem:[#allocation6 + $0xf0] sm:$0xff]
    %v1637 = vld [vmem:[#allocation6 + $0xf8] sm:$0xff]
    %v1670 = vunpack.c.l.b16 %v1606
    %v1671 = vunpack.c.h.b16 %v1606
    %v1672 = vunpack.c.l.b16 %v1607
    %v1673 = vunpack.c.h.b16 %v1607
    %v1674 = vunpack.c.l.b16 %v1608
    %v1675 = vunpack.c.h.b16 %v1608
    %v1676 = vunpack.c.l.b16 %v1609
    %v1677 = vunpack.c.h.b16 %v1609
    %v1678 = vunpack.c.l.b16 %v1610
    %v1679 = vunpack.c.h.b16 %v1610
    %v1680 = vunpack.c.l.b16 %v1611
    %v1681 = vunpack.c.h.b16 %v1611
    %v1682 = vunpack.c.l.b16 %v1612
    %v1683 = vunpack.c.h.b16 %v1612
    %v1684 = vunpack.c.l.b16 %v1613
    %v1685 = vunpack.c.h.b16 %v1613
    %v1686 = vunpack.c.l.b16 %v1614
    %v1687 = vunpack.c.h.b16 %v1614
    %v1688 = vunpack.c.l.b16 %v1615
    %v1689 = vunpack.c.h.b16 %v1615
    %v1690 = vunpack.c.l.b16 %v1616
    %v1691 = vunpack.c.h.b16 %v1616
    %v1692 = vunpack.c.l.b16 %v1617
    %v1693 = vunpack.c.h.b16 %v1617
    %v1694 = vunpack.c.l.b16 %v1618
    %v1695 = vunpack.c.h.b16 %v1618
    %v1696 = vunpack.c.l.b16 %v1619
    %v1697 = vunpack.c.h.b16 %v1619
    %v1698 = vunpack.c.l.b16 %v1620
    %v1699 = vunpack.c.h.b16 %v1620
    %v1700 = vunpack.c.l.b16 %v1621
    %v1701 = vunpack.c.h.b16 %v1621
    %v1702 = vunpack.c.l.b16 %v1622
    %v1703 = vunpack.c.h.b16 %v1622
    %v1704 = vunpack.c.l.b16 %v1623
    %v1705 = vunpack.c.h.b16 %v1623
    %v1706 = vunpack.c.l.b16 %v1624
    %v1707 = vunpack.c.h.b16 %v1624
    %v1708 = vunpack.c.l.b16 %v1625
    %v1709 = vunpack.c.h.b16 %v1625
    %v1710 = vunpack.c.l.b16 %v1626
    %v1711 = vunpack.c.h.b16 %v1626
    %v1712 = vunpack.c.l.b16 %v1627
    %v1713 = vunpack.c.h.b16 %v1627
    %v1714 = vunpack.c.l.b16 %v1628
    %v1715 = vunpack.c.h.b16 %v1628
    %v1716 = vunpack.c.l.b16 %v1629
    %v1717 = vunpack.c.h.b16 %v1629
    %v1718 = vunpack.c.l.b16 %v1630
    %v1719 = vunpack.c.h.b16 %v1630
    %v1720 = vunpack.c.l.b16 %v1631
    %v1721 = vunpack.c.h.b16 %v1631
    %v1722 = vunpack.c.l.b16 %v1632
    %v1723 = vunpack.c.h.b16 %v1632
    %v1724 = vunpack.c.l.b16 %v1633
    %v1725 = vunpack.c.h.b16 %v1633
    %v1726 = vunpack.c.l.b16 %v1634
    %v1727 = vunpack.c.h.b16 %v1634
    %v1728 = vunpack.c.l.b16 %v1635
    %v1729 = vunpack.c.h.b16 %v1635
    %v1730 = vunpack.c.l.b16 %v1636
    %v1731 = vunpack.c.h.b16 %v1636
    %v1732 = vunpack.c.l.b16 %v1637
    %v1733 = vunpack.c.h.b16 %v1637
    %v1734 = vpack.c.b16 %v1674, %v1670
    %v1735 = vpack.c.b16 %v1675, %v1671
    %v1736 = vpack.c.b16 %v1676, %v1672
    %v1737 = vpack.c.b16 %v1677, %v1673
    %v1738 = vpack.c.b16 %v1682, %v1678
    %v1739 = vpack.c.b16 %v1683, %v1679
    %v1740 = vpack.c.b16 %v1684, %v1680
    %v1741 = vpack.c.b16 %v1685, %v1681
    %v1742 = vpack.c.b16 %v1690, %v1686
    %v1743 = vpack.c.b16 %v1691, %v1687
    %v1744 = vpack.c.b16 %v1692, %v1688
    %v1745 = vpack.c.b16 %v1693, %v1689
    %v1746 = vpack.c.b16 %v1698, %v1694
    %v1747 = vpack.c.b16 %v1699, %v1695
    %v1748 = vpack.c.b16 %v1700, %v1696
    %v1749 = vpack.c.b16 %v1701, %v1697
    %v1750 = vpack.c.b16 %v1706, %v1702
    %v1751 = vpack.c.b16 %v1707, %v1703
    %v1752 = vpack.c.b16 %v1708, %v1704
    %v1753 = vpack.c.b16 %v1709, %v1705
    %v1754 = vpack.c.b16 %v1714, %v1710
    %v1755 = vpack.c.b16 %v1715, %v1711
    %v1756 = vpack.c.b16 %v1716, %v1712
    %v1757 = vpack.c.b16 %v1717, %v1713
    %v1758 = vpack.c.b16 %v1722, %v1718
    %v1759 = vpack.c.b16 %v1723, %v1719
    %v1760 = vpack.c.b16 %v1724, %v1720
    %v1761 = vpack.c.b16 %v1725, %v1721
    %v1762 = vpack.c.b16 %v1730, %v1726
    %v1763 = vpack.c.b16 %v1731, %v1727
    %v1764 = vpack.c.b16 %v1732, %v1728
    %v1765 = vpack.c.b16 %v1733, %v1729
    %1798 = vmatprep.subr.bf16.mxu0 %v1735
    %1799 = vmatpush1.bf16.msra.mxu0 %v1734
    %1800 = vmatprep.subr.bf16.mxu0 %v1739
    %1801 = vmatpush1.bf16.msra.mxu0 %v1738
    %1802 = vmatprep.subr.bf16.mxu0 %v1743
    %1803 = vmatpush1.bf16.msra.mxu0 %v1742
    %1804 = vmatprep.subr.bf16.mxu0 %v1747
    %1805 = vmatpush1.bf16.msra.mxu0 %v1746
    %1806 = vmatprep.subr.bf16.mxu0 %v1751
    %1807 = vmatpush1.bf16.msra.mxu0 %v1750
    %1808 = vmatprep.subr.bf16.mxu0 %v1755
    %1809 = vmatpush1.bf16.msra.mxu0 %v1754
    %1810 = vmatprep.subr.bf16.mxu0 %v1759
    %1811 = vmatpush1.bf16.msra.mxu0 %v1758
    %1812 = vmatprep.subr.bf16.mxu0 %v1763
    %1813 = vmatpush1.bf16.msra.mxu0 %v1762
    %1814 = vmatprep.subr.bf16.mxu0 0
    %1815 = vmatpush1.bf16.msra.mxu0 0
    %1816 = vmatprep.subr.bf16.mxu0 0
    %1817 = vmatpush1.bf16.msra.mxu0 0
    %1818 = vmatprep.subr.bf16.mxu0 0
    %1819 = vmatpush1.bf16.msra.mxu0 0
    %1820 = vmatprep.subr.bf16.mxu0 0
    %1821 = vmatpush1.bf16.msra.mxu0 0
    %1822 = vmatprep.subr.bf16.mxu0 0
    %1823 = vmatpush1.bf16.msra.mxu0 0
    %1824 = vmatprep.subr.bf16.mxu0 0
    %1825 = vmatpush1.bf16.msra.mxu0 0
    %1826 = vmatprep.subr.bf16.mxu0 0
    %1827 = vmatpush1.bf16.msra.mxu0 0
    %1828 = vmatprep.subr.bf16.mxu0 0
    %1829 = vmatpush1.bf16.msra.mxu0 0
    %1830 = vmatprep.mubr.bf16.mxu0 0
    %1831 = vmatmul.mubr.bf16.gmra.mrb[0].mxu0 %v1605
    %v1832 = vpop.f32.mrb[0].mxu0
    %v1833 = vadd.f32 0.0, %v1832
    %v1834 = vpop.f32.mrb[0].mxu0
    %v1835 = vadd.f32 0.0, %v1834
    %v1836 = vpop.f32.mrb[0].mxu0
    %v1837 = vadd.f32 0.0, %v1836
    %v1838 = vpop.f32.mrb[0].mxu0
    %v1839 = vadd.f32 0.0, %v1838
    %1840 = vdwg.mxu0
    %1841 = vmatprep.subr.bf16.mxu0 %v1737
    %1842 = vmatpush1.bf16.msra.mxu0 %v1736
    %1843 = vmatprep.subr.bf16.mxu0 %v1741
    %1844 = vmatpush1.bf16.msra.mxu0 %v1740
    %1845 = vmatprep.subr.bf16.mxu0 %v1745
    %1846 = vmatpush1.bf16.msra.mxu0 %v1744
    %1847 = vmatprep.subr.bf16.mxu0 %v1749
    %1848 = vmatpush1.bf16.msra.mxu0 %v1748
    %1849 = vmatprep.subr.bf16.mxu0 %v1753
    %1850 = vmatpush1.bf16.msra.mxu0 %v1752
    %1851 = vmatprep.subr.bf16.mxu0 %v1757
    %1852 = vmatpush1.bf16.msra.mxu0 %v1756
    %1853 = vmatprep.subr.bf16.mxu0 %v1761
    %1854 = vmatpush1.bf16.msra.mxu0 %v1760
    %1855 = vmatprep.subr.bf16.mxu0 %v1765
    %1856 = vmatpush1.bf16.msra.mxu0 %v1764
    %1857 = vmatprep.subr.bf16.mxu0 0
    %1858 = vmatpush1.bf16.msra.mxu0 0
    %1859 = vmatprep.subr.bf16.mxu0 0
    %1860 = vmatpush1.bf16.msra.mxu0 0
    %1861 = vmatprep.subr.bf16.mxu0 0
    %1862 = vmatpush1.bf16.msra.mxu0 0
    %1863 = vmatprep.subr.bf16.mxu0 0
    %1864 = vmatpush1.bf16.msra.mxu0 0
    %1865 = vmatprep.subr.bf16.mxu0 0
    %1866 = vmatpush1.bf16.msra.mxu0 0
    %1867 = vmatprep.subr.bf16.mxu0 0
    %1868 = vmatpush1.bf16.msra.mxu0 0
    %1869 = vmatprep.subr.bf16.mxu0 0
    %1870 = vmatpush1.bf16.msra.mxu0 0
    %1871 = vmatprep.subr.bf16.mxu0 0
    %1872 = vmatpush1.bf16.msra.mxu0 0
    %1873 = vmatprep.mubr.bf16.mxu0 0
    %1874 = vmatmul.mubr.bf16.gmra.mrb[0].mxu0 %v1605
    %v1875 = vpop.f32.mrb[0].mxu0
    %v1876 = vadd.f32 0.0, %v1875
    %v1877 = vpop.f32.mrb[0].mxu0
    %v1878 = vadd.f32 0.0, %v1877
    %v1879 = vpop.f32.mrb[0].mxu0
    %v1880 = vadd.f32 0.0, %v1879
    %v1881 = vpop.f32.mrb[0].mxu0
    %v1882 = vadd.f32 0.0, %v1881
    %1883 = vdwg.mxu0
    %v1886 = vunpack.c.l.b16 %v1571
    %v1887 = vunpack.c.l.b16 %v1572
    %v1888 = vpack.c.b16 %v1887, %v1886
    %v1922 = vunpack.c.l.b16 %v1573
    %v1923 = vunpack.c.h.b16 %v1573
    %v1924 = vunpack.c.l.b16 %v1574
    %v1925 = vunpack.c.h.b16 %v1574
    %v1926 = vunpack.c.l.b16 %v1575
    %v1927 = vunpack.c.h.b16 %v1575
    %v1928 = vunpack.c.l.b16 %v1576
    %v1929 = vunpack.c.h.b16 %v1576
    %v1930 = vunpack.c.l.b16 %v1577
    %v1931 = vunpack.c.h.b16 %v1577
    %v1932 = vunpack.c.l.b16 %v1578
    %v1933 = vunpack.c.h.b16 %v1578
    %v1934 = vunpack.c.l.b16 %v1579
    %v1935 = vunpack.c.h.b16 %v1579
    %v1936 = vunpack.c.l.b16 %v1580
    %v1937 = vunpack.c.h.b16 %v1580
    %v1938 = vunpack.c.l.b16 %v1581
    %v1939 = vunpack.c.h.b16 %v1581
    %v1940 = vunpack.c.l.b16 %v1582
    %v1941 = vunpack.c.h.b16 %v1582
    %v1942 = vunpack.c.l.b16 %v1583
    %v1943 = vunpack.c.h.b16 %v1583
    %v1944 = vunpack.c.l.b16 %v1584
    %v1945 = vunpack.c.h.b16 %v1584
    %v1946 = vunpack.c.l.b16 %v1585
    %v1947 = vunpack.c.h.b16 %v1585
    %v1948 = vunpack.c.l.b16 %v1586
    %v1949 = vunpack.c.h.b16 %v1586
    %v1950 = vunpack.c.l.b16 %v1587
    %v1951 = vunpack.c.h.b16 %v1587
    %v1952 = vunpack.c.l.b16 %v1588
    %v1953 = vunpack.c.h.b16 %v1588
    %v1954 = vunpack.c.l.b16 %v1589
    %v1955 = vunpack.c.h.b16 %v1589
    %v1956 = vunpack.c.l.b16 %v1590
    %v1957 = vunpack.c.h.b16 %v1590
    %v1958 = vunpack.c.l.b16 %v1591
    %v1959 = vunpack.c.h.b16 %v1591
    %v1960 = vunpack.c.l.b16 %v1592
    %v1961 = vunpack.c.h.b16 %v1592
    %v1962 = vunpack.c.l.b16 %v1593
    %v1963 = vunpack.c.h.b16 %v1593
    %v1964 = vunpack.c.l.b16 %v1594
    %v1965 = vunpack.c.h.b16 %v1594
    %v1966 = vunpack.c.l.b16 %v1595
    %v1967 = vunpack.c.h.b16 %v1595
    %v1968 = vunpack.c.l.b16 %v1596
    %v1969 = vunpack.c.h.b16 %v1596
    %v1970 = vunpack.c.l.b16 %v1597
    %v1971 = vunpack.c.h.b16 %v1597
    %v1972 = vunpack.c.l.b16 %v1598
    %v1973 = vunpack.c.h.b16 %v1598
    %v1974 = vunpack.c.l.b16 %v1599
    %v1975 = vunpack.c.h.b16 %v1599
    %v1976 = vunpack.c.l.b16 %v1600
    %v1977 = vunpack.c.h.b16 %v1600
    %v1978 = vunpack.c.l.b16 %v1601
    %v1979 = vunpack.c.h.b16 %v1601
    %v1980 = vunpack.c.l.b16 %v1602
    %v1981 = vunpack.c.h.b16 %v1602
    %v1982 = vunpack.c.l.b16 %v1603
    %v1983 = vunpack.c.h.b16 %v1603
    %v1984 = vunpack.c.l.b16 %v1604
    %v1985 = vunpack.c.h.b16 %v1604
    %v1986 = vpack.c.b16 %v1926, %v1922
    %v1987 = vpack.c.b16 %v1927, %v1923
    %v1988 = vpack.c.b16 %v1928, %v1924
    %v1989 = vpack.c.b16 %v1929, %v1925
    %v1990 = vpack.c.b16 %v1934, %v1930
    %v1991 = vpack.c.b16 %v1935, %v1931
    %v1992 = vpack.c.b16 %v1936, %v1932
    %v1993 = vpack.c.b16 %v1937, %v1933
    %v1994 = vpack.c.b16 %v1942, %v1938
    %v1995 = vpack.c.b16 %v1943, %v1939
    %v1996 = vpack.c.b16 %v1944, %v1940
    %v1997 = vpack.c.b16 %v1945, %v1941
    %v1998 = vpack.c.b16 %v1950, %v1946
    %v1999 = vpack.c.b16 %v1951, %v1947
    %v2000 = vpack.c.b16 %v1952, %v1948
    %v2001 = vpack.c.b16 %v1953, %v1949
    %v2002 = vpack.c.b16 %v1958, %v1954
    %v2003 = vpack.c.b16 %v1959, %v1955
    %v2004 = vpack.c.b16 %v1960, %v1956
    %v2005 = vpack.c.b16 %v1961, %v1957
    %v2006 = vpack.c.b16 %v1966, %v1962
    %v2007 = vpack.c.b16 %v1967, %v1963
    %v2008 = vpack.c.b16 %v1968, %v1964
    %v2009 = vpack.c.b16 %v1969, %v1965
    %v2010 = vpack.c.b16 %v1974, %v1970
    %v2011 = vpack.c.b16 %v1975, %v1971
    %v2012 = vpack.c.b16 %v1976, %v1972
    %v2013 = vpack.c.b16 %v1977, %v1973
    %v2014 = vpack.c.b16 %v1982, %v1978
    %v2015 = vpack.c.b16 %v1983, %v1979
    %v2016 = vpack.c.b16 %v1984, %v1980
    %v2017 = vpack.c.b16 %v1985, %v1981
    %2050 = vmatprep.subr.bf16.mxu0 %v1987
    %2051 = vmatpush1.bf16.msra.mxu0 %v1986
    %2052 = vmatprep.subr.bf16.mxu0 %v1991
    %2053 = vmatpush1.bf16.msra.mxu0 %v1990
    %2054 = vmatprep.subr.bf16.mxu0 %v1995
    %2055 = vmatpush1.bf16.msra.mxu0 %v1994
    %2056 = vmatprep.subr.bf16.mxu0 %v1999
    %2057 = vmatpush1.bf16.msra.mxu0 %v1998
    %2058 = vmatprep.subr.bf16.mxu0 %v2003
    %2059 = vmatpush1.bf16.msra.mxu0 %v2002
    %2060 = vmatprep.subr.bf16.mxu0 %v2007
    %2061 = vmatpush1.bf16.msra.mxu0 %v2006
    %2062 = vmatprep.subr.bf16.mxu0 %v2011
    %2063 = vmatpush1.bf16.msra.mxu0 %v2010
    %2064 = vmatprep.subr.bf16.mxu0 %v2015
    %2065 = vmatpush1.bf16.msra.mxu0 %v2014
    %2066 = vmatprep.subr.bf16.mxu0 0
    %2067 = vmatpush1.bf16.msra.mxu0 0
    %2068 = vmatprep.subr.bf16.mxu0 0
    %2069 = vmatpush1.bf16.msra.mxu0 0
    %2070 = vmatprep.subr.bf16.mxu0 0
    %2071 = vmatpush1.bf16.msra.mxu0 0
    %2072 = vmatprep.subr.bf16.mxu0 0
    %2073 = vmatpush1.bf16.msra.mxu0 0
    %2074 = vmatprep.subr.bf16.mxu0 0
    %2075 = vmatpush1.bf16.msra.mxu0 0
    %2076 = vmatprep.subr.bf16.mxu0 0
    %2077 = vmatpush1.bf16.msra.mxu0 0
    %2078 = vmatprep.subr.bf16.mxu0 0
    %2079 = vmatpush1.bf16.msra.mxu0 0
    %2080 = vmatprep.subr.bf16.mxu0 0
    %2081 = vmatpush1.bf16.msra.mxu0 0
    %2082 = vmatprep.mubr.bf16.mxu0 0
    %2083 = vmatmul.mubr.bf16.gmra.mrb[0].mxu0 %v1888
    %v2084 = vpop.f32.mrb[0].mxu0
    %v2085 = vadd.f32 %v1833, %v2084
    %v2086 = vpop.f32.mrb[0].mxu0
    %v2087 = vadd.f32 %v1835, %v2086
    %v2088 = vpop.f32.mrb[0].mxu0
    %v2089 = vadd.f32 %v1837, %v2088
    %v2090 = vpop.f32.mrb[0].mxu0
    %v2091 = vadd.f32 %v1839, %v2090
    %2092 = vdwg.mxu0
    %2093 = vmatprep.subr.bf16.mxu0 %v1989
    %2094 = vmatpush1.bf16.msra.mxu0 %v1988
    %2095 = vmatprep.subr.bf16.mxu0 %v1993
    %2096 = vmatpush1.bf16.msra.mxu0 %v1992
    %2097 = vmatprep.subr.bf16.mxu0 %v1997
    %2098 = vmatpush1.bf16.msra.mxu0 %v1996
    %2099 = vmatprep.subr.bf16.mxu0 %v2001
    %2100 = vmatpush1.bf16.msra.mxu0 %v2000
    %2101 = vmatprep.subr.bf16.mxu0 %v2005
    %2102 = vmatpush1.bf16.msra.mxu0 %v2004
    %2103 = vmatprep.subr.bf16.mxu0 %v2009
    %2104 = vmatpush1.bf16.msra.mxu0 %v2008
    %2105 = vmatprep.subr.bf16.mxu0 %v2013
    %2106 = vmatpush1.bf16.msra.mxu0 %v2012
    %2107 = vmatprep.subr.bf16.mxu0 %v2017
    %2108 = vmatpush1.bf16.msra.mxu0 %v2016
    %2109 = vmatprep.subr.bf16.mxu0 0
    %2110 = vmatpush1.bf16.msra.mxu0 0
    %2111 = vmatprep.subr.bf16.mxu0 0
    %2112 = vmatpush1.bf16.msra.mxu0 0
    %2113 = vmatprep.subr.bf16.mxu0 0
    %2114 = vmatpush1.bf16.msra.mxu0 0
    %2115 = vmatprep.subr.bf16.mxu0 0
    %2116 = vmatpush1.bf16.msra.mxu0 0
    %2117 = vmatprep.subr.bf16.mxu0 0
    %2118 = vmatpush1.bf16.msra.mxu0 0
    %2119 = vmatprep.subr.bf16.mxu0 0
    %2120 = vmatpush1.bf16.msra.mxu0 0
    %2121 = vmatprep.subr.bf16.mxu0 0
    %2122 = vmatpush1.bf16.msra.mxu0 0
    %2123 = vmatprep.subr.bf16.mxu0 0
    %2124 = vmatpush1.bf16.msra.mxu0 0
    %2125 = vmatprep.mubr.bf16.mxu0 0
    %2126 = vmatmul.mubr.bf16.gmra.mrb[0].mxu0 %v1888
    %v2127 = vpop.f32.mrb[0].mxu0
    %v2128 = vadd.f32 %v1876, %v2127
    %v2129 = vpop.f32.mrb[0].mxu0
    %v2130 = vadd.f32 %v1878, %v2129
    %v2131 = vpop.f32.mrb[0].mxu0
    %v2132 = vadd.f32 %v1880, %v2131
    %v2133 = vpop.f32.mrb[0].mxu0
    %v2134 = vadd.f32 %v1882, %v2133
    %2135 = vdwg.mxu0
    %v2136 = vadd.f32 %v2085, %v58
    %v2137 = vadd.f32 %v2087, %v62
    %v2138 = vadd.f32 %v2128, %v66
    %v2139 = vadd.f32 %v2130, %v70
    %v2140 = vadd.f32 %v2089, %v58
    %v2141 = vadd.f32 %v2091, %v62
    %v2142 = vadd.f32 %v2132, %v66
    %v2143 = vadd.f32 %v2134, %v70
    %v2144 = vmul.f32 %v2136, 0.5
    %v2145 = vmul.f32 %v2140, 0.5
    %v2146 = vtanh.pop %v2144
    %v2147 = vtanh.pop %v2145
    %v2148 = vadd.f32 %v2146, 1.0
    %v2149 = vadd.f32 %v2147, 1.0
    %v2150 = vmul.f32 %v2148, 0.5
    %v2151 = vmul.f32 %v2149, 0.5
    %v2152 = vmul.f32 %v2137, 0.5
    %v2153 = vmul.f32 %v2141, 0.5
    %v2154 = vtanh.pop %v2152
    %v2155 = vtanh.pop %v2153
    %v2156 = vadd.f32 %v2154, 1.0
    %v2157 = vadd.f32 %v2155, 1.0
    %v2158 = vmul.f32 %v2156, 0.5
    %v2159 = vmul.f32 %v2157, 0.5
    %v2160 = vtanh.pop %v2138
    %v2161 = vtanh.pop %v2142
    %v2162 = vmul.f32 %v2139, 0.5
    %v2163 = vmul.f32 %v2143, 0.5
    %v2164 = vtanh.pop %v2162
    %v2165 = vtanh.pop %v2163
    %v2166 = vadd.f32 %v2164, 1.0
    %v2167 = vadd.f32 %v2165, 1.0
    %v2168 = vmul.f32 %v2166, 0.5
    %v2169 = vmul.f32 %v2167, 0.5
    %v2170 = vld [vmem:[#allocation3] sm:$0xff]
    %v2171 = vld [vmem:[#allocation3 + $0x8] sm:$0xff]
    %v2172 = vmul.f32 %v2158, %v2170
    %v2173 = vmul.f32 %v2159, %v2171
    %v2174 = vmul.f32 %v2150, %v2160
    %v2175 = vmul.f32 %v2151, %v2161
    %v2176 = vadd.f32 %v2172, %v2174
    %v2177 = vadd.f32 %v2173, %v2175
    %v2178 = vtanh.pop %v2176
    %v2179 = vtanh.pop %v2177
    %v2180 = vmul.f32 %v2168, %v2178
    %v2181 = vmul.f32 %v2169, %v2179
    %2182 = vst [vmem:[#allocation3] sm:$0xff] %v2176
    %2183 = vst [vmem:[#allocation3 + $0x8] sm:$0xff] %v2177
    %v2184 = vpack.c.bf16 %v2181, %v2180
    %2185 = vst [vmem:[#allocation2] sm:$0xff] %v2184
    %v2188 = vcombine.high %v2180, %v2180
    %v2190 = vunpack.c.l.s4 1966171168
    %v2191 = vunpack.c.0.s8 %v2190
    %v2192 = vlaneseq
    %v2193 = vshrl.u32 %v2192, 7
    %v2194 = vsub.s32 %v2191, %v2193
    %v2195 = vrot.slane %v2180, %v2194
    %v2197 = vunpack.c.l.s4 1966171168
    %v2198 = vunpack.c.0.s8 %v2197
    %v2199 = vlaneseq
    %v2200 = vshrl.u32 %v2199, 7
    %v2201 = vsub.s32 %v2198, %v2200
    %v2202 = vrot.slane %v2188, %v2201
    %v2203 = vcombine.high %v2195, %v2195
    %v2204 = vcombine.high %v2202, %v2202
    %v2206 = vunpack.c.l.s4 1966171168
    %v2207 = vunpack.c.0.s8 %v2206
    %v2208 = vlaneseq
    %v2209 = vshrl.u32 %v2208, 7
    %v2210 = vsub.s32 %v2207, %v2209
    %v2211 = vrot.slane %v2195, %v2210
    %v2213 = vunpack.c.l.s4 1966171168
    %v2214 = vunpack.c.0.s8 %v2213
    %v2215 = vlaneseq
    %v2216 = vshrl.u32 %v2215, 7
    %v2217 = vsub.s32 %v2214, %v2216
    %v2218 = vrot.slane %v2202, %v2217
    %v2220 = vunpack.c.l.s4 1966171168
    %v2221 = vunpack.c.0.s8 %v2220
    %v2222 = vlaneseq
    %v2223 = vshrl.u32 %v2222, 7
    %v2224 = vsub.s32 %v2221, %v2223
    %v2225 = vrot.slane %v2203, %v2224
    %v2227 = vunpack.c.l.s4 1966171168
    %v2228 = vunpack.c.0.s8 %v2227
    %v2229 = vlaneseq
    %v2230 = vshrl.u32 %v2229, 7
    %v2231 = vsub.s32 %v2228, %v2230
    %v2232 = vrot.slane %v2204, %v2231
    %v2233 = vcombine.high %v2211, %v2211
    %v2234 = vcombine.high %v2218, %v2218
    %v2235 = vcombine.high %v2225, %v2225
    %v2236 = vcombine.high %v2232, %v2232
    %v2237 = vcombine.high %v2181, %v2181
    %v2239 = vunpack.c.l.s4 1966171168
    %v2240 = vunpack.c.0.s8 %v2239
    %v2241 = vlaneseq
    %v2242 = vshrl.u32 %v2241, 7
    %v2243 = vsub.s32 %v2240, %v2242
    %v2244 = vrot.slane %v2181, %v2243
    %v2246 = vunpack.c.l.s4 1966171168
    %v2247 = vunpack.c.0.s8 %v2246
    %v2248 = vlaneseq
    %v2249 = vshrl.u32 %v2248, 7
    %v2250 = vsub.s32 %v2247, %v2249
    %v2251 = vrot.slane %v2237, %v2250
    %v2252 = vcombine.high %v2244, %v2244
    %v2253 = vcombine.high %v2251, %v2251
    %v2255 = vunpack.c.l.s4 1966171168
    %v2256 = vunpack.c.0.s8 %v2255
    %v2257 = vlaneseq
    %v2258 = vshrl.u32 %v2257, 7
    %v2259 = vsub.s32 %v2256, %v2258
    %v2260 = vrot.slane %v2244, %v2259
    %v2262 = vunpack.c.l.s4 1966171168
    %v2263 = vunpack.c.0.s8 %v2262
    %v2264 = vlaneseq
    %v2265 = vshrl.u32 %v2264, 7
    %v2266 = vsub.s32 %v2263, %v2265
    %v2267 = vrot.slane %v2251, %v2266
    %v2269 = vunpack.c.l.s4 1966171168
    %v2270 = vunpack.c.0.s8 %v2269
    %v2271 = vlaneseq
    %v2272 = vshrl.u32 %v2271, 7
    %v2273 = vsub.s32 %v2270, %v2272
    %v2274 = vrot.slane %v2252, %v2273
    %v2276 = vunpack.c.l.s4 1966171168
    %v2277 = vunpack.c.0.s8 %v2276
    %v2278 = vlaneseq
    %v2279 = vshrl.u32 %v2278, 7
    %v2280 = vsub.s32 %v2277, %v2279
    %v2281 = vrot.slane %v2253, %v2280
    %v2282 = vcombine.high %v2260, %v2260
    %v2283 = vcombine.high %v2267, %v2267
    %v2284 = vcombine.high %v2274, %v2274
    %v2285 = vcombine.high %v2281, %v2281
    %2302 = vst [vmem:[%s4 + $0x2] sm:$0x1] %v2211
    %2303 = vst [vmem:[%s4 + $0xa] sm:$0x1] %v2225
    %2304 = vst [vmem:[%s4 + $0x12] sm:$0x1] %v2233
    %2305 = vst [vmem:[%s4 + $0x1a] sm:$0x1] %v2235
    %2306 = vst [vmem:[%s4 + $0x22] sm:$0x1] %v2218
    %2307 = vst [vmem:[%s4 + $0x2a] sm:$0x1] %v2232
    %2308 = vst [vmem:[%s4 + $0x32] sm:$0x1] %v2234
    %2309 = vst [vmem:[%s4 + $0x3a] sm:$0x1] %v2236
    %2310 = vst [vmem:[%s4 + $0x42] sm:$0x1] %v2260
    %2311 = vst [vmem:[%s4 + $0x4a] sm:$0x1] %v2274
    %2312 = vst [vmem:[%s4 + $0x52] sm:$0x1] %v2282
    %2313 = vst [vmem:[%s4 + $0x5a] sm:$0x1] %v2284
    %2314 = vst [vmem:[%s4 + $0x62] sm:$0x1] %v2267
    %2315 = vst [vmem:[%s4 + $0x6a] sm:$0x1] %v2281
    %2316 = vst [vmem:[%s4 + $0x72] sm:$0x1] %v2283
    %2317 = vst [vmem:[%s4 + $0x7a] sm:$0x1] %v2285
    %s2318 = scalar_lea.vmem %s0, 24
    %v2319 = vld [vmem:[%s2318] sm:$0xf]
    %v2320 = vld [vmem:[%s2318 + $0x4] sm:$0xf]
    %v2321 = vld [vmem:[#allocation4] sm:$0xff]
    %v2322 = vld [vmem:[#allocation4 + $0x8] sm:$0xff]
    %v2323 = vld [vmem:[#allocation4 + $0x10] sm:$0xff]
    %v2324 = vld [vmem:[#allocation4 + $0x18] sm:$0xff]
    %v2325 = vld [vmem:[#allocation4 + $0x20] sm:$0xff]
    %v2326 = vld [vmem:[#allocation4 + $0x28] sm:$0xff]
    %v2327 = vld [vmem:[#allocation4 + $0x30] sm:$0xff]
    %v2328 = vld [vmem:[#allocation4 + $0x38] sm:$0xff]
    %v2329 = vld [vmem:[#allocation4 + $0x40] sm:$0xff]
    %v2330 = vld [vmem:[#allocation4 + $0x48] sm:$0xff]
    %v2331 = vld [vmem:[#allocation4 + $0x50] sm:$0xff]
    %v2332 = vld [vmem:[#allocation4 + $0x58] sm:$0xff]
    %v2333 = vld [vmem:[#allocation4 + $0x60] sm:$0xff]
    %v2334 = vld [vmem:[#allocation4 + $0x68] sm:$0xff]
    %v2335 = vld [vmem:[#allocation4 + $0x70] sm:$0xff]
    %v2336 = vld [vmem:[#allocation4 + $0x78] sm:$0xff]
    %v2337 = vld [vmem:[#allocation4 + $0x80] sm:$0xff]
    %v2338 = vld [vmem:[#allocation4 + $0x88] sm:$0xff]
    %v2339 = vld [vmem:[#allocation4 + $0x90] sm:$0xff]
    %v2340 = vld [vmem:[#allocation4 + $0x98] sm:$0xff]
    %v2341 = vld [vmem:[#allocation4 + $0xa0] sm:$0xff]
    %v2342 = vld [vmem:[#allocation4 + $0xa8] sm:$0xff]
    %v2343 = vld [vmem:[#allocation4 + $0xb0] sm:$0xff]
    %v2344 = vld [vmem:[#allocation4 + $0xb8] sm:$0xff]
    %v2345 = vld [vmem:[#allocation4 + $0xc0] sm:$0xff]
    %v2346 = vld [vmem:[#allocation4 + $0xc8] sm:$0xff]
    %v2347 = vld [vmem:[#allocation4 + $0xd0] sm:$0xff]
    %v2348 = vld [vmem:[#allocation4 + $0xd8] sm:$0xff]
    %v2349 = vld [vmem:[#allocation4 + $0xe0] sm:$0xff]
    %v2350 = vld [vmem:[#allocation4 + $0xe8] sm:$0xff]
    %v2351 = vld [vmem:[#allocation4 + $0xf0] sm:$0xff]
    %v2352 = vld [vmem:[#allocation4 + $0xf8] sm:$0xff]
    %v2353 = vld [vmem:[#allocation2] sm:$0xff]
    %v2354 = vld [vmem:[#allocation6] sm:$0xff]
    %v2355 = vld [vmem:[#allocation6 + $0x8] sm:$0xff]
    %v2356 = vld [vmem:[#allocation6 + $0x10] sm:$0xff]
    %v2357 = vld [vmem:[#allocation6 + $0x18] sm:$0xff]
    %v2358 = vld [vmem:[#allocation6 + $0x20] sm:$0xff]
    %v2359 = vld [vmem:[#allocation6 + $0x28] sm:$0xff]
    %v2360 = vld [vmem:[#allocation6 + $0x30] sm:$0xff]
    %v2361 = vld [vmem:[#allocation6 + $0x38] sm:$0xff]
    %v2362 = vld [vmem:[#allocation6 + $0x40] sm:$0xff]
    %v2363 = vld [vmem:[#allocation6 + $0x48] sm:$0xff]
    %v2364 = vld [vmem:[#allocation6 + $0x50] sm:$0xff]
    %v2365 = vld [vmem:[#allocation6 + $0x58] sm:$0xff]
    %v2366 = vld [vmem:[#allocation6 + $0x60] sm:$0xff]
    %v2367 = vld [vmem:[#allocation6 + $0x68] sm:$0xff]
    %v2368 = vld [vmem:[#allocation6 + $0x70] sm:$0xff]
    %v2369 = vld [vmem:[#allocation6 + $0x78] sm:$0xff]
    %v2370 = vld [vmem:[#allocation6 + $0x80] sm:$0xff]
    %v2371 = vld [vmem:[#allocation6 + $0x88] sm:$0xff]
    %v2372 = vld [vmem:[#allocation6 + $0x90] sm:$0xff]
    %v2373 = vld [vmem:[#allocation6 + $0x98] sm:$0xff]
    %v2374 = vld [vmem:[#allocation6 + $0xa0] sm:$0xff]
    %v2375 = vld [vmem:[#allocation6 + $0xa8] sm:$0xff]
    %v2376 = vld [vmem:[#allocation6 + $0xb0] sm:$0xff]
    %v2377 = vld [vmem:[#allocation6 + $0xb8] sm:$0xff]
    %v2378 = vld [vmem:[#allocation6 + $0xc0] sm:$0xff]
    %v2379 = vld [vmem:[#allocation6 + $0xc8] sm:$0xff]
    %v2380 = vld [vmem:[#allocation6 + $0xd0] sm:$0xff]
    %v2381 = vld [vmem:[#allocation6 + $0xd8] sm:$0xff]
    %v2382 = vld [vmem:[#allocation6 + $0xe0] sm:$0xff]
    %v2383 = vld [vmem:[#allocation6 + $0xe8] sm:$0xff]
    %v2384 = vld [vmem:[#allocation6 + $0xf0] sm:$0xff]
    %v2385 = vld [vmem:[#allocation6 + $0xf8] sm:$0xff]
    %v2418 = vunpack.c.l.b16 %v2354
    %v2419 = vunpack.c.h.b16 %v2354
    %v2420 = vunpack.c.l.b16 %v2355
    %v2421 = vunpack.c.h.b16 %v2355
    %v2422 = vunpack.c.l.b16 %v2356
    %v2423 = vunpack.c.h.b16 %v2356
    %v2424 = vunpack.c.l.b16 %v2357
    %v2425 = vunpack.c.h.b16 %v2357
    %v2426 = vunpack.c.l.b16 %v2358
    %v2427 = vunpack.c.h.b16 %v2358
    %v2428 = vunpack.c.l.b16 %v2359
    %v2429 = vunpack.c.h.b16 %v2359
    %v2430 = vunpack.c.l.b16 %v2360
    %v2431 = vunpack.c.h.b16 %v2360
    %v2432 = vunpack.c.l.b16 %v2361
    %v2433 = vunpack.c.h.b16 %v2361
    %v2434 = vunpack.c.l.b16 %v2362
    %v2435 = vunpack.c.h.b16 %v2362
    %v2436 = vunpack.c.l.b16 %v2363
    %v2437 = vunpack.c.h.b16 %v2363
    %v2438 = vunpack.c.l.b16 %v2364
    %v2439 = vunpack.c.h.b16 %v2364
    %v2440 = vunpack.c.l.b16 %v2365
    %v2441 = vunpack.c.h.b16 %v2365
    %v2442 = vunpack.c.l.b16 %v2366
    %v2443 = vunpack.c.h.b16 %v2366
    %v2444 = vunpack.c.l.b16 %v2367
    %v2445 = vunpack.c.h.b16 %v2367
    %v2446 = vunpack.c.l.b16 %v2368
    %v2447 = vunpack.c.h.b16 %v2368
    %v2448 = vunpack.c.l.b16 %v2369
    %v2449 = vunpack.c.h.b16 %v2369
    %v2450 = vunpack.c.l.b16 %v2370
    %v2451 = vunpack.c.h.b16 %v2370
    %v2452 = vunpack.c.l.b16 %v2371
    %v2453 = vunpack.c.h.b16 %v2371
    %v2454 = vunpack.c.l.b16 %v2372
    %v2455 = vunpack.c.h.b16 %v2372
    %v2456 = vunpack.c.l.b16 %v2373
    %v2457 = vunpack.c.h.b16 %v2373
    %v2458 = vunpack.c.l.b16 %v2374
    %v2459 = vunpack.c.h.b16 %v2374
    %v2460 = vunpack.c.l.b16 %v2375
    %v2461 = vunpack.c.h.b16 %v2375
    %v2462 = vunpack.c.l.b16 %v2376
    %v2463 = vunpack.c.h.b16 %v2376
    %v2464 = vunpack.c.l.b16 %v2377
    %v2465 = vunpack.c.h.b16 %v2377
    %v2466 = vunpack.c.l.b16 %v2378
    %v2467 = vunpack.c.h.b16 %v2378
    %v2468 = vunpack.c.l.b16 %v2379
    %v2469 = vunpack.c.h.b16 %v2379
    %v2470 = vunpack.c.l.b16 %v2380
    %v2471 = vunpack.c.h.b16 %v2380
    %v2472 = vunpack.c.l.b16 %v2381
    %v2473 = vunpack.c.h.b16 %v2381
    %v2474 = vunpack.c.l.b16 %v2382
    %v2475 = vunpack.c.h.b16 %v2382
    %v2476 = vunpack.c.l.b16 %v2383
    %v2477 = vunpack.c.h.b16 %v2383
    %v2478 = vunpack.c.l.b16 %v2384
    %v2479 = vunpack.c.h.b16 %v2384
    %v2480 = vunpack.c.l.b16 %v2385
    %v2481 = vunpack.c.h.b16 %v2385
    %v2482 = vpack.c.b16 %v2422, %v2418
    %v2483 = vpack.c.b16 %v2423, %v2419
    %v2484 = vpack.c.b16 %v2424, %v2420
    %v2485 = vpack.c.b16 %v2425, %v2421
    %v2486 = vpack.c.b16 %v2430, %v2426
    %v2487 = vpack.c.b16 %v2431, %v2427
    %v2488 = vpack.c.b16 %v2432, %v2428
    %v2489 = vpack.c.b16 %v2433, %v2429
    %v2490 = vpack.c.b16 %v2438, %v2434
    %v2491 = vpack.c.b16 %v2439, %v2435
    %v2492 = vpack.c.b16 %v2440, %v2436
    %v2493 = vpack.c.b16 %v2441, %v2437
    %v2494 = vpack.c.b16 %v2446, %v2442
    %v2495 = vpack.c.b16 %v2447, %v2443
    %v2496 = vpack.c.b16 %v2448, %v2444
    %v2497 = vpack.c.b16 %v2449, %v2445
    %v2498 = vpack.c.b16 %v2454, %v2450
    %v2499 = vpack.c.b16 %v2455, %v2451
    %v2500 = vpack.c.b16 %v2456, %v2452
    %v2501 = vpack.c.b16 %v2457, %v2453
    %v2502 = vpack.c.b16 %v2462, %v2458
    %v2503 = vpack.c.b16 %v2463, %v2459
    %v2504 = vpack.c.b16 %v2464, %v2460
    %v2505 = vpack.c.b16 %v2465, %v2461
    %v2506 = vpack.c.b16 %v2470, %v2466
    %v2507 = vpack.c.b16 %v2471, %v2467
    %v2508 = vpack.c.b16 %v2472, %v2468
    %v2509 = vpack.c.b16 %v2473, %v2469
    %v2510 = vpack.c.b16 %v2478, %v2474
    %v2511 = vpack.c.b16 %v2479, %v2475
    %v2512 = vpack.c.b16 %v2480, %v2476
    %v2513 = vpack.c.b16 %v2481, %v2477
    %2546 = vmatprep.subr.bf16.mxu0 %v2483
    %2547 = vmatpush1.bf16.msra.mxu0 %v2482
    %2548 = vmatprep.subr.bf16.mxu0 %v2487
    %2549 = vmatpush1.bf16.msra.mxu0 %v2486
    %2550 = vmatprep.subr.bf16.mxu0 %v2491
    %2551 = vmatpush1.bf16.msra.mxu0 %v2490
    %2552 = vmatprep.subr.bf16.mxu0 %v2495
    %2553 = vmatpush1.bf16.msra.mxu0 %v2494
    %2554 = vmatprep.subr.bf16.mxu0 %v2499
    %2555 = vmatpush1.bf16.msra.mxu0 %v2498
    %2556 = vmatprep.subr.bf16.mxu0 %v2503
    %2557 = vmatpush1.bf16.msra.mxu0 %v2502
    %2558 = vmatprep.subr.bf16.mxu0 %v2507
    %2559 = vmatpush1.bf16.msra.mxu0 %v2506
    %2560 = vmatprep.subr.bf16.mxu0 %v2511
    %2561 = vmatpush1.bf16.msra.mxu0 %v2510
    %2562 = vmatprep.subr.bf16.mxu0 0
    %2563 = vmatpush1.bf16.msra.mxu0 0
    %2564 = vmatprep.subr.bf16.mxu0 0
    %2565 = vmatpush1.bf16.msra.mxu0 0
    %2566 = vmatprep.subr.bf16.mxu0 0
    %2567 = vmatpush1.bf16.msra.mxu0 0
    %2568 = vmatprep.subr.bf16.mxu0 0
    %2569 = vmatpush1.bf16.msra.mxu0 0
    %2570 = vmatprep.subr.bf16.mxu0 0
    %2571 = vmatpush1.bf16.msra.mxu0 0
    %2572 = vmatprep.subr.bf16.mxu0 0
    %2573 = vmatpush1.bf16.msra.mxu0 0
    %2574 = vmatprep.subr.bf16.mxu0 0
    %2575 = vmatpush1.bf16.msra.mxu0 0
    %2576 = vmatprep.subr.bf16.mxu0 0
    %2577 = vmatpush1.bf16.msra.mxu0 0
    %2578 = vmatprep.mubr.bf16.mxu0 0
    %2579 = vmatmul.mubr.bf16.gmra.mrb[0].mxu0 %v2353
    %v2580 = vpop.f32.mrb[0].mxu0
    %v2581 = vadd.f32 0.0, %v2580
    %v2582 = vpop.f32.mrb[0].mxu0
    %v2583 = vadd.f32 0.0, %v2582
    %v2584 = vpop.f32.mrb[0].mxu0
    %v2585 = vadd.f32 0.0, %v2584
    %v2586 = vpop.f32.mrb[0].mxu0
    %v2587 = vadd.f32 0.0, %v2586
    %2588 = vdwg.mxu0
    %2589 = vmatprep.subr.bf16.mxu0 %v2485
    %2590 = vmatpush1.bf16.msra.mxu0 %v2484
    %2591 = vmatprep.subr.bf16.mxu0 %v2489
    %2592 = vmatpush1.bf16.msra.mxu0 %v2488
    %2593 = vmatprep.subr.bf16.mxu0 %v2493
    %2594 = vmatpush1.bf16.msra.mxu0 %v2492
    %2595 = vmatprep.subr.bf16.mxu0 %v2497
    %2596 = vmatpush1.bf16.msra.mxu0 %v2496
    %2597 = vmatprep.subr.bf16.mxu0 %v2501
    %2598 = vmatpush1.bf16.msra.mxu0 %v2500
    %2599 = vmatprep.subr.bf16.mxu0 %v2505
    %2600 = vmatpush1.bf16.msra.mxu0 %v2504
    %2601 = vmatprep.subr.bf16.mxu0 %v2509
    %2602 = vmatpush1.bf16.msra.mxu0 %v2508
    %2603 = vmatprep.subr.bf16.mxu0 %v2513
    %2604 = vmatpush1.bf16.msra.mxu0 %v2512
    %2605 = vmatprep.subr.bf16.mxu0 0
    %2606 = vmatpush1.bf16.msra.mxu0 0
    %2607 = vmatprep.subr.bf16.mxu0 0
    %2608 = vmatpush1.bf16.msra.mxu0 0
    %2609 = vmatprep.subr.bf16.mxu0 0
    %2610 = vmatpush1.bf16.msra.mxu0 0
    %2611 = vmatprep.subr.bf16.mxu0 0
    %2612 = vmatpush1.bf16.msra.mxu0 0
    %2613 = vmatprep.subr.bf16.mxu0 0
    %2614 = vmatpush1.bf16.msra.mxu0 0
    %2615 = vmatprep.subr.bf16.mxu0 0
    %2616 = vmatpush1.bf16.msra.mxu0 0
    %2617 = vmatprep.subr.bf16.mxu0 0
    %2618 = vmatpush1.bf16.msra.mxu0 0
    %2619 = vmatprep.subr.bf16.mxu0 0
    %2620 = vmatpush1.bf16.msra.mxu0 0
    %2621 = vmatprep.mubr.bf16.mxu0 0
    %2622 = vmatmul.mubr.bf16.gmra.mrb[0].mxu0 %v2353
    %v2623 = vpop.f32.mrb[0].mxu0
    %v2624 = vadd.f32 0.0, %v2623
    %v2625 = vpop.f32.mrb[0].mxu0
    %v2626 = vadd.f32 0.0, %v2625
    %v2627 = vpop.f32.mrb[0].mxu0
    %v2628 = vadd.f32 0.0, %v2627
    %v2629 = vpop.f32.mrb[0].mxu0
    %v2630 = vadd.f32 0.0, %v2629
    %2631 = vdwg.mxu0
    %v2634 = vunpack.c.l.b16 %v2319
    %v2635 = vunpack.c.l.b16 %v2320
    %v2636 = vpack.c.b16 %v2635, %v2634
    %v2670 = vunpack.c.l.b16 %v2321
    %v2671 = vunpack.c.h.b16 %v2321
    %v2672 = vunpack.c.l.b16 %v2322
    %v2673 = vunpack.c.h.b16 %v2322
    %v2674 = vunpack.c.l.b16 %v2323
    %v2675 = vunpack.c.h.b16 %v2323
    %v2676 = vunpack.c.l.b16 %v2324
    %v2677 = vunpack.c.h.b16 %v2324
    %v2678 = vunpack.c.l.b16 %v2325
    %v2679 = vunpack.c.h.b16 %v2325
    %v2680 = vunpack.c.l.b16 %v2326
    %v2681 = vunpack.c.h.b16 %v2326
    %v2682 = vunpack.c.l.b16 %v2327
    %v2683 = vunpack.c.h.b16 %v2327
    %v2684 = vunpack.c.l.b16 %v2328
    %v2685 = vunpack.c.h.b16 %v2328
    %v2686 = vunpack.c.l.b16 %v2329
    %v2687 = vunpack.c.h.b16 %v2329
    %v2688 = vunpack.c.l.b16 %v2330
    %v2689 = vunpack.c.h.b16 %v2330
    %v2690 = vunpack.c.l.b16 %v2331
    %v2691 = vunpack.c.h.b16 %v2331
    %v2692 = vunpack.c.l.b16 %v2332
    %v2693 = vunpack.c.h.b16 %v2332
    %v2694 = vunpack.c.l.b16 %v2333
    %v2695 = vunpack.c.h.b16 %v2333
    %v2696 = vunpack.c.l.b16 %v2334
    %v2697 = vunpack.c.h.b16 %v2334
    %v2698 = vunpack.c.l.b16 %v2335
    %v2699 = vunpack.c.h.b16 %v2335
    %v2700 = vunpack.c.l.b16 %v2336
    %v2701 = vunpack.c.h.b16 %v2336
    %v2702 = vunpack.c.l.b16 %v2337
    %v2703 = vunpack.c.h.b16 %v2337
    %v2704 = vunpack.c.l.b16 %v2338
    %v2705 = vunpack.c.h.b16 %v2338
    %v2706 = vunpack.c.l.b16 %v2339
    %v2707 = vunpack.c.h.b16 %v2339
    %v2708 = vunpack.c.l.b16 %v2340
    %v2709 = vunpack.c.h.b16 %v2340
    %v2710 = vunpack.c.l.b16 %v2341
    %v2711 = vunpack.c.h.b16 %v2341
    %v2712 = vunpack.c.l.b16 %v2342
    %v2713 = vunpack.c.h.b16 %v2342
    %v2714 = vunpack.c.l.b16 %v2343
    %v2715 = vunpack.c.h.b16 %v2343
    %v2716 = vunpack.c.l.b16 %v2344
    %v2717 = vunpack.c.h.b16 %v2344
    %v2718 = vunpack.c.l.b16 %v2345
    %v2719 = vunpack.c.h.b16 %v2345
    %v2720 = vunpack.c.l.b16 %v2346
    %v2721 = vunpack.c.h.b16 %v2346
    %v2722 = vunpack.c.l.b16 %v2347
    %v2723 = vunpack.c.h.b16 %v2347
    %v2724 = vunpack.c.l.b16 %v2348
    %v2725 = vunpack.c.h.b16 %v2348
    %v2726 = vunpack.c.l.b16 %v2349
    %v2727 = vunpack.c.h.b16 %v2349
    %v2728 = vunpack.c.l.b16 %v2350
    %v2729 = vunpack.c.h.b16 %v2350
    %v2730 = vunpack.c.l.b16 %v2351
    %v2731 = vunpack.c.h.b16 %v2351
    %v2732 = vunpack.c.l.b16 %v2352
    %v2733 = vunpack.c.h.b16 %v2352
    %v2734 = vpack.c.b16 %v2674, %v2670
    %v2735 = vpack.c.b16 %v2675, %v2671
    %v2736 = vpack.c.b16 %v2676, %v2672
    %v2737 = vpack.c.b16 %v2677, %v2673
    %v2738 = vpack.c.b16 %v2682, %v2678
    %v2739 = vpack.c.b16 %v2683, %v2679
    %v2740 = vpack.c.b16 %v2684, %v2680
    %v2741 = vpack.c.b16 %v2685, %v2681
    %v2742 = vpack.c.b16 %v2690, %v2686
    %v2743 = vpack.c.b16 %v2691, %v2687
    %v2744 = vpack.c.b16 %v2692, %v2688
    %v2745 = vpack.c.b16 %v2693, %v2689
    %v2746 = vpack.c.b16 %v2698, %v2694
    %v2747 = vpack.c.b16 %v2699, %v2695
    %v2748 = vpack.c.b16 %v2700, %v2696
    %v2749 = vpack.c.b16 %v2701, %v2697
    %v2750 = vpack.c.b16 %v2706, %v2702
    %v2751 = vpack.c.b16 %v2707, %v2703
    %v2752 = vpack.c.b16 %v2708, %v2704
    %v2753 = vpack.c.b16 %v2709, %v2705
    %v2754 = vpack.c.b16 %v2714, %v2710
    %v2755 = vpack.c.b16 %v2715, %v2711
    %v2756 = vpack.c.b16 %v2716, %v2712
    %v2757 = vpack.c.b16 %v2717, %v2713
    %v2758 = vpack.c.b16 %v2722, %v2718
    %v2759 = vpack.c.b16 %v2723, %v2719
    %v2760 = vpack.c.b16 %v2724, %v2720
    %v2761 = vpack.c.b16 %v2725, %v2721
    %v2762 = vpack.c.b16 %v2730, %v2726
    %v2763 = vpack.c.b16 %v2731, %v2727
    %v2764 = vpack.c.b16 %v2732, %v2728
    %v2765 = vpack.c.b16 %v2733, %v2729
    %2798 = vmatprep.subr.bf16.mxu0 %v2735
    %2799 = vmatpush1.bf16.msra.mxu0 %v2734
    %2800 = vmatprep.subr.bf16.mxu0 %v2739
    %2801 = vmatpush1.bf16.msra.mxu0 %v2738
    %2802 = vmatprep.subr.bf16.mxu0 %v2743
    %2803 = vmatpush1.bf16.msra.mxu0 %v2742
    %2804 = vmatprep.subr.bf16.mxu0 %v2747
    %2805 = vmatpush1.bf16.msra.mxu0 %v2746
    %2806 = vmatprep.subr.bf16.mxu0 %v2751
    %2807 = vmatpush1.bf16.msra.mxu0 %v2750
    %2808 = vmatprep.subr.bf16.mxu0 %v2755
    %2809 = vmatpush1.bf16.msra.mxu0 %v2754
    %2810 = vmatprep.subr.bf16.mxu0 %v2759
    %2811 = vmatpush1.bf16.msra.mxu0 %v2758
    %2812 = vmatprep.subr.bf16.mxu0 %v2763
    %2813 = vmatpush1.bf16.msra.mxu0 %v2762
    %2814 = vmatprep.subr.bf16.mxu0 0
    %2815 = vmatpush1.bf16.msra.mxu0 0
    %2816 = vmatprep.subr.bf16.mxu0 0
    %2817 = vmatpush1.bf16.msra.mxu0 0
    %2818 = vmatprep.subr.bf16.mxu0 0
    %2819 = vmatpush1.bf16.msra.mxu0 0
    %2820 = vmatprep.subr.bf16.mxu0 0
    %2821 = vmatpush1.bf16.msra.mxu0 0
    %2822 = vmatprep.subr.bf16.mxu0 0
    %2823 = vmatpush1.bf16.msra.mxu0 0
    %2824 = vmatprep.subr.bf16.mxu0 0
    %2825 = vmatpush1.bf16.msra.mxu0 0
    %2826 = vmatprep.subr.bf16.mxu0 0
    %2827 = vmatpush1.bf16.msra.mxu0 0
    %2828 = vmatprep.subr.bf16.mxu0 0
    %2829 = vmatpush1.bf16.msra.mxu0 0
    %2830 = vmatprep.mubr.bf16.mxu0 0
    %2831 = vmatmul.mubr.bf16.gmra.mrb[0].mxu0 %v2636
    %v2832 = vpop.f32.mrb[0].mxu0
    %v2833 = vadd.f32 %v2581, %v2832
    %v2834 = vpop.f32.mrb[0].mxu0
    %v2835 = vadd.f32 %v2583, %v2834
    %v2836 = vpop.f32.mrb[0].mxu0
    %v2837 = vadd.f32 %v2585, %v2836
    %v2838 = vpop.f32.mrb[0].mxu0
    %v2839 = vadd.f32 %v2587, %v2838
    %2840 = vdwg.mxu0
    %2841 = vmatprep.subr.bf16.mxu0 %v2737
    %2842 = vmatpush1.bf16.msra.mxu0 %v2736
    %2843 = vmatprep.subr.bf16.mxu0 %v2741
    %2844 = vmatpush1.bf16.msra.mxu0 %v2740
    %2845 = vmatprep.subr.bf16.mxu0 %v2745
    %2846 = vmatpush1.bf16.msra.mxu0 %v2744
    %2847 = vmatprep.subr.bf16.mxu0 %v2749
    %2848 = vmatpush1.bf16.msra.mxu0 %v2748
    %2849 = vmatprep.subr.bf16.mxu0 %v2753
    %2850 = vmatpush1.bf16.msra.mxu0 %v2752
    %2851 = vmatprep.subr.bf16.mxu0 %v2757
    %2852 = vmatpush1.bf16.msra.mxu0 %v2756
    %2853 = vmatprep.subr.bf16.mxu0 %v2761
    %2854 = vmatpush1.bf16.msra.mxu0 %v2760
    %2855 = vmatprep.subr.bf16.mxu0 %v2765
    %2856 = vmatpush1.bf16.msra.mxu0 %v2764
    %2857 = vmatprep.subr.bf16.mxu0 0
    %2858 = vmatpush1.bf16.msra.mxu0 0
    %2859 = vmatprep.subr.bf16.mxu0 0
    %2860 = vmatpush1.bf16.msra.mxu0 0
    %2861 = vmatprep.subr.bf16.mxu0 0
    %2862 = vmatpush1.bf16.msra.mxu0 0
    %2863 = vmatprep.subr.bf16.mxu0 0
    %2864 = vmatpush1.bf16.msra.mxu0 0
    %2865 = vmatprep.subr.bf16.mxu0 0
    %2866 = vmatpush1.bf16.msra.mxu0 0
    %2867 = vmatprep.subr.bf16.mxu0 0
    %2868 = vmatpush1.bf16.msra.mxu0 0
    %2869 = vmatprep.subr.bf16.mxu0 0
    %2870 = vmatpush1.bf16.msra.mxu0 0
    %2871 = vmatprep.subr.bf16.mxu0 0
    %2872 = vmatpush1.bf16.msra.mxu0 0
    %2873 = vmatprep.mubr.bf16.mxu0 0
    %2874 = vmatmul.mubr.bf16.gmra.mrb[0].mxu0 %v2636
    %v2875 = vpop.f32.mrb[0].mxu0
    %v2876 = vadd.f32 %v2624, %v2875
    %v2877 = vpop.f32.mrb[0].mxu0
    %v2878 = vadd.f32 %v2626, %v2877
    %v2879 = vpop.f32.mrb[0].mxu0
    %v2880 = vadd.f32 %v2628, %v2879
    %v2881 = vpop.f32.mrb[0].mxu0
    %v2882 = vadd.f32 %v2630, %v2881
    %2883 = vdwg.mxu0
    %v2884 = vadd.f32 %v2833, %v58
    %v2885 = vadd.f32 %v2835, %v62
    %v2886 = vadd.f32 %v2876, %v66
    %v2887 = vadd.f32 %v2878, %v70
    %v2888 = vadd.f32 %v2837, %v58
    %v2889 = vadd.f32 %v2839, %v62
    %v2890 = vadd.f32 %v2880, %v66
    %v2891 = vadd.f32 %v2882, %v70
    %v2892 = vmul.f32 %v2884, 0.5
    %v2893 = vmul.f32 %v2888, 0.5
    %v2894 = vtanh.pop %v2892
    %v2895 = vtanh.pop %v2893
    %v2896 = vadd.f32 %v2894, 1.0
    %v2897 = vadd.f32 %v2895, 1.0
    %v2898 = vmul.f32 %v2896, 0.5
    %v2899 = vmul.f32 %v2897, 0.5
    %v2900 = vmul.f32 %v2885, 0.5
    %v2901 = vmul.f32 %v2889, 0.5
    %v2902 = vtanh.pop %v2900
    %v2903 = vtanh.pop %v2901
    %v2904 = vadd.f32 %v2902, 1.0
    %v2905 = vadd.f32 %v2903, 1.0
    %v2906 = vmul.f32 %v2904, 0.5
    %v2907 = vmul.f32 %v2905, 0.5
    %v2908 = vtanh.pop %v2886
    %v2909 = vtanh.pop %v2890
    %v2910 = vmul.f32 %v2887, 0.5
    %v2911 = vmul.f32 %v2891, 0.5
    %v2912 = vtanh.pop %v2910
    %v2913 = vtanh.pop %v2911
    %v2914 = vadd.f32 %v2912, 1.0
    %v2915 = vadd.f32 %v2913, 1.0
    %v2916 = vmul.f32 %v2914, 0.5
    %v2917 = vmul.f32 %v2915, 0.5
    %v2918 = vld [vmem:[#allocation3] sm:$0xff]
    %v2919 = vld [vmem:[#allocation3 + $0x8] sm:$0xff]
    %v2920 = vmul.f32 %v2906, %v2918
    %v2921 = vmul.f32 %v2907, %v2919
    %v2922 = vmul.f32 %v2898, %v2908
    %v2923 = vmul.f32 %v2899, %v2909
    %v2924 = vadd.f32 %v2920, %v2922
    %v2925 = vadd.f32 %v2921, %v2923
    %v2926 = vtanh.pop %v2924
    %v2927 = vtanh.pop %v2925
    %v2928 = vmul.f32 %v2916, %v2926
    %v2929 = vmul.f32 %v2917, %v2927
    %2930 = vst [vmem:[#allocation3] sm:$0xff] %v2924
    %2931 = vst [vmem:[#allocation3 + $0x8] sm:$0xff] %v2925
    %v2932 = vpack.c.bf16 %v2929, %v2928
    %2933 = vst [vmem:[#allocation2] sm:$0xff] %v2932
    %v2936 = vcombine.high %v2928, %v2928
    %v2938 = vunpack.c.l.s4 1966171168
    %v2939 = vunpack.c.0.s8 %v2938
    %v2940 = vlaneseq
    %v2941 = vshrl.u32 %v2940, 7
    %v2942 = vsub.s32 %v2939, %v2941
    %v2943 = vrot.slane %v2928, %v2942
    %v2945 = vunpack.c.l.s4 1966171168
    %v2946 = vunpack.c.0.s8 %v2945
    %v2947 = vlaneseq
    %v2948 = vshrl.u32 %v2947, 7
    %v2949 = vsub.s32 %v2946, %v2948
    %v2950 = vrot.slane %v2936, %v2949
    %v2951 = vcombine.high %v2943, %v2943
    %v2952 = vcombine.high %v2950, %v2950
    %v2954 = vunpack.c.l.s4 1966171168
    %v2955 = vunpack.c.0.s8 %v2954
    %v2956 = vlaneseq
    %v2957 = vshrl.u32 %v2956, 7
    %v2958 = vsub.s32 %v2955, %v2957
    %v2959 = vrot.slane %v2943, %v2958
    %v2961 = vunpack.c.l.s4 1966171168
    %v2962 = vunpack.c.0.s8 %v2961
    %v2963 = vlaneseq
    %v2964 = vshrl.u32 %v2963, 7
    %v2965 = vsub.s32 %v2962, %v2964
    %v2966 = vrot.slane %v2950, %v2965
    %v2968 = vunpack.c.l.s4 1966171168
    %v2969 = vunpack.c.0.s8 %v2968
    %v2970 = vlaneseq
    %v2971 = vshrl.u32 %v2970, 7
    %v2972 = vsub.s32 %v2969, %v2971
    %v2973 = vrot.slane %v2951, %v2972
    %v2975 = vunpack.c.l.s4 1966171168
    %v2976 = vunpack.c.0.s8 %v2975
    %v2977 = vlaneseq
    %v2978 = vshrl.u32 %v2977, 7
    %v2979 = vsub.s32 %v2976, %v2978
    %v2980 = vrot.slane %v2952, %v2979
    %v2981 = vcombine.high %v2959, %v2959
    %v2982 = vcombine.high %v2966, %v2966
    %v2983 = vcombine.high %v2973, %v2973
    %v2984 = vcombine.high %v2980, %v2980
    %v2985 = vcombine.high %v2929, %v2929
    %v2987 = vunpack.c.l.s4 1966171168
    %v2988 = vunpack.c.0.s8 %v2987
    %v2989 = vlaneseq
    %v2990 = vshrl.u32 %v2989, 7
    %v2991 = vsub.s32 %v2988, %v2990
    %v2992 = vrot.slane %v2929, %v2991
    %v2994 = vunpack.c.l.s4 1966171168
    %v2995 = vunpack.c.0.s8 %v2994
    %v2996 = vlaneseq
    %v2997 = vshrl.u32 %v2996, 7
    %v2998 = vsub.s32 %v2995, %v2997
    %v2999 = vrot.slane %v2985, %v2998
    %v3000 = vcombine.high %v2992, %v2992
    %v3001 = vcombine.high %v2999, %v2999
    %v3003 = vunpack.c.l.s4 1966171168
    %v3004 = vunpack.c.0.s8 %v3003
    %v3005 = vlaneseq
    %v3006 = vshrl.u32 %v3005, 7
    %v3007 = vsub.s32 %v3004, %v3006
    %v3008 = vrot.slane %v2992, %v3007
    %v3010 = vunpack.c.l.s4 1966171168
    %v3011 = vunpack.c.0.s8 %v3010
    %v3012 = vlaneseq
    %v3013 = vshrl.u32 %v3012, 7
    %v3014 = vsub.s32 %v3011, %v3013
    %v3015 = vrot.slane %v2999, %v3014
    %v3017 = vunpack.c.l.s4 1966171168
    %v3018 = vunpack.c.0.s8 %v3017
    %v3019 = vlaneseq
    %v3020 = vshrl.u32 %v3019, 7
    %v3021 = vsub.s32 %v3018, %v3020
    %v3022 = vrot.slane %v3000, %v3021
    %v3024 = vunpack.c.l.s4 1966171168
    %v3025 = vunpack.c.0.s8 %v3024
    %v3026 = vlaneseq
    %v3027 = vshrl.u32 %v3026, 7
    %v3028 = vsub.s32 %v3025, %v3027
    %v3029 = vrot.slane %v3001, %v3028
    %v3030 = vcombine.high %v3008, %v3008
    %v3031 = vcombine.high %v3015, %v3015
    %v3032 = vcombine.high %v3022, %v3022
    %v3033 = vcombine.high %v3029, %v3029
    %3050 = vst [vmem:[%s4 + $0x3] sm:$0x1] %v2959
    %3051 = vst [vmem:[%s4 + $0xb] sm:$0x1] %v2973
    %3052 = vst [vmem:[%s4 + $0x13] sm:$0x1] %v2981
    %3053 = vst [vmem:[%s4 + $0x1b] sm:$0x1] %v2983
    %3054 = vst [vmem:[%s4 + $0x23] sm:$0x1] %v2966
    %3055 = vst [vmem:[%s4 + $0x2b] sm:$0x1] %v2980
    %3056 = vst [vmem:[%s4 + $0x33] sm:$0x1] %v2982
    %3057 = vst [vmem:[%s4 + $0x3b] sm:$0x1] %v2984
    %3058 = vst [vmem:[%s4 + $0x43] sm:$0x1] %v3008
    %3059 = vst [vmem:[%s4 + $0x4b] sm:$0x1] %v3022
    %3060 = vst [vmem:[%s4 + $0x53] sm:$0x1] %v3030
    %3061 = vst [vmem:[%s4 + $0x5b] sm:$0x1] %v3032
    %3062 = vst [vmem:[%s4 + $0x63] sm:$0x1] %v3015
    %3063 = vst [vmem:[%s4 + $0x6b] sm:$0x1] %v3029
    %3064 = vst [vmem:[%s4 + $0x73] sm:$0x1] %v3031
    %3065 = vst [vmem:[%s4 + $0x7b] sm:$0x1] %v3033
    %s3066 = scalar_lea.vmem %s0, 32
    %v3067 = vld [vmem:[%s3066] sm:$0xf]
    %v3068 = vld [vmem:[%s3066 + $0x4] sm:$0xf]
    %v3069 = vld [vmem:[#allocation4] sm:$0xff]
    %v3070 = vld [vmem:[#allocation4 + $0x8] sm:$0xff]
    %v3071 = vld [vmem:[#allocation4 + $0x10] sm:$0xff]
    %v3072 = vld [vmem:[#allocation4 + $0x18] sm:$0xff]
    %v3073 = vld [vmem:[#allocation4 + $0x20] sm:$0xff]
    %v3074 = vld [vmem:[#allocation4 + $0x28] sm:$0xff]
    %v3075 = vld [vmem:[#allocation4 + $0x30] sm:$0xff]
    %v3076 = vld [vmem:[#allocation4 + $0x38] sm:$0xff]
    %v3077 = vld [vmem:[#allocation4 + $0x40] sm:$0xff]
    %v3078 = vld [vmem:[#allocation4 + $0x48] sm:$0xff]
    %v3079 = vld [vmem:[#allocation4 + $0x50] sm:$0xff]
    %v3080 = vld [vmem:[#allocation4 + $0x58] sm:$0xff]
    %v3081 = vld [vmem:[#allocation4 + $0x60] sm:$0xff]
    %v3082 = vld [vmem:[#allocation4 + $0x68] sm:$0xff]
    %v3083 = vld [vmem:[#allocation4 + $0x70] sm:$0xff]
    %v3084 = vld [vmem:[#allocation4 + $0x78] sm:$0xff]
    %v3085 = vld [vmem:[#allocation4 + $0x80] sm:$0xff]
    %v3086 = vld [vmem:[#allocation4 + $0x88] sm:$0xff]
    %v3087 = vld [vmem:[#allocation4 + $0x90] sm:$0xff]
    %v3088 = vld [vmem:[#allocation4 + $0x98] sm:$0xff]
    %v3089 = vld [vmem:[#allocation4 + $0xa0] sm:$0xff]
    %v3090 = vld [vmem:[#allocation4 + $0xa8] sm:$0xff]
    %v3091 = vld [vmem:[#allocation4 + $0xb0] sm:$0xff]
    %v3092 = vld [vmem:[#allocation4 + $0xb8] sm:$0xff]
    %v3093 = vld [vmem:[#allocation4 + $0xc0] sm:$0xff]
    %v3094 = vld [vmem:[#allocation4 + $0xc8] sm:$0xff]
    %v3095 = vld [vmem:[#allocation4 + $0xd0] sm:$0xff]
    %v3096 = vld [vmem:[#allocation4 + $0xd8] sm:$0xff]
    %v3097 = vld [vmem:[#allocation4 + $0xe0] sm:$0xff]
    %v3098 = vld [vmem:[#allocation4 + $0xe8] sm:$0xff]
    %v3099 = vld [vmem:[#allocation4 + $0xf0] sm:$0xff]
    %v3100 = vld [vmem:[#allocation4 + $0xf8] sm:$0xff]
    %v3101 = vld [vmem:[#allocation2] sm:$0xff]
    %v3102 = vld [vmem:[#allocation6] sm:$0xff]
    %v3103 = vld [vmem:[#allocation6 + $0x8] sm:$0xff]
    %v3104 = vld [vmem:[#allocation6 + $0x10] sm:$0xff]
    %v3105 = vld [vmem:[#allocation6 + $0x18] sm:$0xff]
    %v3106 = vld [vmem:[#allocation6 + $0x20] sm:$0xff]
    %v3107 = vld [vmem:[#allocation6 + $0x28] sm:$0xff]
    %v3108 = vld [vmem:[#allocation6 + $0x30] sm:$0xff]
    %v3109 = vld [vmem:[#allocation6 + $0x38] sm:$0xff]
    %v3110 = vld [vmem:[#allocation6 + $0x40] sm:$0xff]
    %v3111 = vld [vmem:[#allocation6 + $0x48] sm:$0xff]
    %v3112 = vld [vmem:[#allocation6 + $0x50] sm:$0xff]
    %v3113 = vld [vmem:[#allocation6 + $0x58] sm:$0xff]
    %v3114 = vld [vmem:[#allocation6 + $0x60] sm:$0xff]
    %v3115 = vld [vmem:[#allocation6 + $0x68] sm:$0xff]
    %v3116 = vld [vmem:[#allocation6 + $0x70] sm:$0xff]
    %v3117 = vld [vmem:[#allocation6 + $0x78] sm:$0xff]
    %v3118 = vld [vmem:[#allocation6 + $0x80] sm:$0xff]
    %v3119 = vld [vmem:[#allocation6 + $0x88] sm:$0xff]
    %v3120 = vld [vmem:[#allocation6 + $0x90] sm:$0xff]
    %v3121 = vld [vmem:[#allocation6 + $0x98] sm:$0xff]
    %v3122 = vld [vmem:[#allocation6 + $0xa0] sm:$0xff]
    %v3123 = vld [vmem:[#allocation6 + $0xa8] sm:$0xff]
    %v3124 = vld [vmem:[#allocation6 + $0xb0] sm:$0xff]
    %v3125 = vld [vmem:[#allocation6 + $0xb8] sm:$0xff]
    %v3126 = vld [vmem:[#allocation6 + $0xc0] sm:$0xff]
    %v3127 = vld [vmem:[#allocation6 + $0xc8] sm:$0xff]
    %v3128 = vld [vmem:[#allocation6 + $0xd0] sm:$0xff]
    %v3129 = vld [vmem:[#allocation6 + $0xd8] sm:$0xff]
    %v3130 = vld [vmem:[#allocation6 + $0xe0] sm:$0xff]
    %v3131 = vld [vmem:[#allocation6 + $0xe8] sm:$0xff]
    %v3132 = vld [vmem:[#allocation6 + $0xf0] sm:$0xff]
    %v3133 = vld [vmem:[#allocation6 + $0xf8] sm:$0xff]
    %v3166 = vunpack.c.l.b16 %v3102
    %v3167 = vunpack.c.h.b16 %v3102
    %v3168 = vunpack.c.l.b16 %v3103
    %v3169 = vunpack.c.h.b16 %v3103
    %v3170 = vunpack.c.l.b16 %v3104
    %v3171 = vunpack.c.h.b16 %v3104
    %v3172 = vunpack.c.l.b16 %v3105
    %v3173 = vunpack.c.h.b16 %v3105
    %v3174 = vunpack.c.l.b16 %v3106
    %v3175 = vunpack.c.h.b16 %v3106
    %v3176 = vunpack.c.l.b16 %v3107
    %v3177 = vunpack.c.h.b16 %v3107
    %v3178 = vunpack.c.l.b16 %v3108
    %v3179 = vunpack.c.h.b16 %v3108
    %v3180 = vunpack.c.l.b16 %v3109
    %v3181 = vunpack.c.h.b16 %v3109
    %v3182 = vunpack.c.l.b16 %v3110
    %v3183 = vunpack.c.h.b16 %v3110
    %v3184 = vunpack.c.l.b16 %v3111
    %v3185 = vunpack.c.h.b16 %v3111
    %v3186 = vunpack.c.l.b16 %v3112
    %v3187 = vunpack.c.h.b16 %v3112
    %v3188 = vunpack.c.l.b16 %v3113
    %v3189 = vunpack.c.h.b16 %v3113
    %v3190 = vunpack.c.l.b16 %v3114
    %v3191 = vunpack.c.h.b16 %v3114
    %v3192 = vunpack.c.l.b16 %v3115
    %v3193 = vunpack.c.h.b16 %v3115
    %v3194 = vunpack.c.l.b16 %v3116
    %v3195 = vunpack.c.h.b16 %v3116
    %v3196 = vunpack.c.l.b16 %v3117
    %v3197 = vunpack.c.h.b16 %v3117
    %v3198 = vunpack.c.l.b16 %v3118
    %v3199 = vunpack.c.h.b16 %v3118
    %v3200 = vunpack.c.l.b16 %v3119
    %v3201 = vunpack.c.h.b16 %v3119
    %v3202 = vunpack.c.l.b16 %v3120
    %v3203 = vunpack.c.h.b16 %v3120
    %v3204 = vunpack.c.l.b16 %v3121
    %v3205 = vunpack.c.h.b16 %v3121
    %v3206 = vunpack.c.l.b16 %v3122
    %v3207 = vunpack.c.h.b16 %v3122
    %v3208 = vunpack.c.l.b16 %v3123
    %v3209 = vunpack.c.h.b16 %v3123
    %v3210 = vunpack.c.l.b16 %v3124
    %v3211 = vunpack.c.h.b16 %v3124
    %v3212 = vunpack.c.l.b16 %v3125
    %v3213 = vunpack.c.h.b16 %v3125
    %v3214 = vunpack.c.l.b16 %v3126
    %v3215 = vunpack.c.h.b16 %v3126
    %v3216 = vunpack.c.l.b16 %v3127
    %v3217 = vunpack.c.h.b16 %v3127
    %v3218 = vunpack.c.l.b16 %v3128
    %v3219 = vunpack.c.h.b16 %v3128
    %v3220 = vunpack.c.l.b16 %v3129
    %v3221 = vunpack.c.h.b16 %v3129
    %v3222 = vunpack.c.l.b16 %v3130
    %v3223 = vunpack.c.h.b16 %v3130
    %v3224 = vunpack.c.l.b16 %v3131
    %v3225 = vunpack.c.h.b16 %v3131
    %v3226 = vunpack.c.l.b16 %v3132
    %v3227 = vunpack.c.h.b16 %v3132
    %v3228 = vunpack.c.l.b16 %v3133
    %v3229 = vunpack.c.h.b16 %v3133
    %v3230 = vpack.c.b16 %v3170, %v3166
    %v3231 = vpack.c.b16 %v3171, %v3167
    %v3232 = vpack.c.b16 %v3172, %v3168
    %v3233 = vpack.c.b16 %v3173, %v3169
    %v3234 = vpack.c.b16 %v3178, %v3174
    %v3235 = vpack.c.b16 %v3179, %v3175
    %v3236 = vpack.c.b16 %v3180, %v3176
    %v3237 = vpack.c.b16 %v3181, %v3177
    %v3238 = vpack.c.b16 %v3186, %v3182
    %v3239 = vpack.c.b16 %v3187, %v3183
    %v3240 = vpack.c.b16 %v3188, %v3184
    %v3241 = vpack.c.b16 %v3189, %v3185
    %v3242 = vpack.c.b16 %v3194, %v3190
    %v3243 = vpack.c.b16 %v3195, %v3191
    %v3244 = vpack.c.b16 %v3196, %v3192
    %v3245 = vpack.c.b16 %v3197, %v3193
    %v3246 = vpack.c.b16 %v3202, %v3198
    %v3247 = vpack.c.b16 %v3203, %v3199
    %v3248 = vpack.c.b16 %v3204, %v3200
    %v3249 = vpack.c.b16 %v3205, %v3201
    %v3250 = vpack.c.b16 %v3210, %v3206
    %v3251 = vpack.c.b16 %v3211, %v3207
    %v3252 = vpack.c.b16 %v3212, %v3208
    %v3253 = vpack.c.b16 %v3213, %v3209
    %v3254 = vpack.c.b16 %v3218, %v3214
    %v3255 = vpack.c.b16 %v3219, %v3215
    %v3256 = vpack.c.b16 %v3220, %v3216
    %v3257 = vpack.c.b16 %v3221, %v3217
    %v3258 = vpack.c.b16 %v3226, %v3222
    %v3259 = vpack.c.b16 %v3227, %v3223
    %v3260 = vpack.c.b16 %v3228, %v3224
    %v3261 = vpack.c.b16 %v3229, %v3225
    %3294 = vmatprep.subr.bf16.mxu0 %v3231
    %3295 = vmatpush1.bf16.msra.mxu0 %v3230
    %3296 = vmatprep.subr.bf16.mxu0 %v3235
    %3297 = vmatpush1.bf16.msra.mxu0 %v3234
    %3298 = vmatprep.subr.bf16.mxu0 %v3239
    %3299 = vmatpush1.bf16.msra.mxu0 %v3238
    %3300 = vmatprep.subr.bf16.mxu0 %v3243
    %3301 = vmatpush1.bf16.msra.mxu0 %v3242
    %3302 = vmatprep.subr.bf16.mxu0 %v3247
    %3303 = vmatpush1.bf16.msra.mxu0 %v3246
    %3304 = vmatprep.subr.bf16.mxu0 %v3251
    %3305 = vmatpush1.bf16.msra.mxu0 %v3250
    %3306 = vmatprep.subr.bf16.mxu0 %v3255
    %3307 = vmatpush1.bf16.msra.mxu0 %v3254
    %3308 = vmatprep.subr.bf16.mxu0 %v3259
    %3309 = vmatpush1.bf16.msra.mxu0 %v3258
    %3310 = vmatprep.subr.bf16.mxu0 0
    %3311 = vmatpush1.bf16.msra.mxu0 0
    %3312 = vmatprep.subr.bf16.mxu0 0
    %3313 = vmatpush1.bf16.msra.mxu0 0
    %3314 = vmatprep.subr.bf16.mxu0 0
    %3315 = vmatpush1.bf16.msra.mxu0 0
    %3316 = vmatprep.subr.bf16.mxu0 0
    %3317 = vmatpush1.bf16.msra.mxu0 0
    %3318 = vmatprep.subr.bf16.mxu0 0
    %3319 = vmatpush1.bf16.msra.mxu0 0
    %3320 = vmatprep.subr.bf16.mxu0 0
    %3321 = vmatpush1.bf16.msra.mxu0 0
    %3322 = vmatprep.subr.bf16.mxu0 0
    %3323 = vmatpush1.bf16.msra.mxu0 0
    %3324 = vmatprep.subr.bf16.mxu0 0
    %3325 = vmatpush1.bf16.msra.mxu0 0
    %3326 = vmatprep.mubr.bf16.mxu0 0
    %3327 = vmatmul.mubr.bf16.gmra.mrb[0].mxu0 %v3101
    %v3328 = vpop.f32.mrb[0].mxu0
    %v3329 = vadd.f32 0.0, %v3328
    %v3330 = vpop.f32.mrb[0].mxu0
    %v3331 = vadd.f32 0.0, %v3330
    %v3332 = vpop.f32.mrb[0].mxu0
    %v3333 = vadd.f32 0.0, %v3332
    %v3334 = vpop.f32.mrb[0].mxu0
    %v3335 = vadd.f32 0.0, %v3334
    %3336 = vdwg.mxu0
    %3337 = vmatprep.subr.bf16.mxu0 %v3233
    %3338 = vmatpush1.bf16.msra.mxu0 %v3232
    %3339 = vmatprep.subr.bf16.mxu0 %v3237
    %3340 = vmatpush1.bf16.msra.mxu0 %v3236
    %3341 = vmatprep.subr.bf16.mxu0 %v3241
    %3342 = vmatpush1.bf16.msra.mxu0 %v3240
    %3343 = vmatprep.subr.bf16.mxu0 %v3245
    %3344 = vmatpush1.bf16.msra.mxu0 %v3244
    %3345 = vmatprep.subr.bf16.mxu0 %v3249
    %3346 = vmatpush1.bf16.msra.mxu0 %v3248
    %3347 = vmatprep.subr.bf16.mxu0 %v3253
    %3348 = vmatpush1.bf16.msra.mxu0 %v3252
    %3349 = vmatprep.subr.bf16.mxu0 %v3257
    %3350 = vmatpush1.bf16.msra.mxu0 %v3256
    %3351 = vmatprep.subr.bf16.mxu0 %v3261
    %3352 = vmatpush1.bf16.msra.mxu0 %v3260
    %3353 = vmatprep.subr.bf16.mxu0 0
    %3354 = vmatpush1.bf16.msra.mxu0 0
    %3355 = vmatprep.subr.bf16.mxu0 0
    %3356 = vmatpush1.bf16.msra.mxu0 0
    %3357 = vmatprep.subr.bf16.mxu0 0
    %3358 = vmatpush1.bf16.msra.mxu0 0
    %3359 = vmatprep.subr.bf16.mxu0 0
    %3360 = vmatpush1.bf16.msra.mxu0 0
    %3361 = vmatprep.subr.bf16.mxu0 0
    %3362 = vmatpush1.bf16.msra.mxu0 0
    %3363 = vmatprep.subr.bf16.mxu0 0
    %3364 = vmatpush1.bf16.msra.mxu0 0
    %3365 = vmatprep.subr.bf16.mxu0 0
    %3366 = vmatpush1.bf16.msra.mxu0 0
    %3367 = vmatprep.subr.bf16.mxu0 0
    %3368 = vmatpush1.bf16.msra.mxu0 0
    %3369 = vmatprep.mubr.bf16.mxu0 0
    %3370 = vmatmul.mubr.bf16.gmra.mrb[0].mxu0 %v3101
    %v3371 = vpop.f32.mrb[0].mxu0
    %v3372 = vadd.f32 0.0, %v3371
    %v3373 = vpop.f32.mrb[0].mxu0
    %v3374 = vadd.f32 0.0, %v3373
    %v3375 = vpop.f32.mrb[0].mxu0
    %v3376 = vadd.f32 0.0, %v3375
    %v3377 = vpop.f32.mrb[0].mxu0
    %v3378 = vadd.f32 0.0, %v3377
    %3379 = vdwg.mxu0
    %v3382 = vunpack.c.l.b16 %v3067
    %v3383 = vunpack.c.l.b16 %v3068
    %v3384 = vpack.c.b16 %v3383, %v3382
    %v3418 = vunpack.c.l.b16 %v3069
    %v3419 = vunpack.c.h.b16 %v3069
    %v3420 = vunpack.c.l.b16 %v3070
    %v3421 = vunpack.c.h.b16 %v3070
    %v3422 = vunpack.c.l.b16 %v3071
    %v3423 = vunpack.c.h.b16 %v3071
    %v3424 = vunpack.c.l.b16 %v3072
    %v3425 = vunpack.c.h.b16 %v3072
    %v3426 = vunpack.c.l.b16 %v3073
    %v3427 = vunpack.c.h.b16 %v3073
    %v3428 = vunpack.c.l.b16 %v3074
    %v3429 = vunpack.c.h.b16 %v3074
    %v3430 = vunpack.c.l.b16 %v3075
    %v3431 = vunpack.c.h.b16 %v3075
    %v3432 = vunpack.c.l.b16 %v3076
    %v3433 = vunpack.c.h.b16 %v3076
    %v3434 = vunpack.c.l.b16 %v3077
    %v3435 = vunpack.c.h.b16 %v3077
    %v3436 = vunpack.c.l.b16 %v3078
    %v3437 = vunpack.c.h.b16 %v3078
    %v3438 = vunpack.c.l.b16 %v3079
    %v3439 = vunpack.c.h.b16 %v3079
    %v3440 = vunpack.c.l.b16 %v3080
    %v3441 = vunpack.c.h.b16 %v3080
    %v3442 = vunpack.c.l.b16 %v3081
    %v3443 = vunpack.c.h.b16 %v3081
    %v3444 = vunpack.c.l.b16 %v3082
    %v3445 = vunpack.c.h.b16 %v3082
    %v3446 = vunpack.c.l.b16 %v3083
    %v3447 = vunpack.c.h.b16 %v3083
    %v3448 = vunpack.c.l.b16 %v3084
    %v3449 = vunpack.c.h.b16 %v3084
    %v3450 = vunpack.c.l.b16 %v3085
    %v3451 = vunpack.c.h.b16 %v3085
    %v3452 = vunpack.c.l.b16 %v3086
    %v3453 = vunpack.c.h.b16 %v3086
    %v3454 = vunpack.c.l.b16 %v3087
    %v3455 = vunpack.c.h.b16 %v3087
    %v3456 = vunpack.c.l.b16 %v3088
    %v3457 = vunpack.c.h.b16 %v3088
    %v3458 = vunpack.c.l.b16 %v3089
    %v3459 = vunpack.c.h.b16 %v3089
    %v3460 = vunpack.c.l.b16 %v3090
    %v3461 = vunpack.c.h.b16 %v3090
    %v3462 = vunpack.c.l.b16 %v3091
    %v3463 = vunpack.c.h.b16 %v3091
    %v3464 = vunpack.c.l.b16 %v3092
    %v3465 = vunpack.c.h.b16 %v3092
    %v3466 = vunpack.c.l.b16 %v3093
    %v3467 = vunpack.c.h.b16 %v3093
    %v3468 = vunpack.c.l.b16 %v3094
    %v3469 = vunpack.c.h.b16 %v3094
    %v3470 = vunpack.c.l.b16 %v3095
    %v3471 = vunpack.c.h.b16 %v3095
    %v3472 = vunpack.c.l.b16 %v3096
    %v3473 = vunpack.c.h.b16 %v3096
    %v3474 = vunpack.c.l.b16 %v3097
    %v3475 = vunpack.c.h.b16 %v3097
    %v3476 = vunpack.c.l.b16 %v3098
    %v3477 = vunpack.c.h.b16 %v3098
    %v3478 = vunpack.c.l.b16 %v3099
    %v3479 = vunpack.c.h.b16 %v3099
    %v3480 = vunpack.c.l.b16 %v3100
    %v3481 = vunpack.c.h.b16 %v3100
    %v3482 = vpack.c.b16 %v3422, %v3418
    %v3483 = vpack.c.b16 %v3423, %v3419
    %v3484 = vpack.c.b16 %v3424, %v3420
    %v3485 = vpack.c.b16 %v3425, %v3421
    %v3486 = vpack.c.b16 %v3430, %v3426
    %v3487 = vpack.c.b16 %v3431, %v3427
    %v3488 = vpack.c.b16 %v3432, %v3428
    %v3489 = vpack.c.b16 %v3433, %v3429
    %v3490 = vpack.c.b16 %v3438, %v3434
    %v3491 = vpack.c.b16 %v3439, %v3435
    %v3492 = vpack.c.b16 %v3440, %v3436
    %v3493 = vpack.c.b16 %v3441, %v3437
    %v3494 = vpack.c.b16 %v3446, %v3442
    %v3495 = vpack.c.b16 %v3447, %v3443
    %v3496 = vpack.c.b16 %v3448, %v3444
    %v3497 = vpack.c.b16 %v3449, %v3445
    %v3498 = vpack.c.b16 %v3454, %v3450
    %v3499 = vpack.c.b16 %v3455, %v3451
    %v3500 = vpack.c.b16 %v3456, %v3452
    %v3501 = vpack.c.b16 %v3457, %v3453
    %v3502 = vpack.c.b16 %v3462, %v3458
    %v3503 = vpack.c.b16 %v3463, %v3459
    %v3504 = vpack.c.b16 %v3464, %v3460
    %v3505 = vpack.c.b16 %v3465, %v3461
    %v3506 = vpack.c.b16 %v3470, %v3466
    %v3507 = vpack.c.b16 %v3471, %v3467
    %v3508 = vpack.c.b16 %v3472, %v3468
    %v3509 = vpack.c.b16 %v3473, %v3469
    %v3510 = vpack.c.b16 %v3478, %v3474
    %v3511 = vpack.c.b16 %v3479, %v3475
    %v3512 = vpack.c.b16 %v3480, %v3476
    %v3513 = vpack.c.b16 %v3481, %v3477
    %3546 = vmatprep.subr.bf16.mxu0 %v3483
    %3547 = vmatpush1.bf16.msra.mxu0 %v3482
    %3548 = vmatprep.subr.bf16.mxu0 %v3487
    %3549 = vmatpush1.bf16.msra.mxu0 %v3486
    %3550 = vmatprep.subr.bf16.mxu0 %v3491
    %3551 = vmatpush1.bf16.msra.mxu0 %v3490
    %3552 = vmatprep.subr.bf16.mxu0 %v3495
    %3553 = vmatpush1.bf16.msra.mxu0 %v3494
    %3554 = vmatprep.subr.bf16.mxu0 %v3499
    %3555 = vmatpush1.bf16.msra.mxu0 %v3498
    %3556 = vmatprep.subr.bf16.mxu0 %v3503
    %3557 = vmatpush1.bf16.msra.mxu0 %v3502
    %3558 = vmatprep.subr.bf16.mxu0 %v3507
    %3559 = vmatpush1.bf16.msra.mxu0 %v3506
    %3560 = vmatprep.subr.bf16.mxu0 %v3511
    %3561 = vmatpush1.bf16.msra.mxu0 %v3510
    %3562 = vmatprep.subr.bf16.mxu0 0
    %3563 = vmatpush1.bf16.msra.mxu0 0
    %3564 = vmatprep.subr.bf16.mxu0 0
    %3565 = vmatpush1.bf16.msra.mxu0 0
    %3566 = vmatprep.subr.bf16.mxu0 0
    %3567 = vmatpush1.bf16.msra.mxu0 0
    %3568 = vmatprep.subr.bf16.mxu0 0
    %3569 = vmatpush1.bf16.msra.mxu0 0
    %3570 = vmatprep.subr.bf16.mxu0 0
    %3571 = vmatpush1.bf16.msra.mxu0 0
    %3572 = vmatprep.subr.bf16.mxu0 0
    %3573 = vmatpush1.bf16.msra.mxu0 0
    %3574 = vmatprep.subr.bf16.mxu0 0
    %3575 = vmatpush1.bf16.msra.mxu0 0
    %3576 = vmatprep.subr.bf16.mxu0 0
    %3577 = vmatpush1.bf16.msra.mxu0 0
    %3578 = vmatprep.mubr.bf16.mxu0 0
    %3579 = vmatmul.mubr.bf16.gmra.mrb[0].mxu0 %v3384
    %v3580 = vpop.f32.mrb[0].mxu0
    %v3581 = vadd.f32 %v3329, %v3580
    %v3582 = vpop.f32.mrb[0].mxu0
    %v3583 = vadd.f32 %v3331, %v3582
    %v3584 = vpop.f32.mrb[0].mxu0
    %v3585 = vadd.f32 %v3333, %v3584
    %v3586 = vpop.f32.mrb[0].mxu0
    %v3587 = vadd.f32 %v3335, %v3586
    %3588 = vdwg.mxu0
    %3589 = vmatprep.subr.bf16.mxu0 %v3485
    %3590 = vmatpush1.bf16.msra.mxu0 %v3484
    %3591 = vmatprep.subr.bf16.mxu0 %v3489
    %3592 = vmatpush1.bf16.msra.mxu0 %v3488
    %3593 = vmatprep.subr.bf16.mxu0 %v3493
    %3594 = vmatpush1.bf16.msra.mxu0 %v3492
    %3595 = vmatprep.subr.bf16.mxu0 %v3497
    %3596 = vmatpush1.bf16.msra.mxu0 %v3496
    %3597 = vmatprep.subr.bf16.mxu0 %v3501
    %3598 = vmatpush1.bf16.msra.mxu0 %v3500
    %3599 = vmatprep.subr.bf16.mxu0 %v3505
    %3600 = vmatpush1.bf16.msra.mxu0 %v3504
    %3601 = vmatprep.subr.bf16.mxu0 %v3509
    %3602 = vmatpush1.bf16.msra.mxu0 %v3508
    %3603 = vmatprep.subr.bf16.mxu0 %v3513
    %3604 = vmatpush1.bf16.msra.mxu0 %v3512
    %3605 = vmatprep.subr.bf16.mxu0 0
    %3606 = vmatpush1.bf16.msra.mxu0 0
    %3607 = vmatprep.subr.bf16.mxu0 0
    %3608 = vmatpush1.bf16.msra.mxu0 0
    %3609 = vmatprep.subr.bf16.mxu0 0
    %3610 = vmatpush1.bf16.msra.mxu0 0
    %3611 = vmatprep.subr.bf16.mxu0 0
    %3612 = vmatpush1.bf16.msra.mxu0 0
    %3613 = vmatprep.subr.bf16.mxu0 0
    %3614 = vmatpush1.bf16.msra.mxu0 0
    %3615 = vmatprep.subr.bf16.mxu0 0
    %3616 = vmatpush1.bf16.msra.mxu0 0
    %3617 = vmatprep.subr.bf16.mxu0 0
    %3618 = vmatpush1.bf16.msra.mxu0 0
    %3619 = vmatprep.subr.bf16.mxu0 0
    %3620 = vmatpush1.bf16.msra.mxu0 0
    %3621 = vmatprep.mubr.bf16.mxu0 0
    %3622 = vmatmul.mubr.bf16.gmra.mrb[0].mxu0 %v3384
    %v3623 = vpop.f32.mrb[0].mxu0
    %v3624 = vadd.f32 %v3372, %v3623
    %v3625 = vpop.f32.mrb[0].mxu0
    %v3626 = vadd.f32 %v3374, %v3625
    %v3627 = vpop.f32.mrb[0].mxu0
    %v3628 = vadd.f32 %v3376, %v3627
    %v3629 = vpop.f32.mrb[0].mxu0
    %v3630 = vadd.f32 %v3378, %v3629
    %3631 = vdwg.mxu0
    %v3632 = vadd.f32 %v3581, %v58
    %v3633 = vadd.f32 %v3583, %v62
    %v3634 = vadd.f32 %v3624, %v66
    %v3635 = vadd.f32 %v3626, %v70
    %v3636 = vadd.f32 %v3585, %v58
    %v3637 = vadd.f32 %v3587, %v62
    %v3638 = vadd.f32 %v3628, %v66
    %v3639 = vadd.f32 %v3630, %v70
    %v3640 = vmul.f32 %v3632, 0.5
    %v3641 = vmul.f32 %v3636, 0.5
    %v3642 = vtanh.pop %v3640
    %v3643 = vtanh.pop %v3641
    %v3644 = vadd.f32 %v3642, 1.0
    %v3645 = vadd.f32 %v3643, 1.0
    %v3646 = vmul.f32 %v3644, 0.5
    %v3647 = vmul.f32 %v3645, 0.5
    %v3648 = vmul.f32 %v3633, 0.5
    %v3649 = vmul.f32 %v3637, 0.5
    %v3650 = vtanh.pop %v3648
    %v3651 = vtanh.pop %v3649
    %v3652 = vadd.f32 %v3650, 1.0
    %v3653 = vadd.f32 %v3651, 1.0
    %v3654 = vmul.f32 %v3652, 0.5
    %v3655 = vmul.f32 %v3653, 0.5
    %v3656 = vtanh.pop %v3634
    %v3657 = vtanh.pop %v3638
    %v3658 = vmul.f32 %v3635, 0.5
    %v3659 = vmul.f32 %v3639, 0.5
    %v3660 = vtanh.pop %v3658
    %v3661 = vtanh.pop %v3659
    %v3662 = vadd.f32 %v3660, 1.0
    %v3663 = vadd.f32 %v3661, 1.0
    %v3664 = vmul.f32 %v3662, 0.5
    %v3665 = vmul.f32 %v3663, 0.5
    %v3666 = vld [vmem:[#allocation3] sm:$0xff]
    %v3667 = vld [vmem:[#allocation3 + $0x8] sm:$0xff]
    %v3668 = vmul.f32 %v3654, %v3666
    %v3669 = vmul.f32 %v3655, %v3667
    %v3670 = vmul.f32 %v3646, %v3656
    %v3671 = vmul.f32 %v3647, %v3657
    %v3672 = vadd.f32 %v3668, %v3670
    %v3673 = vadd.f32 %v3669, %v3671
    %v3674 = vtanh.pop %v3672
    %v3675 = vtanh.pop %v3673
    %v3676 = vmul.f32 %v3664, %v3674
    %v3677 = vmul.f32 %v3665, %v3675
    %3678 = vst [vmem:[#allocation3] sm:$0xff] %v3672
    %3679 = vst [vmem:[#allocation3 + $0x8] sm:$0xff] %v3673
    %v3680 = vpack.c.bf16 %v3677, %v3676
    %3681 = vst [vmem:[#allocation2] sm:$0xff] %v3680
    %v3684 = vcombine.high %v3676, %v3676
    %v3686 = vunpack.c.l.s4 1966171168
    %v3687 = vunpack.c.0.s8 %v3686
    %v3688 = vlaneseq
    %v3689 = vshrl.u32 %v3688, 7
    %v3690 = vsub.s32 %v3687, %v3689
    %v3691 = vrot.slane %v3676, %v3690
    %v3693 = vunpack.c.l.s4 1966171168
    %v3694 = vunpack.c.0.s8 %v3693
    %v3695 = vlaneseq
    %v3696 = vshrl.u32 %v3695, 7
    %v3697 = vsub.s32 %v3694, %v3696
    %v3698 = vrot.slane %v3684, %v3697
    %v3699 = vcombine.high %v3691, %v3691
    %v3700 = vcombine.high %v3698, %v3698
    %v3702 = vunpack.c.l.s4 1966171168
    %v3703 = vunpack.c.0.s8 %v3702
    %v3704 = vlaneseq
    %v3705 = vshrl.u32 %v3704, 7
    %v3706 = vsub.s32 %v3703, %v3705
    %v3707 = vrot.slane %v3691, %v3706
    %v3709 = vunpack.c.l.s4 1966171168
    %v3710 = vunpack.c.0.s8 %v3709
    %v3711 = vlaneseq
    %v3712 = vshrl.u32 %v3711, 7
    %v3713 = vsub.s32 %v3710, %v3712
    %v3714 = vrot.slane %v3698, %v3713
    %v3716 = vunpack.c.l.s4 1966171168
    %v3717 = vunpack.c.0.s8 %v3716
    %v3718 = vlaneseq
    %v3719 = vshrl.u32 %v3718, 7
    %v3720 = vsub.s32 %v3717, %v3719
    %v3721 = vrot.slane %v3699, %v3720
    %v3723 = vunpack.c.l.s4 1966171168
    %v3724 = vunpack.c.0.s8 %v3723
    %v3725 = vlaneseq
    %v3726 = vshrl.u32 %v3725, 7
    %v3727 = vsub.s32 %v3724, %v3726
    %v3728 = vrot.slane %v3700, %v3727
    %v3729 = vcombine.high %v3707, %v3707
    %v3730 = vcombine.high %v3714, %v3714
    %v3731 = vcombine.high %v3721, %v3721
    %v3732 = vcombine.high %v3728, %v3728
    %v3733 = vcombine.high %v3677, %v3677
    %v3735 = vunpack.c.l.s4 1966171168
    %v3736 = vunpack.c.0.s8 %v3735
    %v3737 = vlaneseq
    %v3738 = vshrl.u32 %v3737, 7
    %v3739 = vsub.s32 %v3736, %v3738
    %v3740 = vrot.slane %v3677, %v3739
    %v3742 = vunpack.c.l.s4 1966171168
    %v3743 = vunpack.c.0.s8 %v3742
    %v3744 = vlaneseq
    %v3745 = vshrl.u32 %v3744, 7
    %v3746 = vsub.s32 %v3743, %v3745
    %v3747 = vrot.slane %v3733, %v3746
    %v3748 = vcombine.high %v3740, %v3740
    %v3749 = vcombine.high %v3747, %v3747
    %v3751 = vunpack.c.l.s4 1966171168
    %v3752 = vunpack.c.0.s8 %v3751
    %v3753 = vlaneseq
    %v3754 = vshrl.u32 %v3753, 7
    %v3755 = vsub.s32 %v3752, %v3754
    %v3756 = vrot.slane %v3740, %v3755
    %v3758 = vunpack.c.l.s4 1966171168
    %v3759 = vunpack.c.0.s8 %v3758
    %v3760 = vlaneseq
    %v3761 = vshrl.u32 %v3760, 7
    %v3762 = vsub.s32 %v3759, %v3761
    %v3763 = vrot.slane %v3747, %v3762
    %v3765 = vunpack.c.l.s4 1966171168
    %v3766 = vunpack.c.0.s8 %v3765
    %v3767 = vlaneseq
    %v3768 = vshrl.u32 %v3767, 7
    %v3769 = vsub.s32 %v3766, %v3768
    %v3770 = vrot.slane %v3748, %v3769
    %v3772 = vunpack.c.l.s4 1966171168
    %v3773 = vunpack.c.0.s8 %v3772
    %v3774 = vlaneseq
    %v3775 = vshrl.u32 %v3774, 7
    %v3776 = vsub.s32 %v3773, %v3775
    %v3777 = vrot.slane %v3749, %v3776
    %v3778 = vcombine.high %v3756, %v3756
    %v3779 = vcombine.high %v3763, %v3763
    %v3780 = vcombine.high %v3770, %v3770
    %v3781 = vcombine.high %v3777, %v3777
    %3798 = vst [vmem:[%s4 + $0x4] sm:$0x1] %v3707
    %3799 = vst [vmem:[%s4 + $0xc] sm:$0x1] %v3721
    %3800 = vst [vmem:[%s4 + $0x14] sm:$0x1] %v3729
    %3801 = vst [vmem:[%s4 + $0x1c] sm:$0x1] %v3731
    %3802 = vst [vmem:[%s4 + $0x24] sm:$0x1] %v3714
    %3803 = vst [vmem:[%s4 + $0x2c] sm:$0x1] %v3728
    %3804 = vst [vmem:[%s4 + $0x34] sm:$0x1] %v3730
    %3805 = vst [vmem:[%s4 + $0x3c] sm:$0x1] %v3732
    %3806 = vst [vmem:[%s4 + $0x44] sm:$0x1] %v3756
    %3807 = vst [vmem:[%s4 + $0x4c] sm:$0x1] %v3770
    %3808 = vst [vmem:[%s4 + $0x54] sm:$0x1] %v3778
    %3809 = vst [vmem:[%s4 + $0x5c] sm:$0x1] %v3780
    %3810 = vst [vmem:[%s4 + $0x64] sm:$0x1] %v3763
    %3811 = vst [vmem:[%s4 + $0x6c] sm:$0x1] %v3777
    %3812 = vst [vmem:[%s4 + $0x74] sm:$0x1] %v3779
    %3813 = vst [vmem:[%s4 + $0x7c] sm:$0x1] %v3781
    %s3814 = scalar_lea.vmem %s0, 40
    %v3815 = vld [vmem:[%s3814] sm:$0xf]
    %v3816 = vld [vmem:[%s3814 + $0x4] sm:$0xf]
    %v3817 = vld [vmem:[#allocation4] sm:$0xff]
    %v3818 = vld [vmem:[#allocation4 + $0x8] sm:$0xff]
    %v3819 = vld [vmem:[#allocation4 + $0x10] sm:$0xff]
    %v3820 = vld [vmem:[#allocation4 + $0x18] sm:$0xff]
    %v3821 = vld [vmem:[#allocation4 + $0x20] sm:$0xff]
    %v3822 = vld [vmem:[#allocation4 + $0x28] sm:$0xff]
    %v3823 = vld [vmem:[#allocation4 + $0x30] sm:$0xff]
    %v3824 = vld [vmem:[#allocation4 + $0x38] sm:$0xff]
    %v3825 = vld [vmem:[#allocation4 + $0x40] sm:$0xff]
    %v3826 = vld [vmem:[#allocation4 + $0x48] sm:$0xff]
    %v3827 = vld [vmem:[#allocation4 + $0x50] sm:$0xff]
    %v3828 = vld [vmem:[#allocation4 + $0x58] sm:$0xff]
    %v3829 = vld [vmem:[#allocation4 + $0x60] sm:$0xff]
    %v3830 = vld [vmem:[#allocation4 + $0x68] sm:$0xff]
    %v3831 = vld [vmem:[#allocation4 + $0x70] sm:$0xff]
    %v3832 = vld [vmem:[#allocation4 + $0x78] sm:$0xff]
    %v3833 = vld [vmem:[#allocation4 + $0x80] sm:$0xff]
    %v3834 = vld [vmem:[#allocation4 + $0x88] sm:$0xff]
    %v3835 = vld [vmem:[#allocation4 + $0x90] sm:$0xff]
    %v3836 = vld [vmem:[#allocation4 + $0x98] sm:$0xff]
    %v3837 = vld [vmem:[#allocation4 + $0xa0] sm:$0xff]
    %v3838 = vld [vmem:[#allocation4 + $0xa8] sm:$0xff]
    %v3839 = vld [vmem:[#allocation4 + $0xb0] sm:$0xff]
    %v3840 = vld [vmem:[#allocation4 + $0xb8] sm:$0xff]
    %v3841 = vld [vmem:[#allocation4 + $0xc0] sm:$0xff]
    %v3842 = vld [vmem:[#allocation4 + $0xc8] sm:$0xff]
    %v3843 = vld [vmem:[#allocation4 + $0xd0] sm:$0xff]
    %v3844 = vld [vmem:[#allocation4 + $0xd8] sm:$0xff]
    %v3845 = vld [vmem:[#allocation4 + $0xe0] sm:$0xff]
    %v3846 = vld [vmem:[#allocation4 + $0xe8] sm:$0xff]
    %v3847 = vld [vmem:[#allocation4 + $0xf0] sm:$0xff]
    %v3848 = vld [vmem:[#allocation4 + $0xf8] sm:$0xff]
    %v3849 = vld [vmem:[#allocation2] sm:$0xff]
    %v3850 = vld [vmem:[#allocation6] sm:$0xff]
    %v3851 = vld [vmem:[#allocation6 + $0x8] sm:$0xff]
    %v3852 = vld [vmem:[#allocation6 + $0x10] sm:$0xff]
    %v3853 = vld [vmem:[#allocation6 + $0x18] sm:$0xff]
    %v3854 = vld [vmem:[#allocation6 + $0x20] sm:$0xff]
    %v3855 = vld [vmem:[#allocation6 + $0x28] sm:$0xff]
    %v3856 = vld [vmem:[#allocation6 + $0x30] sm:$0xff]
    %v3857 = vld [vmem:[#allocation6 + $0x38] sm:$0xff]
    %v3858 = vld [vmem:[#allocation6 + $0x40] sm:$0xff]
    %v3859 = vld [vmem:[#allocation6 + $0x48] sm:$0xff]
    %v3860 = vld [vmem:[#allocation6 + $0x50] sm:$0xff]
    %v3861 = vld [vmem:[#allocation6 + $0x58] sm:$0xff]
    %v3862 = vld [vmem:[#allocation6 + $0x60] sm:$0xff]
    %v3863 = vld [vmem:[#allocation6 + $0x68] sm:$0xff]
    %v3864 = vld [vmem:[#allocation6 + $0x70] sm:$0xff]
    %v3865 = vld [vmem:[#allocation6 + $0x78] sm:$0xff]
    %v3866 = vld [vmem:[#allocation6 + $0x80] sm:$0xff]
    %v3867 = vld [vmem:[#allocation6 + $0x88] sm:$0xff]
    %v3868 = vld [vmem:[#allocation6 + $0x90] sm:$0xff]
    %v3869 = vld [vmem:[#allocation6 + $0x98] sm:$0xff]
    %v3870 = vld [vmem:[#allocation6 + $0xa0] sm:$0xff]
    %v3871 = vld [vmem:[#allocation6 + $0xa8] sm:$0xff]
    %v3872 = vld [vmem:[#allocation6 + $0xb0] sm:$0xff]
    %v3873 = vld [vmem:[#allocation6 + $0xb8] sm:$0xff]
    %v3874 = vld [vmem:[#allocation6 + $0xc0] sm:$0xff]
    %v3875 = vld [vmem:[#allocation6 + $0xc8] sm:$0xff]
    %v3876 = vld [vmem:[#allocation6 + $0xd0] sm:$0xff]
    %v3877 = vld [vmem:[#allocation6 + $0xd8] sm:$0xff]
    %v3878 = vld [vmem:[#allocation6 + $0xe0] sm:$0xff]
    %v3879 = vld [vmem:[#allocation6 + $0xe8] sm:$0xff]
    %v3880 = vld [vmem:[#allocation6 + $0xf0] sm:$0xff]
    %v3881 = vld [vmem:[#allocation6 + $0xf8] sm:$0xff]
    %v3914 = vunpack.c.l.b16 %v3850
    %v3915 = vunpack.c.h.b16 %v3850
    %v3916 = vunpack.c.l.b16 %v3851
    %v3917 = vunpack.c.h.b16 %v3851
    %v3918 = vunpack.c.l.b16 %v3852
    %v3919 = vunpack.c.h.b16 %v3852
    %v3920 = vunpack.c.l.b16 %v3853
    %v3921 = vunpack.c.h.b16 %v3853
    %v3922 = vunpack.c.l.b16 %v3854
    %v3923 = vunpack.c.h.b16 %v3854
    %v3924 = vunpack.c.l.b16 %v3855
    %v3925 = vunpack.c.h.b16 %v3855
    %v3926 = vunpack.c.l.b16 %v3856
    %v3927 = vunpack.c.h.b16 %v3856
    %v3928 = vunpack.c.l.b16 %v3857
    %v3929 = vunpack.c.h.b16 %v3857
    %v3930 = vunpack.c.l.b16 %v3858
    %v3931 = vunpack.c.h.b16 %v3858
    %v3932 = vunpack.c.l.b16 %v3859
    %v3933 = vunpack.c.h.b16 %v3859
    %v3934 = vunpack.c.l.b16 %v3860
    %v3935 = vunpack.c.h.b16 %v3860
    %v3936 = vunpack.c.l.b16 %v3861
    %v3937 = vunpack.c.h.b16 %v3861
    %v3938 = vunpack.c.l.b16 %v3862
    %v3939 = vunpack.c.h.b16 %v3862
    %v3940 = vunpack.c.l.b16 %v3863
    %v3941 = vunpack.c.h.b16 %v3863
    %v3942 = vunpack.c.l.b16 %v3864
    %v3943 = vunpack.c.h.b16 %v3864
    %v3944 = vunpack.c.l.b16 %v3865
    %v3945 = vunpack.c.h.b16 %v3865
    %v3946 = vunpack.c.l.b16 %v3866
    %v3947 = vunpack.c.h.b16 %v3866
    %v3948 = vunpack.c.l.b16 %v3867
    %v3949 = vunpack.c.h.b16 %v3867
    %v3950 = vunpack.c.l.b16 %v3868
    %v3951 = vunpack.c.h.b16 %v3868
    %v3952 = vunpack.c.l.b16 %v3869
    %v3953 = vunpack.c.h.b16 %v3869
    %v3954 = vunpack.c.l.b16 %v3870
    %v3955 = vunpack.c.h.b16 %v3870
    %v3956 = vunpack.c.l.b16 %v3871
    %v3957 = vunpack.c.h.b16 %v3871
    %v3958 = vunpack.c.l.b16 %v3872
    %v3959 = vunpack.c.h.b16 %v3872
    %v3960 = vunpack.c.l.b16 %v3873
    %v3961 = vunpack.c.h.b16 %v3873
    %v3962 = vunpack.c.l.b16 %v3874
    %v3963 = vunpack.c.h.b16 %v3874
    %v3964 = vunpack.c.l.b16 %v3875
    %v3965 = vunpack.c.h.b16 %v3875
    %v3966 = vunpack.c.l.b16 %v3876
    %v3967 = vunpack.c.h.b16 %v3876
    %v3968 = vunpack.c.l.b16 %v3877
    %v3969 = vunpack.c.h.b16 %v3877
    %v3970 = vunpack.c.l.b16 %v3878
    %v3971 = vunpack.c.h.b16 %v3878
    %v3972 = vunpack.c.l.b16 %v3879
    %v3973 = vunpack.c.h.b16 %v3879
    %v3974 = vunpack.c.l.b16 %v3880
    %v3975 = vunpack.c.h.b16 %v3880
    %v3976 = vunpack.c.l.b16 %v3881
    %v3977 = vunpack.c.h.b16 %v3881
    %v3978 = vpack.c.b16 %v3918, %v3914
    %v3979 = vpack.c.b16 %v3919, %v3915
    %v3980 = vpack.c.b16 %v3920, %v3916
    %v3981 = vpack.c.b16 %v3921, %v3917
    %v3982 = vpack.c.b16 %v3926, %v3922
    %v3983 = vpack.c.b16 %v3927, %v3923
    %v3984 = vpack.c.b16 %v3928, %v3924
    %v3985 = vpack.c.b16 %v3929, %v3925
    %v3986 = vpack.c.b16 %v3934, %v3930
    %v3987 = vpack.c.b16 %v3935, %v3931
    %v3988 = vpack.c.b16 %v3936, %v3932
    %v3989 = vpack.c.b16 %v3937, %v3933
    %v3990 = vpack.c.b16 %v3942, %v3938
    %v3991 = vpack.c.b16 %v3943, %v3939
    %v3992 = vpack.c.b16 %v3944, %v3940
    %v3993 = vpack.c.b16 %v3945, %v3941
    %v3994 = vpack.c.b16 %v3950, %v3946
    %v3995 = vpack.c.b16 %v3951, %v3947
    %v3996 = vpack.c.b16 %v3952, %v3948
    %v3997 = vpack.c.b16 %v3953, %v3949
    %v3998 = vpack.c.b16 %v3958, %v3954
    %v3999 = vpack.c.b16 %v3959, %v3955
    %v4000 = vpack.c.b16 %v3960, %v3956
    %v4001 = vpack.c.b16 %v3961, %v3957
    %v4002 = vpack.c.b16 %v3966, %v3962
    %v4003 = vpack.c.b16 %v3967, %v3963
    %v4004 = vpack.c.b16 %v3968, %v3964
    %v4005 = vpack.c.b16 %v3969, %v3965
    %v4006 = vpack.c.b16 %v3974, %v3970
    %v4007 = vpack.c.b16 %v3975, %v3971
    %v4008 = vpack.c.b16 %v3976, %v3972
    %v4009 = vpack.c.b16 %v3977, %v3973
    %4042 = vmatprep.subr.bf16.mxu0 %v3979
    %4043 = vmatpush1.bf16.msra.mxu0 %v3978
    %4044 = vmatprep.subr.bf16.mxu0 %v3983
    %4045 = vmatpush1.bf16.msra.mxu0 %v3982
    %4046 = vmatprep.subr.bf16.mxu0 %v3987
    %4047 = vmatpush1.bf16.msra.mxu0 %v3986
    %4048 = vmatprep.subr.bf16.mxu0 %v3991
    %4049 = vmatpush1.bf16.msra.mxu0 %v3990
    %4050 = vmatprep.subr.bf16.mxu0 %v3995
    %4051 = vmatpush1.bf16.msra.mxu0 %v3994
    %4052 = vmatprep.subr.bf16.mxu0 %v3999
    %4053 = vmatpush1.bf16.msra.mxu0 %v3998
    %4054 = vmatprep.subr.bf16.mxu0 %v4003
    %4055 = vmatpush1.bf16.msra.mxu0 %v4002
    %4056 = vmatprep.subr.bf16.mxu0 %v4007
    %4057 = vmatpush1.bf16.msra.mxu0 %v4006
    %4058 = vmatprep.subr.bf16.mxu0 0
    %4059 = vmatpush1.bf16.msra.mxu0 0
    %4060 = vmatprep.subr.bf16.mxu0 0
    %4061 = vmatpush1.bf16.msra.mxu0 0
    %4062 = vmatprep.subr.bf16.mxu0 0
    %4063 = vmatpush1.bf16.msra.mxu0 0
    %4064 = vmatprep.subr.bf16.mxu0 0
    %4065 = vmatpush1.bf16.msra.mxu0 0
    %4066 = vmatprep.subr.bf16.mxu0 0
    %4067 = vmatpush1.bf16.msra.mxu0 0
    %4068 = vmatprep.subr.bf16.mxu0 0
    %4069 = vmatpush1.bf16.msra.mxu0 0
    %4070 = vmatprep.subr.bf16.mxu0 0
    %4071 = vmatpush1.bf16.msra.mxu0 0
    %4072 = vmatprep.subr.bf16.mxu0 0
    %4073 = vmatpush1.bf16.msra.mxu0 0
    %4074 = vmatprep.mubr.bf16.mxu0 0
    %4075 = vmatmul.mubr.bf16.gmra.mrb[0].mxu0 %v3849
    %v4076 = vpop.f32.mrb[0].mxu0
    %v4077 = vadd.f32 0.0, %v4076
    %v4078 = vpop.f32.mrb[0].mxu0
    %v4079 = vadd.f32 0.0, %v4078
    %v4080 = vpop.f32.mrb[0].mxu0
    %v4081 = vadd.f32 0.0, %v4080
    %v4082 = vpop.f32.mrb[0].mxu0
    %v4083 = vadd.f32 0.0, %v4082
    %4084 = vdwg.mxu0
    %4085 = vmatprep.subr.bf16.mxu0 %v3981
    %4086 = vmatpush1.bf16.msra.mxu0 %v3980
    %4087 = vmatprep.subr.bf16.mxu0 %v3985
    %4088 = vmatpush1.bf16.msra.mxu0 %v3984
    %4089 = vmatprep.subr.bf16.mxu0 %v3989
    %4090 = vmatpush1.bf16.msra.mxu0 %v3988
    %4091 = vmatprep.subr.bf16.mxu0 %v3993
    %4092 = vmatpush1.bf16.msra.mxu0 %v3992
    %4093 = vmatprep.subr.bf16.mxu0 %v3997
    %4094 = vmatpush1.bf16.msra.mxu0 %v3996
    %4095 = vmatprep.subr.bf16.mxu0 %v4001
    %4096 = vmatpush1.bf16.msra.mxu0 %v4000
    %4097 = vmatprep.subr.bf16.mxu0 %v4005
    %4098 = vmatpush1.bf16.msra.mxu0 %v4004
    %4099 = vmatprep.subr.bf16.mxu0 %v4009
    %4100 = vmatpush1.bf16.msra.mxu0 %v4008
    %4101 = vmatprep.subr.bf16.mxu0 0
    %4102 = vmatpush1.bf16.msra.mxu0 0
    %4103 = vmatprep.subr.bf16.mxu0 0
    %4104 = vmatpush1.bf16.msra.mxu0 0
    %4105 = vmatprep.subr.bf16.mxu0 0
    %4106 = vmatpush1.bf16.msra.mxu0 0
    %4107 = vmatprep.subr.bf16.mxu0 0
    %4108 = vmatpush1.bf16.msra.mxu0 0
    %4109 = vmatprep.subr.bf16.mxu0 0
    %4110 = vmatpush1.bf16.msra.mxu0 0
    %4111 = vmatprep.subr.bf16.mxu0 0
    %4112 = vmatpush1.bf16.msra.mxu0 0
    %4113 = vmatprep.subr.bf16.mxu0 0
    %4114 = vmatpush1.bf16.msra.mxu0 0
    %4115 = vmatprep.subr.bf16.mxu0 0
    %4116 = vmatpush1.bf16.msra.mxu0 0
    %4117 = vmatprep.mubr.bf16.mxu0 0
    %4118 = vmatmul.mubr.bf16.gmra.mrb[0].mxu0 %v3849
    %v4119 = vpop.f32.mrb[0].mxu0
    %v4120 = vadd.f32 0.0, %v4119
    %v4121 = vpop.f32.mrb[0].mxu0
    %v4122 = vadd.f32 0.0, %v4121
    %v4123 = vpop.f32.mrb[0].mxu0
    %v4124 = vadd.f32 0.0, %v4123
    %v4125 = vpop.f32.mrb[0].mxu0
    %v4126 = vadd.f32 0.0, %v4125
    %4127 = vdwg.mxu0
    %v4130 = vunpack.c.l.b16 %v3815
    %v4131 = vunpack.c.l.b16 %v3816
    %v4132 = vpack.c.b16 %v4131, %v4130
    %v4166 = vunpack.c.l.b16 %v3817
    %v4167 = vunpack.c.h.b16 %v3817
    %v4168 = vunpack.c.l.b16 %v3818
    %v4169 = vunpack.c.h.b16 %v3818
    %v4170 = vunpack.c.l.b16 %v3819
    %v4171 = vunpack.c.h.b16 %v3819
    %v4172 = vunpack.c.l.b16 %v3820
    %v4173 = vunpack.c.h.b16 %v3820
    %v4174 = vunpack.c.l.b16 %v3821
    %v4175 = vunpack.c.h.b16 %v3821
    %v4176 = vunpack.c.l.b16 %v3822
    %v4177 = vunpack.c.h.b16 %v3822
    %v4178 = vunpack.c.l.b16 %v3823
    %v4179 = vunpack.c.h.b16 %v3823
    %v4180 = vunpack.c.l.b16 %v3824
    %v4181 = vunpack.c.h.b16 %v3824
    %v4182 = vunpack.c.l.b16 %v3825
    %v4183 = vunpack.c.h.b16 %v3825
    %v4184 = vunpack.c.l.b16 %v3826
    %v4185 = vunpack.c.h.b16 %v3826
    %v4186 = vunpack.c.l.b16 %v3827
    %v4187 = vunpack.c.h.b16 %v3827
    %v4188 = vunpack.c.l.b16 %v3828
    %v4189 = vunpack.c.h.b16 %v3828
    %v4190 = vunpack.c.l.b16 %v3829
    %v4191 = vunpack.c.h.b16 %v3829
    %v4192 = vunpack.c.l.b16 %v3830
    %v4193 = vunpack.c.h.b16 %v3830
    %v4194 = vunpack.c.l.b16 %v3831
    %v4195 = vunpack.c.h.b16 %v3831
    %v4196 = vunpack.c.l.b16 %v3832
    %v4197 = vunpack.c.h.b16 %v3832
    %v4198 = vunpack.c.l.b16 %v3833
    %v4199 = vunpack.c.h.b16 %v3833
    %v4200 = vunpack.c.l.b16 %v3834
    %v4201 = vunpack.c.h.b16 %v3834
    %v4202 = vunpack.c.l.b16 %v3835
    %v4203 = vunpack.c.h.b16 %v3835
    %v4204 = vunpack.c.l.b16 %v3836
    %v4205 = vunpack.c.h.b16 %v3836
    %v4206 = vunpack.c.l.b16 %v3837
    %v4207 = vunpack.c.h.b16 %v3837
    %v4208 = vunpack.c.l.b16 %v3838
    %v4209 = vunpack.c.h.b16 %v3838
    %v4210 = vunpack.c.l.b16 %v3839
    %v4211 = vunpack.c.h.b16 %v3839
    %v4212 = vunpack.c.l.b16 %v3840
    %v4213 = vunpack.c.h.b16 %v3840
    %v4214 = vunpack.c.l.b16 %v3841
    %v4215 = vunpack.c.h.b16 %v3841
    %v4216 = vunpack.c.l.b16 %v3842
    %v4217 = vunpack.c.h.b16 %v3842
    %v4218 = vunpack.c.l.b16 %v3843
    %v4219 = vunpack.c.h.b16 %v3843
    %v4220 = vunpack.c.l.b16 %v3844
    %v4221 = vunpack.c.h.b16 %v3844
    %v4222 = vunpack.c.l.b16 %v3845
    %v4223 = vunpack.c.h.b16 %v3845
    %v4224 = vunpack.c.l.b16 %v3846
    %v4225 = vunpack.c.h.b16 %v3846
    %v4226 = vunpack.c.l.b16 %v3847
    %v4227 = vunpack.c.h.b16 %v3847
    %v4228 = vunpack.c.l.b16 %v3848
    %v4229 = vunpack.c.h.b16 %v3848
    %v4230 = vpack.c.b16 %v4170, %v4166
    %v4231 = vpack.c.b16 %v4171, %v4167
    %v4232 = vpack.c.b16 %v4172, %v4168
    %v4233 = vpack.c.b16 %v4173, %v4169
    %v4234 = vpack.c.b16 %v4178, %v4174
    %v4235 = vpack.c.b16 %v4179, %v4175
    %v4236 = vpack.c.b16 %v4180, %v4176
    %v4237 = vpack.c.b16 %v4181, %v4177
    %v4238 = vpack.c.b16 %v4186, %v4182
    %v4239 = vpack.c.b16 %v4187, %v4183
    %v4240 = vpack.c.b16 %v4188, %v4184
    %v4241 = vpack.c.b16 %v4189, %v4185
    %v4242 = vpack.c.b16 %v4194, %v4190
    %v4243 = vpack.c.b16 %v4195, %v4191
    %v4244 = vpack.c.b16 %v4196, %v4192
    %v4245 = vpack.c.b16 %v4197, %v4193
    %v4246 = vpack.c.b16 %v4202, %v4198
    %v4247 = vpack.c.b16 %v4203, %v4199
    %v4248 = vpack.c.b16 %v4204, %v4200
    %v4249 = vpack.c.b16 %v4205, %v4201
    %v4250 = vpack.c.b16 %v4210, %v4206
    %v4251 = vpack.c.b16 %v4211, %v4207
    %v4252 = vpack.c.b16 %v4212, %v4208
    %v4253 = vpack.c.b16 %v4213, %v4209
    %v4254 = vpack.c.b16 %v4218, %v4214
    %v4255 = vpack.c.b16 %v4219, %v4215
    %v4256 = vpack.c.b16 %v4220, %v4216
    %v4257 = vpack.c.b16 %v4221, %v4217
    %v4258 = vpack.c.b16 %v4226, %v4222
    %v4259 = vpack.c.b16 %v4227, %v4223
    %v4260 = vpack.c.b16 %v4228, %v4224
    %v4261 = vpack.c.b16 %v4229, %v4225
    %4294 = vmatprep.subr.bf16.mxu0 %v4231
    %4295 = vmatpush1.bf16.msra.mxu0 %v4230
    %4296 = vmatprep.subr.bf16.mxu0 %v4235
    %4297 = vmatpush1.bf16.msra.mxu0 %v4234
    %4298 = vmatprep.subr.bf16.mxu0 %v4239
    %4299 = vmatpush1.bf16.msra.mxu0 %v4238
    %4300 = vmatprep.subr.bf16.mxu0 %v4243
    %4301 = vmatpush1.bf16.msra.mxu0 %v4242
    %4302 = vmatprep.subr.bf16.mxu0 %v4247
    %4303 = vmatpush1.bf16.msra.mxu0 %v4246
    %4304 = vmatprep.subr.bf16.mxu0 %v4251
    %4305 = vmatpush1.bf16.msra.mxu0 %v4250
    %4306 = vmatprep.subr.bf16.mxu0 %v4255
    %4307 = vmatpush1.bf16.msra.mxu0 %v4254
    %4308 = vmatprep.subr.bf16.mxu0 %v4259
    %4309 = vmatpush1.bf16.msra.mxu0 %v4258
    %4310 = vmatprep.subr.bf16.mxu0 0
    %4311 = vmatpush1.bf16.msra.mxu0 0
    %4312 = vmatprep.subr.bf16.mxu0 0
    %4313 = vmatpush1.bf16.msra.mxu0 0
    %4314 = vmatprep.subr.bf16.mxu0 0
    %4315 = vmatpush1.bf16.msra.mxu0 0
    %4316 = vmatprep.subr.bf16.mxu0 0
    %4317 = vmatpush1.bf16.msra.mxu0 0
    %4318 = vmatprep.subr.bf16.mxu0 0
    %4319 = vmatpush1.bf16.msra.mxu0 0
    %4320 = vmatprep.subr.bf16.mxu0 0
    %4321 = vmatpush1.bf16.msra.mxu0 0
    %4322 = vmatprep.subr.bf16.mxu0 0
    %4323 = vmatpush1.bf16.msra.mxu0 0
    %4324 = vmatprep.subr.bf16.mxu0 0
    %4325 = vmatpush1.bf16.msra.mxu0 0
    %4326 = vmatprep.mubr.bf16.mxu0 0
    %4327 = vmatmul.mubr.bf16.gmra.mrb[0].mxu0 %v4132
    %v4328 = vpop.f32.mrb[0].mxu0
    %v4329 = vadd.f32 %v4077, %v4328
    %v4330 = vpop.f32.mrb[0].mxu0
    %v4331 = vadd.f32 %v4079, %v4330
    %v4332 = vpop.f32.mrb[0].mxu0
    %v4333 = vadd.f32 %v4081, %v4332
    %v4334 = vpop.f32.mrb[0].mxu0
    %v4335 = vadd.f32 %v4083, %v4334
    %4336 = vdwg.mxu0
    %4337 = vmatprep.subr.bf16.mxu0 %v4233
    %4338 = vmatpush1.bf16.msra.mxu0 %v4232
    %4339 = vmatprep.subr.bf16.mxu0 %v4237
    %4340 = vmatpush1.bf16.msra.mxu0 %v4236
    %4341 = vmatprep.subr.bf16.mxu0 %v4241
    %4342 = vmatpush1.bf16.msra.mxu0 %v4240
    %4343 = vmatprep.subr.bf16.mxu0 %v4245
    %4344 = vmatpush1.bf16.msra.mxu0 %v4244
    %4345 = vmatprep.subr.bf16.mxu0 %v4249
    %4346 = vmatpush1.bf16.msra.mxu0 %v4248
    %4347 = vmatprep.subr.bf16.mxu0 %v4253
    %4348 = vmatpush1.bf16.msra.mxu0 %v4252
    %4349 = vmatprep.subr.bf16.mxu0 %v4257
    %4350 = vmatpush1.bf16.msra.mxu0 %v4256
    %4351 = vmatprep.subr.bf16.mxu0 %v4261
    %4352 = vmatpush1.bf16.msra.mxu0 %v4260
    %4353 = vmatprep.subr.bf16.mxu0 0
    %4354 = vmatpush1.bf16.msra.mxu0 0
    %4355 = vmatprep.subr.bf16.mxu0 0
    %4356 = vmatpush1.bf16.msra.mxu0 0
    %4357 = vmatprep.subr.bf16.mxu0 0
    %4358 = vmatpush1.bf16.msra.mxu0 0
    %4359 = vmatprep.subr.bf16.mxu0 0
    %4360 = vmatpush1.bf16.msra.mxu0 0
    %4361 = vmatprep.subr.bf16.mxu0 0
    %4362 = vmatpush1.bf16.msra.mxu0 0
    %4363 = vmatprep.subr.bf16.mxu0 0
    %4364 = vmatpush1.bf16.msra.mxu0 0
    %4365 = vmatprep.subr.bf16.mxu0 0
    %4366 = vmatpush1.bf16.msra.mxu0 0
    %4367 = vmatprep.subr.bf16.mxu0 0
    %4368 = vmatpush1.bf16.msra.mxu0 0
    %4369 = vmatprep.mubr.bf16.mxu0 0
    %4370 = vmatmul.mubr.bf16.gmra.mrb[0].mxu0 %v4132
    %v4371 = vpop.f32.mrb[0].mxu0
    %v4372 = vadd.f32 %v4120, %v4371
    %v4373 = vpop.f32.mrb[0].mxu0
    %v4374 = vadd.f32 %v4122, %v4373
    %v4375 = vpop.f32.mrb[0].mxu0
    %v4376 = vadd.f32 %v4124, %v4375
    %v4377 = vpop.f32.mrb[0].mxu0
    %v4378 = vadd.f32 %v4126, %v4377
    %4379 = vdwg.mxu0
    %v4380 = vadd.f32 %v4329, %v58
    %v4381 = vadd.f32 %v4331, %v62
    %v4382 = vadd.f32 %v4372, %v66
    %v4383 = vadd.f32 %v4374, %v70
    %v4384 = vadd.f32 %v4333, %v58
    %v4385 = vadd.f32 %v4335, %v62
    %v4386 = vadd.f32 %v4376, %v66
    %v4387 = vadd.f32 %v4378, %v70
    %v4388 = vmul.f32 %v4380, 0.5
    %v4389 = vmul.f32 %v4384, 0.5
    %v4390 = vtanh.pop %v4388
    %v4391 = vtanh.pop %v4389
    %v4392 = vadd.f32 %v4390, 1.0
    %v4393 = vadd.f32 %v4391, 1.0
    %v4394 = vmul.f32 %v4392, 0.5
    %v4395 = vmul.f32 %v4393, 0.5
    %v4396 = vmul.f32 %v4381, 0.5
    %v4397 = vmul.f32 %v4385, 0.5
    %v4398 = vtanh.pop %v4396
    %v4399 = vtanh.pop %v4397
    %v4400 = vadd.f32 %v4398, 1.0
    %v4401 = vadd.f32 %v4399, 1.0
    %v4402 = vmul.f32 %v4400, 0.5
    %v4403 = vmul.f32 %v4401, 0.5
    %v4404 = vtanh.pop %v4382
    %v4405 = vtanh.pop %v4386
    %v4406 = vmul.f32 %v4383, 0.5
    %v4407 = vmul.f32 %v4387, 0.5
    %v4408 = vtanh.pop %v4406
    %v4409 = vtanh.pop %v4407
    %v4410 = vadd.f32 %v4408, 1.0
    %v4411 = vadd.f32 %v4409, 1.0
    %v4412 = vmul.f32 %v4410, 0.5
    %v4413 = vmul.f32 %v4411, 0.5
    %v4414 = vld [vmem:[#allocation3] sm:$0xff]
    %v4415 = vld [vmem:[#allocation3 + $0x8] sm:$0xff]
    %v4416 = vmul.f32 %v4402, %v4414
    %v4417 = vmul.f32 %v4403, %v4415
    %v4418 = vmul.f32 %v4394, %v4404
    %v4419 = vmul.f32 %v4395, %v4405
    %v4420 = vadd.f32 %v4416, %v4418
    %v4421 = vadd.f32 %v4417, %v4419
    %v4422 = vtanh.pop %v4420
    %v4423 = vtanh.pop %v4421
    %v4424 = vmul.f32 %v4412, %v4422
    %v4425 = vmul.f32 %v4413, %v4423
    %4426 = vst [vmem:[#allocation3] sm:$0xff] %v4420
    %4427 = vst [vmem:[#allocation3 + $0x8] sm:$0xff] %v4421
    %v4428 = vpack.c.bf16 %v4425, %v4424
    %4429 = vst [vmem:[#allocation2] sm:$0xff] %v4428
    %v4432 = vcombine.high %v4424, %v4424
    %v4434 = vunpack.c.l.s4 1966171168
    %v4435 = vunpack.c.0.s8 %v4434
    %v4436 = vlaneseq
    %v4437 = vshrl.u32 %v4436, 7
    %v4438 = vsub.s32 %v4435, %v4437
    %v4439 = vrot.slane %v4424, %v4438
    %v4441 = vunpack.c.l.s4 1966171168
    %v4442 = vunpack.c.0.s8 %v4441
    %v4443 = vlaneseq
    %v4444 = vshrl.u32 %v4443, 7
    %v4445 = vsub.s32 %v4442, %v4444
    %v4446 = vrot.slane %v4432, %v4445
    %v4447 = vcombine.high %v4439, %v4439
    %v4448 = vcombine.high %v4446, %v4446
    %v4450 = vunpack.c.l.s4 1966171168
    %v4451 = vunpack.c.0.s8 %v4450
    %v4452 = vlaneseq
    %v4453 = vshrl.u32 %v4452, 7
    %v4454 = vsub.s32 %v4451, %v4453
    %v4455 = vrot.slane %v4439, %v4454
    %v4457 = vunpack.c.l.s4 1966171168
    %v4458 = vunpack.c.0.s8 %v4457
    %v4459 = vlaneseq
    %v4460 = vshrl.u32 %v4459, 7
    %v4461 = vsub.s32 %v4458, %v4460
    %v4462 = vrot.slane %v4446, %v4461
    %v4464 = vunpack.c.l.s4 1966171168
    %v4465 = vunpack.c.0.s8 %v4464
    %v4466 = vlaneseq
    %v4467 = vshrl.u32 %v4466, 7
    %v4468 = vsub.s32 %v4465, %v4467
    %v4469 = vrot.slane %v4447, %v4468
    %v4471 = vunpack.c.l.s4 1966171168
    %v4472 = vunpack.c.0.s8 %v4471
    %v4473 = vlaneseq
    %v4474 = vshrl.u32 %v4473, 7
    %v4475 = vsub.s32 %v4472, %v4474
    %v4476 = vrot.slane %v4448, %v4475
    %v4477 = vcombine.high %v4455, %v4455
    %v4478 = vcombine.high %v4462, %v4462
    %v4479 = vcombine.high %v4469, %v4469
    %v4480 = vcombine.high %v4476, %v4476
    %v4481 = vcombine.high %v4425, %v4425
    %v4483 = vunpack.c.l.s4 1966171168
    %v4484 = vunpack.c.0.s8 %v4483
    %v4485 = vlaneseq
    %v4486 = vshrl.u32 %v4485, 7
    %v4487 = vsub.s32 %v4484, %v4486
    %v4488 = vrot.slane %v4425, %v4487
    %v4490 = vunpack.c.l.s4 1966171168
    %v4491 = vunpack.c.0.s8 %v4490
    %v4492 = vlaneseq
    %v4493 = vshrl.u32 %v4492, 7
    %v4494 = vsub.s32 %v4491, %v4493
    %v4495 = vrot.slane %v4481, %v4494
    %v4496 = vcombine.high %v4488, %v4488
    %v4497 = vcombine.high %v4495, %v4495
    %v4499 = vunpack.c.l.s4 1966171168
    %v4500 = vunpack.c.0.s8 %v4499
    %v4501 = vlaneseq
    %v4502 = vshrl.u32 %v4501, 7
    %v4503 = vsub.s32 %v4500, %v4502
    %v4504 = vrot.slane %v4488, %v4503
    %v4506 = vunpack.c.l.s4 1966171168
    %v4507 = vunpack.c.0.s8 %v4506
    %v4508 = vlaneseq
    %v4509 = vshrl.u32 %v4508, 7
    %v4510 = vsub.s32 %v4507, %v4509
    %v4511 = vrot.slane %v4495, %v4510
    %v4513 = vunpack.c.l.s4 1966171168
    %v4514 = vunpack.c.0.s8 %v4513
    %v4515 = vlaneseq
    %v4516 = vshrl.u32 %v4515, 7
    %v4517 = vsub.s32 %v4514, %v4516
    %v4518 = vrot.slane %v4496, %v4517
    %v4520 = vunpack.c.l.s4 1966171168
    %v4521 = vunpack.c.0.s8 %v4520
    %v4522 = vlaneseq
    %v4523 = vshrl.u32 %v4522, 7
    %v4524 = vsub.s32 %v4521, %v4523
    %v4525 = vrot.slane %v4497, %v4524
    %v4526 = vcombine.high %v4504, %v4504
    %v4527 = vcombine.high %v4511, %v4511
    %v4528 = vcombine.high %v4518, %v4518
    %v4529 = vcombine.high %v4525, %v4525
    %4546 = vst [vmem:[%s4 + $0x5] sm:$0x1] %v4455
    %4547 = vst [vmem:[%s4 + $0xd] sm:$0x1] %v4469
    %4548 = vst [vmem:[%s4 + $0x15] sm:$0x1] %v4477
    %4549 = vst [vmem:[%s4 + $0x1d] sm:$0x1] %v4479
    %4550 = vst [vmem:[%s4 + $0x25] sm:$0x1] %v4462
    %4551 = vst [vmem:[%s4 + $0x2d] sm:$0x1] %v4476
    %4552 = vst [vmem:[%s4 + $0x35] sm:$0x1] %v4478
    %4553 = vst [vmem:[%s4 + $0x3d] sm:$0x1] %v4480
    %4554 = vst [vmem:[%s4 + $0x45] sm:$0x1] %v4504
    %4555 = vst [vmem:[%s4 + $0x4d] sm:$0x1] %v4518
    %4556 = vst [vmem:[%s4 + $0x55] sm:$0x1] %v4526
    %4557 = vst [vmem:[%s4 + $0x5d] sm:$0x1] %v4528
    %4558 = vst [vmem:[%s4 + $0x65] sm:$0x1] %v4511
    %4559 = vst [vmem:[%s4 + $0x6d] sm:$0x1] %v4525
    %4560 = vst [vmem:[%s4 + $0x75] sm:$0x1] %v4527
    %4561 = vst [vmem:[%s4 + $0x7d] sm:$0x1] %v4529
    %s4562 = scalar_lea.vmem %s0, 48
    %v4563 = vld [vmem:[%s4562] sm:$0xf]
    %v4564 = vld [vmem:[%s4562 + $0x4] sm:$0xf]
    %v4565 = vld [vmem:[#allocation4] sm:$0xff]
    %v4566 = vld [vmem:[#allocation4 + $0x8] sm:$0xff]
    %v4567 = vld [vmem:[#allocation4 + $0x10] sm:$0xff]
    %v4568 = vld [vmem:[#allocation4 + $0x18] sm:$0xff]
    %v4569 = vld [vmem:[#allocation4 + $0x20] sm:$0xff]
    %v4570 = vld [vmem:[#allocation4 + $0x28] sm:$0xff]
    %v4571 = vld [vmem:[#allocation4 + $0x30] sm:$0xff]
    %v4572 = vld [vmem:[#allocation4 + $0x38] sm:$0xff]
    %v4573 = vld [vmem:[#allocation4 + $0x40] sm:$0xff]
    %v4574 = vld [vmem:[#allocation4 + $0x48] sm:$0xff]
    %v4575 = vld [vmem:[#allocation4 + $0x50] sm:$0xff]
    %v4576 = vld [vmem:[#allocation4 + $0x58] sm:$0xff]
    %v4577 = vld [vmem:[#allocation4 + $0x60] sm:$0xff]
    %v4578 = vld [vmem:[#allocation4 + $0x68] sm:$0xff]
    %v4579 = vld [vmem:[#allocation4 + $0x70] sm:$0xff]
    %v4580 = vld [vmem:[#allocation4 + $0x78] sm:$0xff]
    %v4581 = vld [vmem:[#allocation4 + $0x80] sm:$0xff]
    %v4582 = vld [vmem:[#allocation4 + $0x88] sm:$0xff]
    %v4583 = vld [vmem:[#allocation4 + $0x90] sm:$0xff]
    %v4584 = vld [vmem:[#allocation4 + $0x98] sm:$0xff]
    %v4585 = vld [vmem:[#allocation4 + $0xa0] sm:$0xff]
    %v4586 = vld [vmem:[#allocation4 + $0xa8] sm:$0xff]
    %v4587 = vld [vmem:[#allocation4 + $0xb0] sm:$0xff]
    %v4588 = vld [vmem:[#allocation4 + $0xb8] sm:$0xff]
    %v4589 = vld [vmem:[#allocation4 + $0xc0] sm:$0xff]
    %v4590 = vld [vmem:[#allocation4 + $0xc8] sm:$0xff]
    %v4591 = vld [vmem:[#allocation4 + $0xd0] sm:$0xff]
    %v4592 = vld [vmem:[#allocation4 + $0xd8] sm:$0xff]
    %v4593 = vld [vmem:[#allocation4 + $0xe0] sm:$0xff]
    %v4594 = vld [vmem:[#allocation4 + $0xe8] sm:$0xff]
    %v4595 = vld [vmem:[#allocation4 + $0xf0] sm:$0xff]
    %v4596 = vld [vmem:[#allocation4 + $0xf8] sm:$0xff]
    %v4597 = vld [vmem:[#allocation2] sm:$0xff]
    %v4598 = vld [vmem:[#allocation6] sm:$0xff]
    %v4599 = vld [vmem:[#allocation6 + $0x8] sm:$0xff]
    %v4600 = vld [vmem:[#allocation6 + $0x10] sm:$0xff]
    %v4601 = vld [vmem:[#allocation6 + $0x18] sm:$0xff]
    %v4602 = vld [vmem:[#allocation6 + $0x20] sm:$0xff]
    %v4603 = vld [vmem:[#allocation6 + $0x28] sm:$0xff]
    %v4604 = vld [vmem:[#allocation6 + $0x30] sm:$0xff]
    %v4605 = vld [vmem:[#allocation6 + $0x38] sm:$0xff]
    %v4606 = vld [vmem:[#allocation6 + $0x40] sm:$0xff]
    %v4607 = vld [vmem:[#allocation6 + $0x48] sm:$0xff]
    %v4608 = vld [vmem:[#allocation6 + $0x50] sm:$0xff]
    %v4609 = vld [vmem:[#allocation6 + $0x58] sm:$0xff]
    %v4610 = vld [vmem:[#allocation6 + $0x60] sm:$0xff]
    %v4611 = vld [vmem:[#allocation6 + $0x68] sm:$0xff]
    %v4612 = vld [vmem:[#allocation6 + $0x70] sm:$0xff]
    %v4613 = vld [vmem:[#allocation6 + $0x78] sm:$0xff]
    %v4614 = vld [vmem:[#allocation6 + $0x80] sm:$0xff]
    %v4615 = vld [vmem:[#allocation6 + $0x88] sm:$0xff]
    %v4616 = vld [vmem:[#allocation6 + $0x90] sm:$0xff]
    %v4617 = vld [vmem:[#allocation6 + $0x98] sm:$0xff]
    %v4618 = vld [vmem:[#allocation6 + $0xa0] sm:$0xff]
    %v4619 = vld [vmem:[#allocation6 + $0xa8] sm:$0xff]
    %v4620 = vld [vmem:[#allocation6 + $0xb0] sm:$0xff]
    %v4621 = vld [vmem:[#allocation6 + $0xb8] sm:$0xff]
    %v4622 = vld [vmem:[#allocation6 + $0xc0] sm:$0xff]
    %v4623 = vld [vmem:[#allocation6 + $0xc8] sm:$0xff]
    %v4624 = vld [vmem:[#allocation6 + $0xd0] sm:$0xff]
    %v4625 = vld [vmem:[#allocation6 + $0xd8] sm:$0xff]
    %v4626 = vld [vmem:[#allocation6 + $0xe0] sm:$0xff]
    %v4627 = vld [vmem:[#allocation6 + $0xe8] sm:$0xff]
    %v4628 = vld [vmem:[#allocation6 + $0xf0] sm:$0xff]
    %v4629 = vld [vmem:[#allocation6 + $0xf8] sm:$0xff]
    %v4662 = vunpack.c.l.b16 %v4598
    %v4663 = vunpack.c.h.b16 %v4598
    %v4664 = vunpack.c.l.b16 %v4599
    %v4665 = vunpack.c.h.b16 %v4599
    %v4666 = vunpack.c.l.b16 %v4600
    %v4667 = vunpack.c.h.b16 %v4600
    %v4668 = vunpack.c.l.b16 %v4601
    %v4669 = vunpack.c.h.b16 %v4601
    %v4670 = vunpack.c.l.b16 %v4602
    %v4671 = vunpack.c.h.b16 %v4602
    %v4672 = vunpack.c.l.b16 %v4603
    %v4673 = vunpack.c.h.b16 %v4603
    %v4674 = vunpack.c.l.b16 %v4604
    %v4675 = vunpack.c.h.b16 %v4604
    %v4676 = vunpack.c.l.b16 %v4605
    %v4677 = vunpack.c.h.b16 %v4605
    %v4678 = vunpack.c.l.b16 %v4606
    %v4679 = vunpack.c.h.b16 %v4606
    %v4680 = vunpack.c.l.b16 %v4607
    %v4681 = vunpack.c.h.b16 %v4607
    %v4682 = vunpack.c.l.b16 %v4608
    %v4683 = vunpack.c.h.b16 %v4608
    %v4684 = vunpack.c.l.b16 %v4609
    %v4685 = vunpack.c.h.b16 %v4609
    %v4686 = vunpack.c.l.b16 %v4610
    %v4687 = vunpack.c.h.b16 %v4610
    %v4688 = vunpack.c.l.b16 %v4611
    %v4689 = vunpack.c.h.b16 %v4611
    %v4690 = vunpack.c.l.b16 %v4612
    %v4691 = vunpack.c.h.b16 %v4612
    %v4692 = vunpack.c.l.b16 %v4613
    %v4693 = vunpack.c.h.b16 %v4613
    %v4694 = vunpack.c.l.b16 %v4614
    %v4695 = vunpack.c.h.b16 %v4614
    %v4696 = vunpack.c.l.b16 %v4615
    %v4697 = vunpack.c.h.b16 %v4615
    %v4698 = vunpack.c.l.b16 %v4616
    %v4699 = vunpack.c.h.b16 %v4616
    %v4700 = vunpack.c.l.b16 %v4617
    %v4701 = vunpack.c.h.b16 %v4617
    %v4702 = vunpack.c.l.b16 %v4618
    %v4703 = vunpack.c.h.b16 %v4618
    %v4704 = vunpack.c.l.b16 %v4619
    %v4705 = vunpack.c.h.b16 %v4619
    %v4706 = vunpack.c.l.b16 %v4620
    %v4707 = vunpack.c.h.b16 %v4620
    %v4708 = vunpack.c.l.b16 %v4621
    %v4709 = vunpack.c.h.b16 %v4621
    %v4710 = vunpack.c.l.b16 %v4622
    %v4711 = vunpack.c.h.b16 %v4622
    %v4712 = vunpack.c.l.b16 %v4623
    %v4713 = vunpack.c.h.b16 %v4623
    %v4714 = vunpack.c.l.b16 %v4624
    %v4715 = vunpack.c.h.b16 %v4624
    %v4716 = vunpack.c.l.b16 %v4625
    %v4717 = vunpack.c.h.b16 %v4625
    %v4718 = vunpack.c.l.b16 %v4626
    %v4719 = vunpack.c.h.b16 %v4626
    %v4720 = vunpack.c.l.b16 %v4627
    %v4721 = vunpack.c.h.b16 %v4627
    %v4722 = vunpack.c.l.b16 %v4628
    %v4723 = vunpack.c.h.b16 %v4628
    %v4724 = vunpack.c.l.b16 %v4629
    %v4725 = vunpack.c.h.b16 %v4629
    %v4726 = vpack.c.b16 %v4666, %v4662
    %v4727 = vpack.c.b16 %v4667, %v4663
    %v4728 = vpack.c.b16 %v4668, %v4664
    %v4729 = vpack.c.b16 %v4669, %v4665
    %v4730 = vpack.c.b16 %v4674, %v4670
    %v4731 = vpack.c.b16 %v4675, %v4671
    %v4732 = vpack.c.b16 %v4676, %v4672
    %v4733 = vpack.c.b16 %v4677, %v4673
    %v4734 = vpack.c.b16 %v4682, %v4678
    %v4735 = vpack.c.b16 %v4683, %v4679
    %v4736 = vpack.c.b16 %v4684, %v4680
    %v4737 = vpack.c.b16 %v4685, %v4681
    %v4738 = vpack.c.b16 %v4690, %v4686
    %v4739 = vpack.c.b16 %v4691, %v4687
    %v4740 = vpack.c.b16 %v4692, %v4688
    %v4741 = vpack.c.b16 %v4693, %v4689
    %v4742 = vpack.c.b16 %v4698, %v4694
    %v4743 = vpack.c.b16 %v4699, %v4695
    %v4744 = vpack.c.b16 %v4700, %v4696
    %v4745 = vpack.c.b16 %v4701, %v4697
    %v4746 = vpack.c.b16 %v4706, %v4702
    %v4747 = vpack.c.b16 %v4707, %v4703
    %v4748 = vpack.c.b16 %v4708, %v4704
    %v4749 = vpack.c.b16 %v4709, %v4705
    %v4750 = vpack.c.b16 %v4714, %v4710
    %v4751 = vpack.c.b16 %v4715, %v4711
    %v4752 = vpack.c.b16 %v4716, %v4712
    %v4753 = vpack.c.b16 %v4717, %v4713
    %v4754 = vpack.c.b16 %v4722, %v4718
    %v4755 = vpack.c.b16 %v4723, %v4719
    %v4756 = vpack.c.b16 %v4724, %v4720
    %v4757 = vpack.c.b16 %v4725, %v4721
    %4790 = vmatprep.subr.bf16.mxu0 %v4727
    %4791 = vmatpush1.bf16.msra.mxu0 %v4726
    %4792 = vmatprep.subr.bf16.mxu0 %v4731
    %4793 = vmatpush1.bf16.msra.mxu0 %v4730
    %4794 = vmatprep.subr.bf16.mxu0 %v4735
    %4795 = vmatpush1.bf16.msra.mxu0 %v4734
    %4796 = vmatprep.subr.bf16.mxu0 %v4739
    %4797 = vmatpush1.bf16.msra.mxu0 %v4738
    %4798 = vmatprep.subr.bf16.mxu0 %v4743
    %4799 = vmatpush1.bf16.msra.mxu0 %v4742
    %4800 = vmatprep.subr.bf16.mxu0 %v4747
    %4801 = vmatpush1.bf16.msra.mxu0 %v4746
    %4802 = vmatprep.subr.bf16.mxu0 %v4751
    %4803 = vmatpush1.bf16.msra.mxu0 %v4750
    %4804 = vmatprep.subr.bf16.mxu0 %v4755
    %4805 = vmatpush1.bf16.msra.mxu0 %v4754
    %4806 = vmatprep.subr.bf16.mxu0 0
    %4807 = vmatpush1.bf16.msra.mxu0 0
    %4808 = vmatprep.subr.bf16.mxu0 0
    %4809 = vmatpush1.bf16.msra.mxu0 0
    %4810 = vmatprep.subr.bf16.mxu0 0
    %4811 = vmatpush1.bf16.msra.mxu0 0
    %4812 = vmatprep.subr.bf16.mxu0 0
    %4813 = vmatpush1.bf16.msra.mxu0 0
    %4814 = vmatprep.subr.bf16.mxu0 0
    %4815 = vmatpush1.bf16.msra.mxu0 0
    %4816 = vmatprep.subr.bf16.mxu0 0
    %4817 = vmatpush1.bf16.msra.mxu0 0
    %4818 = vmatprep.subr.bf16.mxu0 0
    %4819 = vmatpush1.bf16.msra.mxu0 0
    %4820 = vmatprep.subr.bf16.mxu0 0
    %4821 = vmatpush1.bf16.msra.mxu0 0
    %4822 = vmatprep.mubr.bf16.mxu0 0
    %4823 = vmatmul.mubr.bf16.gmra.mrb[0].mxu0 %v4597
    %v4824 = vpop.f32.mrb[0].mxu0
    %v4825 = vadd.f32 0.0, %v4824
    %v4826 = vpop.f32.mrb[0].mxu0
    %v4827 = vadd.f32 0.0, %v4826
    %v4828 = vpop.f32.mrb[0].mxu0
    %v4829 = vadd.f32 0.0, %v4828
    %v4830 = vpop.f32.mrb[0].mxu0
    %v4831 = vadd.f32 0.0, %v4830
    %4832 = vdwg.mxu0
    %4833 = vmatprep.subr.bf16.mxu0 %v4729
    %4834 = vmatpush1.bf16.msra.mxu0 %v4728
    %4835 = vmatprep.subr.bf16.mxu0 %v4733
    %4836 = vmatpush1.bf16.msra.mxu0 %v4732
    %4837 = vmatprep.subr.bf16.mxu0 %v4737
    %4838 = vmatpush1.bf16.msra.mxu0 %v4736
    %4839 = vmatprep.subr.bf16.mxu0 %v4741
    %4840 = vmatpush1.bf16.msra.mxu0 %v4740
    %4841 = vmatprep.subr.bf16.mxu0 %v4745
    %4842 = vmatpush1.bf16.msra.mxu0 %v4744
    %4843 = vmatprep.subr.bf16.mxu0 %v4749
    %4844 = vmatpush1.bf16.msra.mxu0 %v4748
    %4845 = vmatprep.subr.bf16.mxu0 %v4753
    %4846 = vmatpush1.bf16.msra.mxu0 %v4752
    %4847 = vmatprep.subr.bf16.mxu0 %v4757
    %4848 = vmatpush1.bf16.msra.mxu0 %v4756
    %4849 = vmatprep.subr.bf16.mxu0 0
    %4850 = vmatpush1.bf16.msra.mxu0 0
    %4851 = vmatprep.subr.bf16.mxu0 0
    %4852 = vmatpush1.bf16.msra.mxu0 0
    %4853 = vmatprep.subr.bf16.mxu0 0
    %4854 = vmatpush1.bf16.msra.mxu0 0
    %4855 = vmatprep.subr.bf16.mxu0 0
    %4856 = vmatpush1.bf16.msra.mxu0 0
    %4857 = vmatprep.subr.bf16.mxu0 0
    %4858 = vmatpush1.bf16.msra.mxu0 0
    %4859 = vmatprep.subr.bf16.mxu0 0
    %4860 = vmatpush1.bf16.msra.mxu0 0
    %4861 = vmatprep.subr.bf16.mxu0 0
    %4862 = vmatpush1.bf16.msra.mxu0 0
    %4863 = vmatprep.subr.bf16.mxu0 0
    %4864 = vmatpush1.bf16.msra.mxu0 0
    %4865 = vmatprep.mubr.bf16.mxu0 0
    %4866 = vmatmul.mubr.bf16.gmra.mrb[0].mxu0 %v4597
    %v4867 = vpop.f32.mrb[0].mxu0
    %v4868 = vadd.f32 0.0, %v4867
    %v4869 = vpop.f32.mrb[0].mxu0
    %v4870 = vadd.f32 0.0, %v4869
    %v4871 = vpop.f32.mrb[0].mxu0
    %v4872 = vadd.f32 0.0, %v4871
    %v4873 = vpop.f32.mrb[0].mxu0
    %v4874 = vadd.f32 0.0, %v4873
    %4875 = vdwg.mxu0
    %v4878 = vunpack.c.l.b16 %v4563
    %v4879 = vunpack.c.l.b16 %v4564
    %v4880 = vpack.c.b16 %v4879, %v4878
    %v4914 = vunpack.c.l.b16 %v4565
    %v4915 = vunpack.c.h.b16 %v4565
    %v4916 = vunpack.c.l.b16 %v4566
    %v4917 = vunpack.c.h.b16 %v4566
    %v4918 = vunpack.c.l.b16 %v4567
    %v4919 = vunpack.c.h.b16 %v4567
    %v4920 = vunpack.c.l.b16 %v4568
    %v4921 = vunpack.c.h.b16 %v4568
    %v4922 = vunpack.c.l.b16 %v4569
    %v4923 = vunpack.c.h.b16 %v4569
    %v4924 = vunpack.c.l.b16 %v4570
    %v4925 = vunpack.c.h.b16 %v4570
    %v4926 = vunpack.c.l.b16 %v4571
    %v4927 = vunpack.c.h.b16 %v4571
    %v4928 = vunpack.c.l.b16 %v4572
    %v4929 = vunpack.c.h.b16 %v4572
    %v4930 = vunpack.c.l.b16 %v4573
    %v4931 = vunpack.c.h.b16 %v4573
    %v4932 = vunpack.c.l.b16 %v4574
    %v4933 = vunpack.c.h.b16 %v4574
    %v4934 = vunpack.c.l.b16 %v4575
    %v4935 = vunpack.c.h.b16 %v4575
    %v4936 = vunpack.c.l.b16 %v4576
    %v4937 = vunpack.c.h.b16 %v4576
    %v4938 = vunpack.c.l.b16 %v4577
    %v4939 = vunpack.c.h.b16 %v4577
    %v4940 = vunpack.c.l.b16 %v4578
    %v4941 = vunpack.c.h.b16 %v4578
    %v4942 = vunpack.c.l.b16 %v4579
    %v4943 = vunpack.c.h.b16 %v4579
    %v4944 = vunpack.c.l.b16 %v4580
    %v4945 = vunpack.c.h.b16 %v4580
    %v4946 = vunpack.c.l.b16 %v4581
    %v4947 = vunpack.c.h.b16 %v4581
    %v4948 = vunpack.c.l.b16 %v4582
    %v4949 = vunpack.c.h.b16 %v4582
    %v4950 = vunpack.c.l.b16 %v4583
    %v4951 = vunpack.c.h.b16 %v4583
    %v4952 = vunpack.c.l.b16 %v4584
    %v4953 = vunpack.c.h.b16 %v4584
    %v4954 = vunpack.c.l.b16 %v4585
    %v4955 = vunpack.c.h.b16 %v4585
    %v4956 = vunpack.c.l.b16 %v4586
    %v4957 = vunpack.c.h.b16 %v4586
    %v4958 = vunpack.c.l.b16 %v4587
    %v4959 = vunpack.c.h.b16 %v4587
    %v4960 = vunpack.c.l.b16 %v4588
    %v4961 = vunpack.c.h.b16 %v4588
    %v4962 = vunpack.c.l.b16 %v4589
    %v4963 = vunpack.c.h.b16 %v4589
    %v4964 = vunpack.c.l.b16 %v4590
    %v4965 = vunpack.c.h.b16 %v4590
    %v4966 = vunpack.c.l.b16 %v4591
    %v4967 = vunpack.c.h.b16 %v4591
    %v4968 = vunpack.c.l.b16 %v4592
    %v4969 = vunpack.c.h.b16 %v4592
    %v4970 = vunpack.c.l.b16 %v4593
    %v4971 = vunpack.c.h.b16 %v4593
    %v4972 = vunpack.c.l.b16 %v4594
    %v4973 = vunpack.c.h.b16 %v4594
    %v4974 = vunpack.c.l.b16 %v4595
    %v4975 = vunpack.c.h.b16 %v4595
    %v4976 = vunpack.c.l.b16 %v4596
    %v4977 = vunpack.c.h.b16 %v4596
    %v4978 = vpack.c.b16 %v4918, %v4914
    %v4979 = vpack.c.b16 %v4919, %v4915
    %v4980 = vpack.c.b16 %v4920, %v4916
    %v4981 = vpack.c.b16 %v4921, %v4917
    %v4982 = vpack.c.b16 %v4926, %v4922
    %v4983 = vpack.c.b16 %v4927, %v4923
    %v4984 = vpack.c.b16 %v4928, %v4924
    %v4985 = vpack.c.b16 %v4929, %v4925
    %v4986 = vpack.c.b16 %v4934, %v4930
    %v4987 = vpack.c.b16 %v4935, %v4931
    %v4988 = vpack.c.b16 %v4936, %v4932
    %v4989 = vpack.c.b16 %v4937, %v4933
    %v4990 = vpack.c.b16 %v4942, %v4938
    %v4991 = vpack.c.b16 %v4943, %v4939
    %v4992 = vpack.c.b16 %v4944, %v4940
    %v4993 = vpack.c.b16 %v4945, %v4941
    %v4994 = vpack.c.b16 %v4950, %v4946
    %v4995 = vpack.c.b16 %v4951, %v4947
    %v4996 = vpack.c.b16 %v4952, %v4948
    %v4997 = vpack.c.b16 %v4953, %v4949
    %v4998 = vpack.c.b16 %v4958, %v4954
    %v4999 = vpack.c.b16 %v4959, %v4955
    %v5000 = vpack.c.b16 %v4960, %v4956
    %v5001 = vpack.c.b16 %v4961, %v4957
    %v5002 = vpack.c.b16 %v4966, %v4962
    %v5003 = vpack.c.b16 %v4967, %v4963
    %v5004 = vpack.c.b16 %v4968, %v4964
    %v5005 = vpack.c.b16 %v4969, %v4965
    %v5006 = vpack.c.b16 %v4974, %v4970
    %v5007 = vpack.c.b16 %v4975, %v4971
    %v5008 = vpack.c.b16 %v4976, %v4972
    %v5009 = vpack.c.b16 %v4977, %v4973
    %5042 = vmatprep.subr.bf16.mxu0 %v4979
    %5043 = vmatpush1.bf16.msra.mxu0 %v4978
    %5044 = vmatprep.subr.bf16.mxu0 %v4983
    %5045 = vmatpush1.bf16.msra.mxu0 %v4982
    %5046 = vmatprep.subr.bf16.mxu0 %v4987
    %5047 = vmatpush1.bf16.msra.mxu0 %v4986
    %5048 = vmatprep.subr.bf16.mxu0 %v4991
    %5049 = vmatpush1.bf16.msra.mxu0 %v4990
    %5050 = vmatprep.subr.bf16.mxu0 %v4995
    %5051 = vmatpush1.bf16.msra.mxu0 %v4994
    %5052 = vmatprep.subr.bf16.mxu0 %v4999
    %5053 = vmatpush1.bf16.msra.mxu0 %v4998
    %5054 = vmatprep.subr.bf16.mxu0 %v5003
    %5055 = vmatpush1.bf16.msra.mxu0 %v5002
    %5056 = vmatprep.subr.bf16.mxu0 %v5007
    %5057 = vmatpush1.bf16.msra.mxu0 %v5006
    %5058 = vmatprep.subr.bf16.mxu0 0
    %5059 = vmatpush1.bf16.msra.mxu0 0
    %5060 = vmatprep.subr.bf16.mxu0 0
    %5061 = vmatpush1.bf16.msra.mxu0 0
    %5062 = vmatprep.subr.bf16.mxu0 0
    %5063 = vmatpush1.bf16.msra.mxu0 0
    %5064 = vmatprep.subr.bf16.mxu0 0
    %5065 = vmatpush1.bf16.msra.mxu0 0
    %5066 = vmatprep.subr.bf16.mxu0 0
    %5067 = vmatpush1.bf16.msra.mxu0 0
    %5068 = vmatprep.subr.bf16.mxu0 0
    %5069 = vmatpush1.bf16.msra.mxu0 0
    %5070 = vmatprep.subr.bf16.mxu0 0
    %5071 = vmatpush1.bf16.msra.mxu0 0
    %5072 = vmatprep.subr.bf16.mxu0 0
    %5073 = vmatpush1.bf16.msra.mxu0 0
    %5074 = vmatprep.mubr.bf16.mxu0 0
    %5075 = vmatmul.mubr.bf16.gmra.mrb[0].mxu0 %v4880
    %v5076 = vpop.f32.mrb[0].mxu0
    %v5077 = vadd.f32 %v4825, %v5076
    %v5078 = vpop.f32.mrb[0].mxu0
    %v5079 = vadd.f32 %v4827, %v5078
    %v5080 = vpop.f32.mrb[0].mxu0
    %v5081 = vadd.f32 %v4829, %v5080
    %v5082 = vpop.f32.mrb[0].mxu0
    %v5083 = vadd.f32 %v4831, %v5082
    %5084 = vdwg.mxu0
    %5085 = vmatprep.subr.bf16.mxu0 %v4981
    %5086 = vmatpush1.bf16.msra.mxu0 %v4980
    %5087 = vmatprep.subr.bf16.mxu0 %v4985
    %5088 = vmatpush1.bf16.msra.mxu0 %v4984
    %5089 = vmatprep.subr.bf16.mxu0 %v4989
    %5090 = vmatpush1.bf16.msra.mxu0 %v4988
    %5091 = vmatprep.subr.bf16.mxu0 %v4993
    %5092 = vmatpush1.bf16.msra.mxu0 %v4992
    %5093 = vmatprep.subr.bf16.mxu0 %v4997
    %5094 = vmatpush1.bf16.msra.mxu0 %v4996
    %5095 = vmatprep.subr.bf16.mxu0 %v5001
    %5096 = vmatpush1.bf16.msra.mxu0 %v5000
    %5097 = vmatprep.subr.bf16.mxu0 %v5005
    %5098 = vmatpush1.bf16.msra.mxu0 %v5004
    %5099 = vmatprep.subr.bf16.mxu0 %v5009
    %5100 = vmatpush1.bf16.msra.mxu0 %v5008
    %5101 = vmatprep.subr.bf16.mxu0 0
    %5102 = vmatpush1.bf16.msra.mxu0 0
    %5103 = vmatprep.subr.bf16.mxu0 0
    %5104 = vmatpush1.bf16.msra.mxu0 0
    %5105 = vmatprep.subr.bf16.mxu0 0
    %5106 = vmatpush1.bf16.msra.mxu0 0
    %5107 = vmatprep.subr.bf16.mxu0 0
    %5108 = vmatpush1.bf16.msra.mxu0 0
    %5109 = vmatprep.subr.bf16.mxu0 0
    %5110 = vmatpush1.bf16.msra.mxu0 0
    %5111 = vmatprep.subr.bf16.mxu0 0
    %5112 = vmatpush1.bf16.msra.mxu0 0
    %5113 = vmatprep.subr.bf16.mxu0 0
    %5114 = vmatpush1.bf16.msra.mxu0 0
    %5115 = vmatprep.subr.bf16.mxu0 0
    %5116 = vmatpush1.bf16.msra.mxu0 0
    %5117 = vmatprep.mubr.bf16.mxu0 0
    %5118 = vmatmul.mubr.bf16.gmra.mrb[0].mxu0 %v4880
    %v5119 = vpop.f32.mrb[0].mxu0
    %v5120 = vadd.f32 %v4868, %v5119
    %v5121 = vpop.f32.mrb[0].mxu0
    %v5122 = vadd.f32 %v4870, %v5121
    %v5123 = vpop.f32.mrb[0].mxu0
    %v5124 = vadd.f32 %v4872, %v5123
    %v5125 = vpop.f32.mrb[0].mxu0
    %v5126 = vadd.f32 %v4874, %v5125
    %5127 = vdwg.mxu0
    %v5128 = vadd.f32 %v5077, %v58
    %v5129 = vadd.f32 %v5079, %v62
    %v5130 = vadd.f32 %v5120, %v66
    %v5131 = vadd.f32 %v5122, %v70
    %v5132 = vadd.f32 %v5081, %v58
    %v5133 = vadd.f32 %v5083, %v62
    %v5134 = vadd.f32 %v5124, %v66
    %v5135 = vadd.f32 %v5126, %v70
    %v5136 = vmul.f32 %v5128, 0.5
    %v5137 = vmul.f32 %v5132, 0.5
    %v5138 = vtanh.pop %v5136
    %v5139 = vtanh.pop %v5137
    %v5140 = vadd.f32 %v5138, 1.0
    %v5141 = vadd.f32 %v5139, 1.0
    %v5142 = vmul.f32 %v5140, 0.5
    %v5143 = vmul.f32 %v5141, 0.5
    %v5144 = vmul.f32 %v5129, 0.5
    %v5145 = vmul.f32 %v5133, 0.5
    %v5146 = vtanh.pop %v5144
    %v5147 = vtanh.pop %v5145
    %v5148 = vadd.f32 %v5146, 1.0
    %v5149 = vadd.f32 %v5147, 1.0
    %v5150 = vmul.f32 %v5148, 0.5
    %v5151 = vmul.f32 %v5149, 0.5
    %v5152 = vtanh.pop %v5130
    %v5153 = vtanh.pop %v5134
    %v5154 = vmul.f32 %v5131, 0.5
    %v5155 = vmul.f32 %v5135, 0.5
    %v5156 = vtanh.pop %v5154
    %v5157 = vtanh.pop %v5155
    %v5158 = vadd.f32 %v5156, 1.0
    %v5159 = vadd.f32 %v5157, 1.0
    %v5160 = vmul.f32 %v5158, 0.5
    %v5161 = vmul.f32 %v5159, 0.5
    %v5162 = vld [vmem:[#allocation3] sm:$0xff]
    %v5163 = vld [vmem:[#allocation3 + $0x8] sm:$0xff]
    %v5164 = vmul.f32 %v5150, %v5162
    %v5165 = vmul.f32 %v5151, %v5163
    %v5166 = vmul.f32 %v5142, %v5152
    %v5167 = vmul.f32 %v5143, %v5153
    %v5168 = vadd.f32 %v5164, %v5166
    %v5169 = vadd.f32 %v5165, %v5167
    %v5170 = vtanh.pop %v5168
    %v5171 = vtanh.pop %v5169
    %v5172 = vmul.f32 %v5160, %v5170
    %v5173 = vmul.f32 %v5161, %v5171
    %5174 = vst [vmem:[#allocation3] sm:$0xff] %v5168
    %5175 = vst [vmem:[#allocation3 + $0x8] sm:$0xff] %v5169
    %v5176 = vpack.c.bf16 %v5173, %v5172
    %5177 = vst [vmem:[#allocation2] sm:$0xff] %v5176
    %v5180 = vcombine.high %v5172, %v5172
    %v5182 = vunpack.c.l.s4 1966171168
    %v5183 = vunpack.c.0.s8 %v5182
    %v5184 = vlaneseq
    %v5185 = vshrl.u32 %v5184, 7
    %v5186 = vsub.s32 %v5183, %v5185
    %v5187 = vrot.slane %v5172, %v5186
    %v5189 = vunpack.c.l.s4 1966171168
    %v5190 = vunpack.c.0.s8 %v5189
    %v5191 = vlaneseq
    %v5192 = vshrl.u32 %v5191, 7
    %v5193 = vsub.s32 %v5190, %v5192
    %v5194 = vrot.slane %v5180, %v5193
    %v5195 = vcombine.high %v5187, %v5187
    %v5196 = vcombine.high %v5194, %v5194
    %v5198 = vunpack.c.l.s4 1966171168
    %v5199 = vunpack.c.0.s8 %v5198
    %v5200 = vlaneseq
    %v5201 = vshrl.u32 %v5200, 7
    %v5202 = vsub.s32 %v5199, %v5201
    %v5203 = vrot.slane %v5187, %v5202
    %v5205 = vunpack.c.l.s4 1966171168
    %v5206 = vunpack.c.0.s8 %v5205
    %v5207 = vlaneseq
    %v5208 = vshrl.u32 %v5207, 7
    %v5209 = vsub.s32 %v5206, %v5208
    %v5210 = vrot.slane %v5194, %v5209
    %v5212 = vunpack.c.l.s4 1966171168
    %v5213 = vunpack.c.0.s8 %v5212
    %v5214 = vlaneseq
    %v5215 = vshrl.u32 %v5214, 7
    %v5216 = vsub.s32 %v5213, %v5215
    %v5217 = vrot.slane %v5195, %v5216
    %v5219 = vunpack.c.l.s4 1966171168
    %v5220 = vunpack.c.0.s8 %v5219
    %v5221 = vlaneseq
    %v5222 = vshrl.u32 %v5221, 7
    %v5223 = vsub.s32 %v5220, %v5222
    %v5224 = vrot.slane %v5196, %v5223
    %v5225 = vcombine.high %v5203, %v5203
    %v5226 = vcombine.high %v5210, %v5210
    %v5227 = vcombine.high %v5217, %v5217
    %v5228 = vcombine.high %v5224, %v5224
    %v5229 = vcombine.high %v5173, %v5173
    %v5231 = vunpack.c.l.s4 1966171168
    %v5232 = vunpack.c.0.s8 %v5231
    %v5233 = vlaneseq
    %v5234 = vshrl.u32 %v5233, 7
    %v5235 = vsub.s32 %v5232, %v5234
    %v5236 = vrot.slane %v5173, %v5235
    %v5238 = vunpack.c.l.s4 1966171168
    %v5239 = vunpack.c.0.s8 %v5238
    %v5240 = vlaneseq
    %v5241 = vshrl.u32 %v5240, 7
    %v5242 = vsub.s32 %v5239, %v5241
    %v5243 = vrot.slane %v5229, %v5242
    %v5244 = vcombine.high %v5236, %v5236
    %v5245 = vcombine.high %v5243, %v5243
    %v5247 = vunpack.c.l.s4 1966171168
    %v5248 = vunpack.c.0.s8 %v5247
    %v5249 = vlaneseq
    %v5250 = vshrl.u32 %v5249, 7
    %v5251 = vsub.s32 %v5248, %v5250
    %v5252 = vrot.slane %v5236, %v5251
    %v5254 = vunpack.c.l.s4 1966171168
    %v5255 = vunpack.c.0.s8 %v5254
    %v5256 = vlaneseq
    %v5257 = vshrl.u32 %v5256, 7
    %v5258 = vsub.s32 %v5255, %v5257
    %v5259 = vrot.slane %v5243, %v5258
    %v5261 = vunpack.c.l.s4 1966171168
    %v5262 = vunpack.c.0.s8 %v5261
    %v5263 = vlaneseq
    %v5264 = vshrl.u32 %v5263, 7
    %v5265 = vsub.s32 %v5262, %v5264
    %v5266 = vrot.slane %v5244, %v5265
    %v5268 = vunpack.c.l.s4 1966171168
    %v5269 = vunpack.c.0.s8 %v5268
    %v5270 = vlaneseq
    %v5271 = vshrl.u32 %v5270, 7
    %v5272 = vsub.s32 %v5269, %v5271
    %v5273 = vrot.slane %v5245, %v5272
    %v5274 = vcombine.high %v5252, %v5252
    %v5275 = vcombine.high %v5259, %v5259
    %v5276 = vcombine.high %v5266, %v5266
    %v5277 = vcombine.high %v5273, %v5273
    %5294 = vst [vmem:[%s4 + $0x6] sm:$0x1] %v5203
    %5295 = vst [vmem:[%s4 + $0xe] sm:$0x1] %v5217
    %5296 = vst [vmem:[%s4 + $0x16] sm:$0x1] %v5225
    %5297 = vst [vmem:[%s4 + $0x1e] sm:$0x1] %v5227
    %5298 = vst [vmem:[%s4 + $0x26] sm:$0x1] %v5210
    %5299 = vst [vmem:[%s4 + $0x2e] sm:$0x1] %v5224
    %5300 = vst [vmem:[%s4 + $0x36] sm:$0x1] %v5226
    %5301 = vst [vmem:[%s4 + $0x3e] sm:$0x1] %v5228
    %5302 = vst [vmem:[%s4 + $0x46] sm:$0x1] %v5252
    %5303 = vst [vmem:[%s4 + $0x4e] sm:$0x1] %v5266
    %5304 = vst [vmem:[%s4 + $0x56] sm:$0x1] %v5274
    %5305 = vst [vmem:[%s4 + $0x5e] sm:$0x1] %v5276
    %5306 = vst [vmem:[%s4 + $0x66] sm:$0x1] %v5259
    %5307 = vst [vmem:[%s4 + $0x6e] sm:$0x1] %v5273
    %5308 = vst [vmem:[%s4 + $0x76] sm:$0x1] %v5275
    %5309 = vst [vmem:[%s4 + $0x7e] sm:$0x1] %v5277
    %s5310 = scalar_lea.vmem %s0, 56
    %v5311 = vld [vmem:[%s5310] sm:$0xf]
    %v5312 = vld [vmem:[%s5310 + $0x4] sm:$0xf]
    %v5313 = vld [vmem:[#allocation4] sm:$0xff]
    %v5314 = vld [vmem:[#allocation4 + $0x8] sm:$0xff]
    %v5315 = vld [vmem:[#allocation4 + $0x10] sm:$0xff]
    %v5316 = vld [vmem:[#allocation4 + $0x18] sm:$0xff]
    %v5317 = vld [vmem:[#allocation4 + $0x20] sm:$0xff]
    %v5318 = vld [vmem:[#allocation4 + $0x28] sm:$0xff]
    %v5319 = vld [vmem:[#allocation4 + $0x30] sm:$0xff]
    %v5320 = vld [vmem:[#allocation4 + $0x38] sm:$0xff]
    %v5321 = vld [vmem:[#allocation4 + $0x40] sm:$0xff]
    %v5322 = vld [vmem:[#allocation4 + $0x48] sm:$0xff]
    %v5323 = vld [vmem:[#allocation4 + $0x50] sm:$0xff]
    %v5324 = vld [vmem:[#allocation4 + $0x58] sm:$0xff]
    %v5325 = vld [vmem:[#allocation4 + $0x60] sm:$0xff]
    %v5326 = vld [vmem:[#allocation4 + $0x68] sm:$0xff]
    %v5327 = vld [vmem:[#allocation4 + $0x70] sm:$0xff]
    %v5328 = vld [vmem:[#allocation4 + $0x78] sm:$0xff]
    %v5329 = vld [vmem:[#allocation4 + $0x80] sm:$0xff]
    %v5330 = vld [vmem:[#allocation4 + $0x88] sm:$0xff]
    %v5331 = vld [vmem:[#allocation4 + $0x90] sm:$0xff]
    %v5332 = vld [vmem:[#allocation4 + $0x98] sm:$0xff]
    %v5333 = vld [vmem:[#allocation4 + $0xa0] sm:$0xff]
    %v5334 = vld [vmem:[#allocation4 + $0xa8] sm:$0xff]
    %v5335 = vld [vmem:[#allocation4 + $0xb0] sm:$0xff]
    %v5336 = vld [vmem:[#allocation4 + $0xb8] sm:$0xff]
    %v5337 = vld [vmem:[#allocation4 + $0xc0] sm:$0xff]
    %v5338 = vld [vmem:[#allocation4 + $0xc8] sm:$0xff]
    %v5339 = vld [vmem:[#allocation4 + $0xd0] sm:$0xff]
    %v5340 = vld [vmem:[#allocation4 + $0xd8] sm:$0xff]
    %v5341 = vld [vmem:[#allocation4 + $0xe0] sm:$0xff]
    %v5342 = vld [vmem:[#allocation4 + $0xe8] sm:$0xff]
    %v5343 = vld [vmem:[#allocation4 + $0xf0] sm:$0xff]
    %v5344 = vld [vmem:[#allocation4 + $0xf8] sm:$0xff]
    %v5345 = vld [vmem:[#allocation2] sm:$0xff]
    %v5346 = vld [vmem:[#allocation6] sm:$0xff]
    %v5347 = vld [vmem:[#allocation6 + $0x8] sm:$0xff]
    %v5348 = vld [vmem:[#allocation6 + $0x10] sm:$0xff]
    %v5349 = vld [vmem:[#allocation6 + $0x18] sm:$0xff]
    %v5350 = vld [vmem:[#allocation6 + $0x20] sm:$0xff]
    %v5351 = vld [vmem:[#allocation6 + $0x28] sm:$0xff]
    %v5352 = vld [vmem:[#allocation6 + $0x30] sm:$0xff]
    %v5353 = vld [vmem:[#allocation6 + $0x38] sm:$0xff]
    %v5354 = vld [vmem:[#allocation6 + $0x40] sm:$0xff]
    %v5355 = vld [vmem:[#allocation6 + $0x48] sm:$0xff]
    %v5356 = vld [vmem:[#allocation6 + $0x50] sm:$0xff]
    %v5357 = vld [vmem:[#allocation6 + $0x58] sm:$0xff]
    %v5358 = vld [vmem:[#allocation6 + $0x60] sm:$0xff]
    %v5359 = vld [vmem:[#allocation6 + $0x68] sm:$0xff]
    %v5360 = vld [vmem:[#allocation6 + $0x70] sm:$0xff]
    %v5361 = vld [vmem:[#allocation6 + $0x78] sm:$0xff]
    %v5362 = vld [vmem:[#allocation6 + $0x80] sm:$0xff]
    %v5363 = vld [vmem:[#allocation6 + $0x88] sm:$0xff]
    %v5364 = vld [vmem:[#allocation6 + $0x90] sm:$0xff]
    %v5365 = vld [vmem:[#allocation6 + $0x98] sm:$0xff]
    %v5366 = vld [vmem:[#allocation6 + $0xa0] sm:$0xff]
    %v5367 = vld [vmem:[#allocation6 + $0xa8] sm:$0xff]
    %v5368 = vld [vmem:[#allocation6 + $0xb0] sm:$0xff]
    %v5369 = vld [vmem:[#allocation6 + $0xb8] sm:$0xff]
    %v5370 = vld [vmem:[#allocation6 + $0xc0] sm:$0xff]
    %v5371 = vld [vmem:[#allocation6 + $0xc8] sm:$0xff]
    %v5372 = vld [vmem:[#allocation6 + $0xd0] sm:$0xff]
    %v5373 = vld [vmem:[#allocation6 + $0xd8] sm:$0xff]
    %v5374 = vld [vmem:[#allocation6 + $0xe0] sm:$0xff]
    %v5375 = vld [vmem:[#allocation6 + $0xe8] sm:$0xff]
    %v5376 = vld [vmem:[#allocation6 + $0xf0] sm:$0xff]
    %v5377 = vld [vmem:[#allocation6 + $0xf8] sm:$0xff]
    %v5410 = vunpack.c.l.b16 %v5346
    %v5411 = vunpack.c.h.b16 %v5346
    %v5412 = vunpack.c.l.b16 %v5347
    %v5413 = vunpack.c.h.b16 %v5347
    %v5414 = vunpack.c.l.b16 %v5348
    %v5415 = vunpack.c.h.b16 %v5348
    %v5416 = vunpack.c.l.b16 %v5349
    %v5417 = vunpack.c.h.b16 %v5349
    %v5418 = vunpack.c.l.b16 %v5350
    %v5419 = vunpack.c.h.b16 %v5350
    %v5420 = vunpack.c.l.b16 %v5351
    %v5421 = vunpack.c.h.b16 %v5351
    %v5422 = vunpack.c.l.b16 %v5352
    %v5423 = vunpack.c.h.b16 %v5352
    %v5424 = vunpack.c.l.b16 %v5353
    %v5425 = vunpack.c.h.b16 %v5353
    %v5426 = vunpack.c.l.b16 %v5354
    %v5427 = vunpack.c.h.b16 %v5354
    %v5428 = vunpack.c.l.b16 %v5355
    %v5429 = vunpack.c.h.b16 %v5355
    %v5430 = vunpack.c.l.b16 %v5356
    %v5431 = vunpack.c.h.b16 %v5356
    %v5432 = vunpack.c.l.b16 %v5357
    %v5433 = vunpack.c.h.b16 %v5357
    %v5434 = vunpack.c.l.b16 %v5358
    %v5435 = vunpack.c.h.b16 %v5358
    %v5436 = vunpack.c.l.b16 %v5359
    %v5437 = vunpack.c.h.b16 %v5359
    %v5438 = vunpack.c.l.b16 %v5360
    %v5439 = vunpack.c.h.b16 %v5360
    %v5440 = vunpack.c.l.b16 %v5361
    %v5441 = vunpack.c.h.b16 %v5361
    %v5442 = vunpack.c.l.b16 %v5362
    %v5443 = vunpack.c.h.b16 %v5362
    %v5444 = vunpack.c.l.b16 %v5363
    %v5445 = vunpack.c.h.b16 %v5363
    %v5446 = vunpack.c.l.b16 %v5364
    %v5447 = vunpack.c.h.b16 %v5364
    %v5448 = vunpack.c.l.b16 %v5365
    %v5449 = vunpack.c.h.b16 %v5365
    %v5450 = vunpack.c.l.b16 %v5366
    %v5451 = vunpack.c.h.b16 %v5366
    %v5452 = vunpack.c.l.b16 %v5367
    %v5453 = vunpack.c.h.b16 %v5367
    %v5454 = vunpack.c.l.b16 %v5368
    %v5455 = vunpack.c.h.b16 %v5368
    %v5456 = vunpack.c.l.b16 %v5369
    %v5457 = vunpack.c.h.b16 %v5369
    %v5458 = vunpack.c.l.b16 %v5370
    %v5459 = vunpack.c.h.b16 %v5370
    %v5460 = vunpack.c.l.b16 %v5371
    %v5461 = vunpack.c.h.b16 %v5371
    %v5462 = vunpack.c.l.b16 %v5372
    %v5463 = vunpack.c.h.b16 %v5372
    %v5464 = vunpack.c.l.b16 %v5373
    %v5465 = vunpack.c.h.b16 %v5373
    %v5466 = vunpack.c.l.b16 %v5374
    %v5467 = vunpack.c.h.b16 %v5374
    %v5468 = vunpack.c.l.b16 %v5375
    %v5469 = vunpack.c.h.b16 %v5375
    %v5470 = vunpack.c.l.b16 %v5376
    %v5471 = vunpack.c.h.b16 %v5376
    %v5472 = vunpack.c.l.b16 %v5377
    %v5473 = vunpack.c.h.b16 %v5377
    %v5474 = vpack.c.b16 %v5414, %v5410
    %v5475 = vpack.c.b16 %v5415, %v5411
    %v5476 = vpack.c.b16 %v5416, %v5412
    %v5477 = vpack.c.b16 %v5417, %v5413
    %v5478 = vpack.c.b16 %v5422, %v5418
    %v5479 = vpack.c.b16 %v5423, %v5419
    %v5480 = vpack.c.b16 %v5424, %v5420
    %v5481 = vpack.c.b16 %v5425, %v5421
    %v5482 = vpack.c.b16 %v5430, %v5426
    %v5483 = vpack.c.b16 %v5431, %v5427
    %v5484 = vpack.c.b16 %v5432, %v5428
    %v5485 = vpack.c.b16 %v5433, %v5429
    %v5486 = vpack.c.b16 %v5438, %v5434
    %v5487 = vpack.c.b16 %v5439, %v5435
    %v5488 = vpack.c.b16 %v5440, %v5436
    %v5489 = vpack.c.b16 %v5441, %v5437
    %v5490 = vpack.c.b16 %v5446, %v5442
    %v5491 = vpack.c.b16 %v5447, %v5443
    %v5492 = vpack.c.b16 %v5448, %v5444
    %v5493 = vpack.c.b16 %v5449, %v5445
    %v5494 = vpack.c.b16 %v5454, %v5450
    %v5495 = vpack.c.b16 %v5455, %v5451
    %v5496 = vpack.c.b16 %v5456, %v5452
    %v5497 = vpack.c.b16 %v5457, %v5453
    %v5498 = vpack.c.b16 %v5462, %v5458
    %v5499 = vpack.c.b16 %v5463, %v5459
    %v5500 = vpack.c.b16 %v5464, %v5460
    %v5501 = vpack.c.b16 %v5465, %v5461
    %v5502 = vpack.c.b16 %v5470, %v5466
    %v5503 = vpack.c.b16 %v5471, %v5467
    %v5504 = vpack.c.b16 %v5472, %v5468
    %v5505 = vpack.c.b16 %v5473, %v5469
    %5538 = vmatprep.subr.bf16.mxu0 %v5475
    %5539 = vmatpush1.bf16.msra.mxu0 %v5474
    %5540 = vmatprep.subr.bf16.mxu0 %v5479
    %5541 = vmatpush1.bf16.msra.mxu0 %v5478
    %5542 = vmatprep.subr.bf16.mxu0 %v5483
    %5543 = vmatpush1.bf16.msra.mxu0 %v5482
    %5544 = vmatprep.subr.bf16.mxu0 %v5487
    %5545 = vmatpush1.bf16.msra.mxu0 %v5486
    %5546 = vmatprep.subr.bf16.mxu0 %v5491
    %5547 = vmatpush1.bf16.msra.mxu0 %v5490
    %5548 = vmatprep.subr.bf16.mxu0 %v5495
    %5549 = vmatpush1.bf16.msra.mxu0 %v5494
    %5550 = vmatprep.subr.bf16.mxu0 %v5499
    %5551 = vmatpush1.bf16.msra.mxu0 %v5498
    %5552 = vmatprep.subr.bf16.mxu0 %v5503
    %5553 = vmatpush1.bf16.msra.mxu0 %v5502
    %5554 = vmatprep.subr.bf16.mxu0 0
    %5555 = vmatpush1.bf16.msra.mxu0 0
    %5556 = vmatprep.subr.bf16.mxu0 0
    %5557 = vmatpush1.bf16.msra.mxu0 0
    %5558 = vmatprep.subr.bf16.mxu0 0
    %5559 = vmatpush1.bf16.msra.mxu0 0
    %5560 = vmatprep.subr.bf16.mxu0 0
    %5561 = vmatpush1.bf16.msra.mxu0 0
    %5562 = vmatprep.subr.bf16.mxu0 0
    %5563 = vmatpush1.bf16.msra.mxu0 0
    %5564 = vmatprep.subr.bf16.mxu0 0
    %5565 = vmatpush1.bf16.msra.mxu0 0
    %5566 = vmatprep.subr.bf16.mxu0 0
    %5567 = vmatpush1.bf16.msra.mxu0 0
    %5568 = vmatprep.subr.bf16.mxu0 0
    %5569 = vmatpush1.bf16.msra.mxu0 0
    %5570 = vmatprep.mubr.bf16.mxu0 0
    %5571 = vmatmul.mubr.bf16.gmra.mrb[0].mxu0 %v5345
    %v5572 = vpop.f32.mrb[0].mxu0
    %v5573 = vadd.f32 0.0, %v5572
    %v5574 = vpop.f32.mrb[0].mxu0
    %v5575 = vadd.f32 0.0, %v5574
    %v5576 = vpop.f32.mrb[0].mxu0
    %v5577 = vadd.f32 0.0, %v5576
    %v5578 = vpop.f32.mrb[0].mxu0
    %v5579 = vadd.f32 0.0, %v5578
    %5580 = vdwg.mxu0
    %5581 = vmatprep.subr.bf16.mxu0 %v5477
    %5582 = vmatpush1.bf16.msra.mxu0 %v5476
    %5583 = vmatprep.subr.bf16.mxu0 %v5481
    %5584 = vmatpush1.bf16.msra.mxu0 %v5480
    %5585 = vmatprep.subr.bf16.mxu0 %v5485
    %5586 = vmatpush1.bf16.msra.mxu0 %v5484
    %5587 = vmatprep.subr.bf16.mxu0 %v5489
    %5588 = vmatpush1.bf16.msra.mxu0 %v5488
    %5589 = vmatprep.subr.bf16.mxu0 %v5493
    %5590 = vmatpush1.bf16.msra.mxu0 %v5492
    %5591 = vmatprep.subr.bf16.mxu0 %v5497
    %5592 = vmatpush1.bf16.msra.mxu0 %v5496
    %5593 = vmatprep.subr.bf16.mxu0 %v5501
    %5594 = vmatpush1.bf16.msra.mxu0 %v5500
    %5595 = vmatprep.subr.bf16.mxu0 %v5505
    %5596 = vmatpush1.bf16.msra.mxu0 %v5504
    %5597 = vmatprep.subr.bf16.mxu0 0
    %5598 = vmatpush1.bf16.msra.mxu0 0
    %5599 = vmatprep.subr.bf16.mxu0 0
    %5600 = vmatpush1.bf16.msra.mxu0 0
    %5601 = vmatprep.subr.bf16.mxu0 0
    %5602 = vmatpush1.bf16.msra.mxu0 0
    %5603 = vmatprep.subr.bf16.mxu0 0
    %5604 = vmatpush1.bf16.msra.mxu0 0
    %5605 = vmatprep.subr.bf16.mxu0 0
    %5606 = vmatpush1.bf16.msra.mxu0 0
    %5607 = vmatprep.subr.bf16.mxu0 0
    %5608 = vmatpush1.bf16.msra.mxu0 0
    %5609 = vmatprep.subr.bf16.mxu0 0
    %5610 = vmatpush1.bf16.msra.mxu0 0
    %5611 = vmatprep.subr.bf16.mxu0 0
    %5612 = vmatpush1.bf16.msra.mxu0 0
    %5613 = vmatprep.mubr.bf16.mxu0 0
    %5614 = vmatmul.mubr.bf16.gmra.mrb[0].mxu0 %v5345
    %v5615 = vpop.f32.mrb[0].mxu0
    %v5616 = vadd.f32 0.0, %v5615
    %v5617 = vpop.f32.mrb[0].mxu0
    %v5618 = vadd.f32 0.0, %v5617
    %v5619 = vpop.f32.mrb[0].mxu0
    %v5620 = vadd.f32 0.0, %v5619
    %v5621 = vpop.f32.mrb[0].mxu0
    %v5622 = vadd.f32 0.0, %v5621
    %5623 = vdwg.mxu0
    %v5626 = vunpack.c.l.b16 %v5311
    %v5627 = vunpack.c.l.b16 %v5312
    %v5628 = vpack.c.b16 %v5627, %v5626
    %v5662 = vunpack.c.l.b16 %v5313
    %v5663 = vunpack.c.h.b16 %v5313
    %v5664 = vunpack.c.l.b16 %v5314
    %v5665 = vunpack.c.h.b16 %v5314
    %v5666 = vunpack.c.l.b16 %v5315
    %v5667 = vunpack.c.h.b16 %v5315
    %v5668 = vunpack.c.l.b16 %v5316
    %v5669 = vunpack.c.h.b16 %v5316
    %v5670 = vunpack.c.l.b16 %v5317
    %v5671 = vunpack.c.h.b16 %v5317
    %v5672 = vunpack.c.l.b16 %v5318
    %v5673 = vunpack.c.h.b16 %v5318
    %v5674 = vunpack.c.l.b16 %v5319
    %v5675 = vunpack.c.h.b16 %v5319
    %v5676 = vunpack.c.l.b16 %v5320
    %v5677 = vunpack.c.h.b16 %v5320
    %v5678 = vunpack.c.l.b16 %v5321
    %v5679 = vunpack.c.h.b16 %v5321
    %v5680 = vunpack.c.l.b16 %v5322
    %v5681 = vunpack.c.h.b16 %v5322
    %v5682 = vunpack.c.l.b16 %v5323
    %v5683 = vunpack.c.h.b16 %v5323
    %v5684 = vunpack.c.l.b16 %v5324
    %v5685 = vunpack.c.h.b16 %v5324
    %v5686 = vunpack.c.l.b16 %v5325
    %v5687 = vunpack.c.h.b16 %v5325
    %v5688 = vunpack.c.l.b16 %v5326
    %v5689 = vunpack.c.h.b16 %v5326
    %v5690 = vunpack.c.l.b16 %v5327
    %v5691 = vunpack.c.h.b16 %v5327
    %v5692 = vunpack.c.l.b16 %v5328
    %v5693 = vunpack.c.h.b16 %v5328
    %v5694 = vunpack.c.l.b16 %v5329
    %v5695 = vunpack.c.h.b16 %v5329
    %v5696 = vunpack.c.l.b16 %v5330
    %v5697 = vunpack.c.h.b16 %v5330
    %v5698 = vunpack.c.l.b16 %v5331
    %v5699 = vunpack.c.h.b16 %v5331
    %v5700 = vunpack.c.l.b16 %v5332
    %v5701 = vunpack.c.h.b16 %v5332
    %v5702 = vunpack.c.l.b16 %v5333
    %v5703 = vunpack.c.h.b16 %v5333
    %v5704 = vunpack.c.l.b16 %v5334
    %v5705 = vunpack.c.h.b16 %v5334
    %v5706 = vunpack.c.l.b16 %v5335
    %v5707 = vunpack.c.h.b16 %v5335
    %v5708 = vunpack.c.l.b16 %v5336
    %v5709 = vunpack.c.h.b16 %v5336
    %v5710 = vunpack.c.l.b16 %v5337
    %v5711 = vunpack.c.h.b16 %v5337
    %v5712 = vunpack.c.l.b16 %v5338
    %v5713 = vunpack.c.h.b16 %v5338
    %v5714 = vunpack.c.l.b16 %v5339
    %v5715 = vunpack.c.h.b16 %v5339
    %v5716 = vunpack.c.l.b16 %v5340
    %v5717 = vunpack.c.h.b16 %v5340
    %v5718 = vunpack.c.l.b16 %v5341
    %v5719 = vunpack.c.h.b16 %v5341
    %v5720 = vunpack.c.l.b16 %v5342
    %v5721 = vunpack.c.h.b16 %v5342
    %v5722 = vunpack.c.l.b16 %v5343
    %v5723 = vunpack.c.h.b16 %v5343
    %v5724 = vunpack.c.l.b16 %v5344
    %v5725 = vunpack.c.h.b16 %v5344
    %v5726 = vpack.c.b16 %v5666, %v5662
    %v5727 = vpack.c.b16 %v5667, %v5663
    %v5728 = vpack.c.b16 %v5668, %v5664
    %v5729 = vpack.c.b16 %v5669, %v5665
    %v5730 = vpack.c.b16 %v5674, %v5670
    %v5731 = vpack.c.b16 %v5675, %v5671
    %v5732 = vpack.c.b16 %v5676, %v5672
    %v5733 = vpack.c.b16 %v5677, %v5673
    %v5734 = vpack.c.b16 %v5682, %v5678
    %v5735 = vpack.c.b16 %v5683, %v5679
    %v5736 = vpack.c.b16 %v5684, %v5680
    %v5737 = vpack.c.b16 %v5685, %v5681
    %v5738 = vpack.c.b16 %v5690, %v5686
    %v5739 = vpack.c.b16 %v5691, %v5687
    %v5740 = vpack.c.b16 %v5692, %v5688
    %v5741 = vpack.c.b16 %v5693, %v5689
    %v5742 = vpack.c.b16 %v5698, %v5694
    %v5743 = vpack.c.b16 %v5699, %v5695
    %v5744 = vpack.c.b16 %v5700, %v5696
    %v5745 = vpack.c.b16 %v5701, %v5697
    %v5746 = vpack.c.b16 %v5706, %v5702
    %v5747 = vpack.c.b16 %v5707, %v5703
    %v5748 = vpack.c.b16 %v5708, %v5704
    %v5749 = vpack.c.b16 %v5709, %v5705
    %v5750 = vpack.c.b16 %v5714, %v5710
    %v5751 = vpack.c.b16 %v5715, %v5711
    %v5752 = vpack.c.b16 %v5716, %v5712
    %v5753 = vpack.c.b16 %v5717, %v5713
    %v5754 = vpack.c.b16 %v5722, %v5718
    %v5755 = vpack.c.b16 %v5723, %v5719
    %v5756 = vpack.c.b16 %v5724, %v5720
    %v5757 = vpack.c.b16 %v5725, %v5721
    %5790 = vmatprep.subr.bf16.mxu0 %v5727
    %5791 = vmatpush1.bf16.msra.mxu0 %v5726
    %5792 = vmatprep.subr.bf16.mxu0 %v5731
    %5793 = vmatpush1.bf16.msra.mxu0 %v5730
    %5794 = vmatprep.subr.bf16.mxu0 %v5735
    %5795 = vmatpush1.bf16.msra.mxu0 %v5734
    %5796 = vmatprep.subr.bf16.mxu0 %v5739
    %5797 = vmatpush1.bf16.msra.mxu0 %v5738
    %5798 = vmatprep.subr.bf16.mxu0 %v5743
    %5799 = vmatpush1.bf16.msra.mxu0 %v5742
    %5800 = vmatprep.subr.bf16.mxu0 %v5747
    %5801 = vmatpush1.bf16.msra.mxu0 %v5746
    %5802 = vmatprep.subr.bf16.mxu0 %v5751
    %5803 = vmatpush1.bf16.msra.mxu0 %v5750
    %5804 = vmatprep.subr.bf16.mxu0 %v5755
    %5805 = vmatpush1.bf16.msra.mxu0 %v5754
    %5806 = vmatprep.subr.bf16.mxu0 0
    %5807 = vmatpush1.bf16.msra.mxu0 0
    %5808 = vmatprep.subr.bf16.mxu0 0
    %5809 = vmatpush1.bf16.msra.mxu0 0
    %5810 = vmatprep.subr.bf16.mxu0 0
    %5811 = vmatpush1.bf16.msra.mxu0 0
    %5812 = vmatprep.subr.bf16.mxu0 0
    %5813 = vmatpush1.bf16.msra.mxu0 0
    %5814 = vmatprep.subr.bf16.mxu0 0
    %5815 = vmatpush1.bf16.msra.mxu0 0
    %5816 = vmatprep.subr.bf16.mxu0 0
    %5817 = vmatpush1.bf16.msra.mxu0 0
    %5818 = vmatprep.subr.bf16.mxu0 0
    %5819 = vmatpush1.bf16.msra.mxu0 0
    %5820 = vmatprep.subr.bf16.mxu0 0
    %5821 = vmatpush1.bf16.msra.mxu0 0
    %5822 = vmatprep.mubr.bf16.mxu0 0
    %5823 = vmatmul.mubr.bf16.gmra.mrb[0].mxu0 %v5628
    %v5824 = vpop.f32.mrb[0].mxu0
    %v5825 = vadd.f32 %v5573, %v5824
    %v5826 = vpop.f32.mrb[0].mxu0
    %v5827 = vadd.f32 %v5575, %v5826
    %v5828 = vpop.f32.mrb[0].mxu0
    %v5829 = vadd.f32 %v5577, %v5828
    %v5830 = vpop.f32.mrb[0].mxu0
    %v5831 = vadd.f32 %v5579, %v5830
    %5832 = vdwg.mxu0
    %5833 = vmatprep.subr.bf16.mxu0 %v5729
    %5834 = vmatpush1.bf16.msra.mxu0 %v5728
    %5835 = vmatprep.subr.bf16.mxu0 %v5733
    %5836 = vmatpush1.bf16.msra.mxu0 %v5732
    %5837 = vmatprep.subr.bf16.mxu0 %v5737
    %5838 = vmatpush1.bf16.msra.mxu0 %v5736
    %5839 = vmatprep.subr.bf16.mxu0 %v5741
    %5840 = vmatpush1.bf16.msra.mxu0 %v5740
    %5841 = vmatprep.subr.bf16.mxu0 %v5745
    %5842 = vmatpush1.bf16.msra.mxu0 %v5744
    %5843 = vmatprep.subr.bf16.mxu0 %v5749
    %5844 = vmatpush1.bf16.msra.mxu0 %v5748
    %5845 = vmatprep.subr.bf16.mxu0 %v5753
    %5846 = vmatpush1.bf16.msra.mxu0 %v5752
    %5847 = vmatprep.subr.bf16.mxu0 %v5757
    %5848 = vmatpush1.bf16.msra.mxu0 %v5756
    %5849 = vmatprep.subr.bf16.mxu0 0
    %5850 = vmatpush1.bf16.msra.mxu0 0
    %5851 = vmatprep.subr.bf16.mxu0 0
    %5852 = vmatpush1.bf16.msra.mxu0 0
    %5853 = vmatprep.subr.bf16.mxu0 0
    %5854 = vmatpush1.bf16.msra.mxu0 0
    %5855 = vmatprep.subr.bf16.mxu0 0
    %5856 = vmatpush1.bf16.msra.mxu0 0
    %5857 = vmatprep.subr.bf16.mxu0 0
    %5858 = vmatpush1.bf16.msra.mxu0 0
    %5859 = vmatprep.subr.bf16.mxu0 0
    %5860 = vmatpush1.bf16.msra.mxu0 0
    %5861 = vmatprep.subr.bf16.mxu0 0
    %5862 = vmatpush1.bf16.msra.mxu0 0
    %5863 = vmatprep.subr.bf16.mxu0 0
    %5864 = vmatpush1.bf16.msra.mxu0 0
    %5865 = vmatprep.mubr.bf16.mxu0 0
    %5866 = vmatmul.mubr.bf16.gmra.mrb[0].mxu0 %v5628
    %v5867 = vpop.f32.mrb[0].mxu0
    %v5868 = vadd.f32 %v5616, %v5867
    %v5869 = vpop.f32.mrb[0].mxu0
    %v5870 = vadd.f32 %v5618, %v5869
    %v5871 = vpop.f32.mrb[0].mxu0
    %v5872 = vadd.f32 %v5620, %v5871
    %v5873 = vpop.f32.mrb[0].mxu0
    %v5874 = vadd.f32 %v5622, %v5873
    %5875 = vdwg.mxu0
    %v5876 = vadd.f32 %v5825, %v58
    %v5877 = vadd.f32 %v5827, %v62
    %v5878 = vadd.f32 %v5868, %v66
    %v5879 = vadd.f32 %v5870, %v70
    %v5880 = vadd.f32 %v5829, %v58
    %v5881 = vadd.f32 %v5831, %v62
    %v5882 = vadd.f32 %v5872, %v66
    %v5883 = vadd.f32 %v5874, %v70
    %v5884 = vmul.f32 %v5876, 0.5
    %v5885 = vmul.f32 %v5880, 0.5
    %v5886 = vtanh.pop %v5884
    %v5887 = vtanh.pop %v5885
    %v5888 = vadd.f32 %v5886, 1.0
    %v5889 = vadd.f32 %v5887, 1.0
    %v5890 = vmul.f32 %v5888, 0.5
    %v5891 = vmul.f32 %v5889, 0.5
    %v5892 = vmul.f32 %v5877, 0.5
    %v5893 = vmul.f32 %v5881, 0.5
    %v5894 = vtanh.pop %v5892
    %v5895 = vtanh.pop %v5893
    %v5896 = vadd.f32 %v5894, 1.0
    %v5897 = vadd.f32 %v5895, 1.0
    %v5898 = vmul.f32 %v5896, 0.5
    %v5899 = vmul.f32 %v5897, 0.5
    %v5900 = vtanh.pop %v5878
    %v5901 = vtanh.pop %v5882
    %v5902 = vmul.f32 %v5879, 0.5
    %v5903 = vmul.f32 %v5883, 0.5
    %v5904 = vtanh.pop %v5902
    %v5905 = vtanh.pop %v5903
    %v5906 = vadd.f32 %v5904, 1.0
    %v5907 = vadd.f32 %v5905, 1.0
    %v5908 = vmul.f32 %v5906, 0.5
    %v5909 = vmul.f32 %v5907, 0.5
    %v5910 = vld [vmem:[#allocation3] sm:$0xff]
    %v5911 = vld [vmem:[#allocation3 + $0x8] sm:$0xff]
    %v5912 = vmul.f32 %v5898, %v5910
    %v5913 = vmul.f32 %v5899, %v5911
    %v5914 = vmul.f32 %v5890, %v5900
    %v5915 = vmul.f32 %v5891, %v5901
    %v5916 = vadd.f32 %v5912, %v5914
    %v5917 = vadd.f32 %v5913, %v5915
    %v5918 = vtanh.pop %v5916
    %v5919 = vtanh.pop %v5917
    %v5920 = vmul.f32 %v5908, %v5918
    %v5921 = vmul.f32 %v5909, %v5919
    %5922 = vst [vmem:[#allocation3] sm:$0xff] %v5916
    %5923 = vst [vmem:[#allocation3 + $0x8] sm:$0xff] %v5917
    %v5924 = vpack.c.bf16 %v5921, %v5920
    %5925 = vst [vmem:[#allocation2] sm:$0xff] %v5924
    %v5928 = vcombine.high %v5920, %v5920
    %v5930 = vunpack.c.l.s4 1966171168
    %v5931 = vunpack.c.0.s8 %v5930
    %v5932 = vlaneseq
    %v5933 = vshrl.u32 %v5932, 7
    %v5934 = vsub.s32 %v5931, %v5933
    %v5935 = vrot.slane %v5920, %v5934
    %v5937 = vunpack.c.l.s4 1966171168
    %v5938 = vunpack.c.0.s8 %v5937
    %v5939 = vlaneseq
    %v5940 = vshrl.u32 %v5939, 7
    %v5941 = vsub.s32 %v5938, %v5940
    %v5942 = vrot.slane %v5928, %v5941
    %v5943 = vcombine.high %v5935, %v5935
    %v5944 = vcombine.high %v5942, %v5942
    %v5946 = vunpack.c.l.s4 1966171168
    %v5947 = vunpack.c.0.s8 %v5946
    %v5948 = vlaneseq
    %v5949 = vshrl.u32 %v5948, 7
    %v5950 = vsub.s32 %v5947, %v5949
    %v5951 = vrot.slane %v5935, %v5950
    %v5953 = vunpack.c.l.s4 1966171168
    %v5954 = vunpack.c.0.s8 %v5953
    %v5955 = vlaneseq
    %v5956 = vshrl.u32 %v5955, 7
    %v5957 = vsub.s32 %v5954, %v5956
    %v5958 = vrot.slane %v5942, %v5957
    %v5960 = vunpack.c.l.s4 1966171168
    %v5961 = vunpack.c.0.s8 %v5960
    %v5962 = vlaneseq
    %v5963 = vshrl.u32 %v5962, 7
    %v5964 = vsub.s32 %v5961, %v5963
    %v5965 = vrot.slane %v5943, %v5964
    %v5967 = vunpack.c.l.s4 1966171168
    %v5968 = vunpack.c.0.s8 %v5967
    %v5969 = vlaneseq
    %v5970 = vshrl.u32 %v5969, 7
    %v5971 = vsub.s32 %v5968, %v5970
    %v5972 = vrot.slane %v5944, %v5971
    %v5973 = vcombine.high %v5951, %v5951
    %v5974 = vcombine.high %v5958, %v5958
    %v5975 = vcombine.high %v5965, %v5965
    %v5976 = vcombine.high %v5972, %v5972
    %v5977 = vcombine.high %v5921, %v5921
    %v5979 = vunpack.c.l.s4 1966171168
    %v5980 = vunpack.c.0.s8 %v5979
    %v5981 = vlaneseq
    %v5982 = vshrl.u32 %v5981, 7
    %v5983 = vsub.s32 %v5980, %v5982
    %v5984 = vrot.slane %v5921, %v5983
    %v5986 = vunpack.c.l.s4 1966171168
    %v5987 = vunpack.c.0.s8 %v5986
    %v5988 = vlaneseq
    %v5989 = vshrl.u32 %v5988, 7
    %v5990 = vsub.s32 %v5987, %v5989
    %v5991 = vrot.slane %v5977, %v5990
    %v5992 = vcombine.high %v5984, %v5984
    %v5993 = vcombine.high %v5991, %v5991
    %v5995 = vunpack.c.l.s4 1966171168
    %v5996 = vunpack.c.0.s8 %v5995
    %v5997 = vlaneseq
    %v5998 = vshrl.u32 %v5997, 7
    %v5999 = vsub.s32 %v5996, %v5998
    %v6000 = vrot.slane %v5984, %v5999
    %v6002 = vunpack.c.l.s4 1966171168
    %v6003 = vunpack.c.0.s8 %v6002
    %v6004 = vlaneseq
    %v6005 = vshrl.u32 %v6004, 7
    %v6006 = vsub.s32 %v6003, %v6005
    %v6007 = vrot.slane %v5991, %v6006
    %v6009 = vunpack.c.l.s4 1966171168
    %v6010 = vunpack.c.0.s8 %v6009
    %v6011 = vlaneseq
    %v6012 = vshrl.u32 %v6011, 7
    %v6013 = vsub.s32 %v6010, %v6012
    %v6014 = vrot.slane %v5992, %v6013
    %v6016 = vunpack.c.l.s4 1966171168
    %v6017 = vunpack.c.0.s8 %v6016
    %v6018 = vlaneseq
    %v6019 = vshrl.u32 %v6018, 7
    %v6020 = vsub.s32 %v6017, %v6019
    %v6021 = vrot.slane %v5993, %v6020
    %v6022 = vcombine.high %v6000, %v6000
    %v6023 = vcombine.high %v6007, %v6007
    %v6024 = vcombine.high %v6014, %v6014
    %v6025 = vcombine.high %v6021, %v6021
    %6042 = vst [vmem:[%s4 + $0x7] sm:$0x1] %v5951
    %6043 = vst [vmem:[%s4 + $0xf] sm:$0x1] %v5965
    %6044 = vst [vmem:[%s4 + $0x17] sm:$0x1] %v5973
    %6045 = vst [vmem:[%s4 + $0x1f] sm:$0x1] %v5975
    %6046 = vst [vmem:[%s4 + $0x27] sm:$0x1] %v5958
    %6047 = vst [vmem:[%s4 + $0x2f] sm:$0x1] %v5972
    %6048 = vst [vmem:[%s4 + $0x37] sm:$0x1] %v5974
    %6049 = vst [vmem:[%s4 + $0x3f] sm:$0x1] %v5976
    %6050 = vst [vmem:[%s4 + $0x47] sm:$0x1] %v6000
    %6051 = vst [vmem:[%s4 + $0x4f] sm:$0x1] %v6014
    %6052 = vst [vmem:[%s4 + $0x57] sm:$0x1] %v6022
    %6053 = vst [vmem:[%s4 + $0x5f] sm:$0x1] %v6024
    %6054 = vst [vmem:[%s4 + $0x67] sm:$0x1] %v6007
    %6055 = vst [vmem:[%s4 + $0x6f] sm:$0x1] %v6021
    %6056 = vst [vmem:[%s4 + $0x77] sm:$0x1] %v6023
    %6057 = vst [vmem:[%s4 + $0x7f] sm:$0x1] %v6025
    // Predicated region
    $region30: #{noisegenerator_forward.1} parent=1 // pred_check
      _
    $region31: #{noisegenerator_forward.1} parent=1 // pred_check_branch
      %6059 = sbr.rel (0) target = $region33
    $region32: #{noisegenerator_forward.1} parent=1 // pred_region
      _
    $region33: #{noisegenerator_forward.1} parent=1 // pred_fallthru
      _
    // Predicated region
    $region34: #{noisegenerator_forward.1} parent=1 // pred_check
      _
    $region35: #{noisegenerator_forward.1} parent=1 // pred_check_branch
      %6061 = sbr.rel (0) target = $region37
    $region36: #{noisegenerator_forward.1} parent=1 // pred_region
      _
    $region37: #{noisegenerator_forward.1} parent=1 // pred_fallthru
      _
    %6062 = vsyncpa [#allocation5], 1
    %6063 = vsyncpa [#allocation7], 1

</llo_original>
